<compile_context>
chip_gen: v6e
topology: v6e:2x2x1
jax: 0.10.0
libtpu: 0.0.40
codegen_flags: <defaults>
</compile_context>

<pallas_src>
import functools

import jax
import jax.numpy as jnp
from jax import lax
from jax.experimental import pallas as pl
from jax.experimental.pallas import tpu as pltpu

LEAKY_SLOPE = 0.01   # nn.LeakyReLU default
LN_EPS = 1e-5        # nn.LayerNorm default

# MLP dims: 32 -> 512 -> 256 -> 128 -> 64 -> 1
DIMS = [32, 512, 256, 128, 64, 1]


def _layernorm(h, gamma, beta):
    # Single-pass: var = E[x^2] - E[x]^2 (one fewer full-width subtract + XLU reduction).
    mu = jnp.mean(h, axis=-1, keepdims=True)
    mu2 = jnp.mean(h * h, axis=-1, keepdims=True)
    var = mu2 - mu * mu
    return (h - mu) * lax.rsqrt(var + LN_EPS) * gamma + beta


def _leaky_relu(h):
    # max(h, a*h) == leaky_relu(h) for 0 < a < 1; saves one full-width VPU pass vs where().
    return jnp.maximum(h, LEAKY_SLOPE * h)


def _dot(a, b, use_bf16):
    # Weights (b) are already bf16 when use_bf16 (pre-cast in the wrapper); only the
    # activation operand needs an in-kernel cast.
    if use_bf16:
        a = a.astype(jnp.bfloat16)
    return jnp.dot(a, b, preferred_element_type=jnp.float32)


def mlp_kernel(x_ref,
               w1_ref, b1_ref, g1_ref, be1_ref,
               w2_ref, b2_ref, g2_ref, be2_ref,
               w3_ref, b3_ref, g3_ref, be3_ref,
               w4_ref, b4_ref, g4_ref, be4_ref,
               w5_ref, b5_ref,
               o_ref, *, use_bf16_matmul=True):
    h = x_ref[...]   # bf16 (default path) or f32; first _dot handles either

    # Layers 1-4: Linear + LayerNorm + LeakyReLU  (Dropout = identity, eval mode).
    for w_ref, b_ref, g_ref, be_ref in (
        (w1_ref, b1_ref, g1_ref, be1_ref),
        (w2_ref, b2_ref, g2_ref, be2_ref),
        (w3_ref, b3_ref, g3_ref, be3_ref),
        (w4_ref, b4_ref, g4_ref, be4_ref),
    ):
        h = _dot(h, w_ref[...], use_bf16_matmul) + b_ref[...]
        h = _leaky_relu(_layernorm(h, g_ref[...], be_ref[...]))

    # Layer 5: Linear(64, 1) computed lane-dense as a (1, batch_tile) row.
    # Contract on the RHS feature axis (no explicit transpose through the XLU):
    #   out_row[0, m] = sum_k w5[0, k] * h[m, k]
    h5 = h.astype(jnp.bfloat16) if use_bf16_matmul else h
    out_row = lax.dot_general(
        w5_ref[...], h5,
        dimension_numbers=(((1,), (1,)), ((), ())),
        preferred_element_type=jnp.float32,
    ) + b5_ref[...]
    o_ref[...] = out_row.reshape(o_ref.shape).astype(o_ref.dtype)


def _choose_tiling(B, batch_tile=None, max_tile=1024):
    """Pick (tile, num_tiles, padded_B). Tile is a multiple of 128; small batches get a
    single just-big-enough tile; multi-tile grids get an even tile count (v7x megacore)."""
    padded_min = ((B + 127) // 128) * 128
    if batch_tile is None:
        tile = min(max_tile, padded_min)
    else:
        tile = max(128, ((int(batch_tile) + 127) // 128) * 128)
    num_tiles = -(-padded_min // tile)
    if num_tiles > 1 and num_tiles % 2 == 1:
        # v7x: an even tile count splits cleanly across the 2 TensorCores
        # ("parallel" grid axis); harmless on single-TC v5e/v6e.
        num_tiles += 1
        tile = max(128, ((-(-padded_min // num_tiles) + 127) // 128) * 128)
    padded_B = num_tiles * tile
    return tile, num_tiles, padded_B


def pretrained_latent_nn_forward(x, params, *, batch_tile=None, use_bf16_matmul=True):
    """x: [B, 32] float32 -> [B, 1] float32."""
    B, D_in = x.shape
    assert D_in == DIMS[0]

    tile, num_tiles, padded_B = _choose_tiling(B, batch_tile)

    # Pad the batch (padded rows are discarded at the end).
    if padded_B != B:
        x = jnp.pad(x, ((0, padded_B - B), (0, 0)))

    # Flatten params into kernel layout: layers 1-4 as W [in,out], b/gamma/beta [1,out];
    # layer 5 weight as a row [1, 64], bias [1, 1]. Weights (and x) pre-cast to bf16 on
    # the bf16 MXU path so no per-grid-step casts happen inside the kernel.
    w_dtype = jnp.bfloat16 if use_bf16_matmul else jnp.float32
    flat_params = []
    for li in range(4):
        w, b, g, be = params[f"layer{li + 1}"]
        flat_params += [w.astype(w_dtype), b, g, be]
    w5, b5 = params["layer5"]
    flat_params += [jnp.transpose(w5).astype(w_dtype), b5]   # (64,1) -> (1,64)

    if use_bf16_matmul:
        x = x.astype(jnp.bfloat16)

    grid = (num_tiles,)

    # x tiled over batch; all parameters passed whole (they fit VMEM easily).
    in_specs = [pl.BlockSpec((tile, D_in), lambda i: (i, 0))]
    for p in flat_params:
        # default-arg capture avoids the late-binding closure bug
        in_specs.append(pl.BlockSpec(p.shape, lambda i, n=p.ndim: (0,) * n))

    # Lane-dense output: (num_tiles, 1, tile); reshaped to (B, 1) below.
    out_specs = pl.BlockSpec((1, 1, tile), lambda i: (i, 0, 0))
    out_shape = jax.ShapeDtypeStruct((num_tiles, 1, tile), jnp.float32)

    # --- VMEM estimate; only override the scoped limit if the default may not suffice.
    param_bytes = sum(int(p.size) * p.dtype.itemsize for p in flat_params)
    act_bytes = tile * sum(DIMS) * 4                              # live-activation bound
    io_bytes = 2 * (tile * D_in * x.dtype.itemsize + tile * 4)    # double-buffered x/out
    vmem_est = 2 * param_bytes + io_bytes + act_bytes
    vmem_limit = None
    if vmem_est > 12 * 1024 * 1024:      # scoped default is 16/32/32 MiB (v5e/v6e/v7x)
        # clamp to 48 MiB: leaves DMA/compiler headroom on v7x's 64 MiB physical VMEM
        vmem_limit = min(int(vmem_est * 2), 48 * 1024 * 1024)

    compiler_params = pltpu.CompilerParams(
        dimension_semantics=("parallel",),   # megacore sharding across batch tiles (v7x)
        vmem_limit_bytes=vmem_limit,
    )

    flops = 2 * padded_B * sum(DIMS[i] * DIMS[i + 1] for i in range(5))
    cost = pl.CostEstimate(
        flops=int(flops),
        transcendentals=int(4 * padded_B),                       # one rsqrt per row per LN
        bytes_accessed=int(padded_B * D_in * x.dtype.itemsize + param_bytes + padded_B * 4),
    )

    kernel = functools.partial(mlp_kernel, use_bf16_matmul=use_bf16_matmul)

    out3 = pl.pallas_call(
        kernel,
        out_shape=out_shape,
        grid_spec=pltpu.PrefetchScalarGridSpec(
            num_scalar_prefetch=0,
            grid=grid,
            in_specs=in_specs,
            out_specs=out_specs,
        ),
        compiler_params=compiler_params,
        cost_estimate=cost,
    )(x, *flat_params)

    return out3.reshape(padded_B, 1)[:B]


def init_params(key):
    """Deterministic synthetic init mirroring the PyTorch module's shapes."""
    params = {}
    keys = jax.random.split(key, 10)
    k_iter = iter(keys)
    for li in range(4):
        fan_in, fan_out = DIMS[li], DIMS[li + 1]
        bound = 1.0 / jnp.sqrt(fan_in)
        w = jax.random.uniform(next(k_iter), (fan_in, fan_out),
                               minval=-bound, maxval=bound, dtype=jnp.float32)
        b = jax.random.uniform(next(k_iter), (1, fan_out),
                               minval=-bound, maxval=bound, dtype=jnp.float32)
        gamma = jnp.ones((1, fan_out), jnp.float32)   # nn.LayerNorm init
        beta = jnp.zeros((1, fan_out), jnp.float32)
        params[f"layer{li+1}"] = (w, b, gamma, beta)
    fan_in, fan_out = DIMS[4], DIMS[5]
    bound = 1.0 / jnp.sqrt(fan_in)
    w5 = jax.random.uniform(next(k_iter), (fan_in, fan_out),
                            minval=-bound, maxval=bound, dtype=jnp.float32)
    b5 = jax.random.uniform(next(k_iter), (1, fan_out),
                            minval=-bound, maxval=bound, dtype=jnp.float32)
    params["layer5"] = (w5, b5)
    return params


def reference_forward(x, params):
    """Pure-JAX f32 reference of the same forward (eval mode, two-pass LayerNorm)."""
    h = x
    for li in range(4):
        w, b, g, be = params[f"layer{li+1}"]
        h = h @ w + b
        mu = jnp.mean(h, axis=-1, keepdims=True)
        var = jnp.mean((h - mu) ** 2, axis=-1, keepdims=True)
        h = (h - mu) / jnp.sqrt(var + LN_EPS) * g + be
        h = jnp.where(h >= 0, h, LEAKY_SLOPE * h)
    w5, b5 = params["layer5"]
    return h @ w5 + b5


if __name__ == "__main__":
    key = jax.random.PRNGKey(0)
    k_x, k_x2, k_p = jax.random.split(key, 3)
    params = init_params(k_p)

    # Small batch (single 128-row tile after padding).
    B = 8
    x = jax.random.normal(k_x, (B, 32), dtype=jnp.float32)
    ref = reference_forward(x, params)

    # f32 path (tight tolerance).
    out_f32 = jax.block_until_ready(
        pretrained_latent_nn_forward(x, params, use_bf16_matmul=False))
    assert out_f32.shape == (B, 1)
    assert jnp.allclose(out_f32, ref, atol=5e-4, rtol=5e-4), (
        f"f32 mismatch (B=8): max abs err {jnp.max(jnp.abs(out_f32 - ref))}")

    # bf16 default path (f32 accumulation) -- looser tolerance vs f32 reference.
    out_bf16 = jax.block_until_ready(pretrained_latent_nn_forward(x, params))
    assert out_bf16.shape == (B, 1)
    assert jnp.allclose(out_bf16, ref, atol=5e-2, rtol=5e-2), (
        f"bf16 mismatch (B=8): max abs err {jnp.max(jnp.abs(out_bf16 - ref))}")

    # Larger non-multiple batch. Default tiling -> one 640-row tile; explicit tile=256
    # exercises the even-tile-count (megacore) balancing path.
    B2 = 600
    x2 = jax.random.normal(k_x2, (B2, 32), dtype=jnp.float32)
    ref2 = reference_forward(x2, params)

    out2_f32 = jax.block_until_ready(
        pretrained_latent_nn_forward(x2, params, use_bf16_matmul=False))
    assert out2_f32.shape == (B2, 1)
    assert jnp.allclose(out2_f32, ref2, atol=5e-4, rtol=5e-4), (
        f"f32 mismatch (B=600): max abs err {jnp.max(jnp.abs(out2_f32 - ref2))}")

    out2_bf16 = jax.block_until_ready(pretrained_latent_nn_forward(x2, params))
    assert jnp.allclose(out2_bf16, ref2, atol=5e-2, rtol=5e-2), (
        f"bf16 mismatch (B=600, default tile): "
        f"max abs err {jnp.max(jnp.abs(out2_bf16 - ref2))}")

    out2_multi = jax.block_until_ready(
        pretrained_latent_nn_forward(x2, params, batch_tile=256))
    assert out2_multi.shape == (B2, 1)
    assert jnp.allclose(out2_multi, ref2, atol=5e-2, rtol=5e-2), (
        f"bf16 mismatch (B=600, tile=256): "
        f"max abs err {jnp.max(jnp.abs(out2_multi - ref2))}")

    print("KERNEL_OK")
</pallas_src>

<mosaic_0001>
module attributes {stable_mosaic.version = 11 : i64} {
  func.func @mlp_kernel(%arg0: i32, %arg1: memref<128x32xf32, #tpu.memory_space<vmem>>, %arg2: memref<32x512xf32, #tpu.memory_space<vmem>>, %arg3: memref<1x512xf32, #tpu.memory_space<vmem>>, %arg4: memref<1x512xf32, #tpu.memory_space<vmem>>, %arg5: memref<1x512xf32, #tpu.memory_space<vmem>>, %arg6: memref<512x256xf32, #tpu.memory_space<vmem>>, %arg7: memref<1x256xf32, #tpu.memory_space<vmem>>, %arg8: memref<1x256xf32, #tpu.memory_space<vmem>>, %arg9: memref<1x256xf32, #tpu.memory_space<vmem>>, %arg10: memref<256x128xf32, #tpu.memory_space<vmem>>, %arg11: memref<1x128xf32, #tpu.memory_space<vmem>>, %arg12: memref<1x128xf32, #tpu.memory_space<vmem>>, %arg13: memref<1x128xf32, #tpu.memory_space<vmem>>, %arg14: memref<128x64xf32, #tpu.memory_space<vmem>>, %arg15: memref<1x64xf32, #tpu.memory_space<vmem>>, %arg16: memref<1x64xf32, #tpu.memory_space<vmem>>, %arg17: memref<1x64xf32, #tpu.memory_space<vmem>>, %arg18: memref<1x64xf32, #tpu.memory_space<vmem>>, %arg19: memref<1x1xf32, #tpu.memory_space<vmem>>, %arg20: memref<1x1x128xf32, #tpu.memory_space<vmem>>) attributes {dimension_semantics = [#tpu.dimension_semantics<parallel>], iteration_bounds = array<i64: 1>, scalar_prefetch = 0 : i64, scratch_operands = 0 : i64, tpu.core_type = #tpu.core_type<tc>, window_params = [{transform_indices = @transform_0, window_bounds = array<i64: 128, 32>}, {pipeline_mode = #tpu.pipeline_mode<synchronous>, transform_indices = @transform_1, window_bounds = array<i64: 32, 512>}, {pipeline_mode = #tpu.pipeline_mode<synchronous>, transform_indices = @transform_2, window_bounds = array<i64: 1, 512>}, {pipeline_mode = #tpu.pipeline_mode<synchronous>, transform_indices = @transform_3, window_bounds = array<i64: 1, 512>}, {pipeline_mode = #tpu.pipeline_mode<synchronous>, transform_indices = @transform_4, window_bounds = array<i64: 1, 512>}, {pipeline_mode = #tpu.pipeline_mode<synchronous>, transform_indices = @transform_5, window_bounds = array<i64: 512, 256>}, {pipeline_mode = #tpu.pipeline_mode<synchronous>, transform_indices = @transform_6, window_bounds = array<i64: 1, 256>}, {pipeline_mode = #tpu.pipeline_mode<synchronous>, transform_indices = @transform_7, window_bounds = array<i64: 1, 256>}, {pipeline_mode = #tpu.pipeline_mode<synchronous>, transform_indices = @transform_8, window_bounds = array<i64: 1, 256>}, {pipeline_mode = #tpu.pipeline_mode<synchronous>, transform_indices = @transform_9, window_bounds = array<i64: 256, 128>}, {pipeline_mode = #tpu.pipeline_mode<synchronous>, transform_indices = @transform_10, window_bounds = array<i64: 1, 128>}, {pipeline_mode = #tpu.pipeline_mode<synchronous>, transform_indices = @transform_11, window_bounds = array<i64: 1, 128>}, {pipeline_mode = #tpu.pipeline_mode<synchronous>, transform_indices = @transform_12, window_bounds = array<i64: 1, 128>}, {pipeline_mode = #tpu.pipeline_mode<synchronous>, transform_indices = @transform_13, window_bounds = array<i64: 128, 64>}, {pipeline_mode = #tpu.pipeline_mode<synchronous>, transform_indices = @transform_14, window_bounds = array<i64: 1, 64>}, {pipeline_mode = #tpu.pipeline_mode<synchronous>, transform_indices = @transform_15, window_bounds = array<i64: 1, 64>}, {pipeline_mode = #tpu.pipeline_mode<synchronous>, transform_indices = @transform_16, window_bounds = array<i64: 1, 64>}, {pipeline_mode = #tpu.pipeline_mode<synchronous>, transform_indices = @transform_17, window_bounds = array<i64: 1, 64>}, {pipeline_mode = #tpu.pipeline_mode<synchronous>, transform_indices = @transform_18, window_bounds = array<i64: 1, 1>}, {transform_indices = @transform_19, window_bounds = array<i64: 1, 1, 128>}]} {
    %c0 = arith.constant 0 : index
    %c0_0 = arith.constant 0 : index
    %0 = vector.load %arg1[%c0, %c0_0] : memref<128x32xf32, #tpu.memory_space<vmem>>, vector<128x32xf32>
    %c0_1 = arith.constant 0 : index
    %c0_2 = arith.constant 0 : index
    %1 = vector.load %arg2[%c0_1, %c0_2] : memref<32x512xf32, #tpu.memory_space<vmem>>, vector<32x512xf32>
    %cst = arith.constant dense<0.000000e+00> : vector<128x512xf32>
    %2 = tpu.matmul %0, %1, %cst {dimension_numbers = #tpu.dot_dimension_numbers<[1], [0], [0], [1], [0, 0, 1, 1], [], []>} : vector<128x32xf32>, vector<32x512xf32>, vector<128x512xf32> -> vector<128x512xf32>
    %c0_3 = arith.constant 0 : index
    %c0_4 = arith.constant 0 : index
    %3 = vector.load %arg3[%c0_3, %c0_4] : memref<1x512xf32, #tpu.memory_space<vmem>>, vector<1x512xf32>
    %4 = vector.broadcast %3 : vector<1x512xf32> to vector<128x512xf32>
    %5 = arith.addf %2, %4 : vector<128x512xf32>
    %c0_5 = arith.constant 0 : index
    %c0_6 = arith.constant 0 : index
    %6 = vector.load %arg4[%c0_5, %c0_6] : memref<1x512xf32, #tpu.memory_space<vmem>>, vector<1x512xf32>
    %c0_7 = arith.constant 0 : index
    %c0_8 = arith.constant 0 : index
    %7 = vector.load %arg5[%c0_7, %c0_8] : memref<1x512xf32, #tpu.memory_space<vmem>>, vector<1x512xf32>
    %cst_9 = arith.constant dense<0.000000e+00> : vector<128xf32>
    %8 = vector.multi_reduction <add>, %5, %cst_9 [1] : vector<128x512xf32> to vector<128xf32>
    %9 = vector.shape_cast %8 : vector<128xf32> to vector<128x1xf32>
    %cst_10 = arith.constant 5.120000e+02 : f32
    %10 = vector.broadcast %cst_10 : f32 to vector<128x1xf32>
    %11 = arith.divf %9, %10 : vector<128x1xf32>
    %12 = arith.mulf %5, %5 : vector<128x512xf32>
    %cst_11 = arith.constant dense<0.000000e+00> : vector<128xf32>
    %13 = vector.multi_reduction <add>, %12, %cst_11 [1] : vector<128x512xf32> to vector<128xf32>
    %14 = vector.shape_cast %13 : vector<128xf32> to vector<128x1xf32>
    %cst_12 = arith.constant 5.120000e+02 : f32
    %15 = vector.broadcast %cst_12 : f32 to vector<128x1xf32>
    %16 = arith.divf %14, %15 : vector<128x1xf32>
    %17 = arith.mulf %11, %11 : vector<128x1xf32>
    %18 = arith.subf %16, %17 : vector<128x1xf32>
    %19 = vector.broadcast %11 : vector<128x1xf32> to vector<128x512xf32>
    %20 = arith.subf %5, %19 : vector<128x512xf32>
    %cst_13 = arith.constant 9.99999974E-6 : f32
    %21 = vector.broadcast %cst_13 : f32 to vector<128x1xf32>
    %22 = arith.addf %18, %21 : vector<128x1xf32>
    %23 = math.rsqrt %22 : vector<128x1xf32>
    %24 = vector.broadcast %23 : vector<128x1xf32> to vector<128x512xf32>
    %25 = arith.mulf %20, %24 : vector<128x512xf32>
    %26 = vector.broadcast %6 : vector<1x512xf32> to vector<128x512xf32>
    %27 = arith.mulf %25, %26 : vector<128x512xf32>
    %28 = vector.broadcast %7 : vector<1x512xf32> to vector<128x512xf32>
    %29 = arith.addf %27, %28 : vector<128x512xf32>
    %cst_14 = arith.constant 0.00999999977 : f32
    %30 = vector.broadcast %cst_14 : f32 to vector<128x512xf32>
    %31 = arith.mulf %30, %29 : vector<128x512xf32>
    %32 = arith.maximumf %29, %31 : vector<128x512xf32>
    %c0_15 = arith.constant 0 : index
    %c0_16 = arith.constant 0 : index
    %33 = vector.load %arg6[%c0_15, %c0_16] : memref<512x256xf32, #tpu.memory_space<vmem>>, vector<512x256xf32>
    %cst_17 = arith.constant dense<0.000000e+00> : vector<128x256xf32>
    %34 = tpu.matmul %32, %33, %cst_17 {dimension_numbers = #tpu.dot_dimension_numbers<[1], [0], [0], [1], [0, 0, 1, 1], [], []>} : vector<128x512xf32>, vector<512x256xf32>, vector<128x256xf32> -> vector<128x256xf32>
    %c0_18 = arith.constant 0 : index
    %c0_19 = arith.constant 0 : index
    %35 = vector.load %arg7[%c0_18, %c0_19] : memref<1x256xf32, #tpu.memory_space<vmem>>, vector<1x256xf32>
    %36 = vector.broadcast %35 : vector<1x256xf32> to vector<128x256xf32>
    %37 = arith.addf %34, %36 : vector<128x256xf32>
    %c0_20 = arith.constant 0 : index
    %c0_21 = arith.constant 0 : index
    %38 = vector.load %arg8[%c0_20, %c0_21] : memref<1x256xf32, #tpu.memory_space<vmem>>, vector<1x256xf32>
    %c0_22 = arith.constant 0 : index
    %c0_23 = arith.constant 0 : index
    %39 = vector.load %arg9[%c0_22, %c0_23] : memref<1x256xf32, #tpu.memory_space<vmem>>, vector<1x256xf32>
    %cst_24 = arith.constant dense<0.000000e+00> : vector<128xf32>
    %40 = vector.multi_reduction <add>, %37, %cst_24 [1] : vector<128x256xf32> to vector<128xf32>
    %41 = vector.shape_cast %40 : vector<128xf32> to vector<128x1xf32>
    %cst_25 = arith.constant 2.560000e+02 : f32
    %42 = vector.broadcast %cst_25 : f32 to vector<128x1xf32>
    %43 = arith.divf %41, %42 : vector<128x1xf32>
    %44 = arith.mulf %37, %37 : vector<128x256xf32>
    %cst_26 = arith.constant dense<0.000000e+00> : vector<128xf32>
    %45 = vector.multi_reduction <add>, %44, %cst_26 [1] : vector<128x256xf32> to vector<128xf32>
    %46 = vector.shape_cast %45 : vector<128xf32> to vector<128x1xf32>
    %cst_27 = arith.constant 2.560000e+02 : f32
    %47 = vector.broadcast %cst_27 : f32 to vector<128x1xf32>
    %48 = arith.divf %46, %47 : vector<128x1xf32>
    %49 = arith.mulf %43, %43 : vector<128x1xf32>
    %50 = arith.subf %48, %49 : vector<128x1xf32>
    %51 = vector.broadcast %43 : vector<128x1xf32> to vector<128x256xf32>
    %52 = arith.subf %37, %51 : vector<128x256xf32>
    %cst_28 = arith.constant 9.99999974E-6 : f32
    %53 = vector.broadcast %cst_28 : f32 to vector<128x1xf32>
    %54 = arith.addf %50, %53 : vector<128x1xf32>
    %55 = math.rsqrt %54 : vector<128x1xf32>
    %56 = vector.broadcast %55 : vector<128x1xf32> to vector<128x256xf32>
    %57 = arith.mulf %52, %56 : vector<128x256xf32>
    %58 = vector.broadcast %38 : vector<1x256xf32> to vector<128x256xf32>
    %59 = arith.mulf %57, %58 : vector<128x256xf32>
    %60 = vector.broadcast %39 : vector<1x256xf32> to vector<128x256xf32>
    %61 = arith.addf %59, %60 : vector<128x256xf32>
    %cst_29 = arith.constant 0.00999999977 : f32
    %62 = vector.broadcast %cst_29 : f32 to vector<128x256xf32>
    %63 = arith.mulf %62, %61 : vector<128x256xf32>
    %64 = arith.maximumf %61, %63 : vector<128x256xf32>
    %c0_30 = arith.constant 0 : index
    %c0_31 = arith.constant 0 : index
    %65 = vector.load %arg10[%c0_30, %c0_31] : memref<256x128xf32, #tpu.memory_space<vmem>>, vector<256x128xf32>
    %cst_32 = arith.constant dense<0.000000e+00> : vector<128x128xf32>
    %66 = tpu.matmul %64, %65, %cst_32 {dimension_numbers = #tpu.dot_dimension_numbers<[1], [0], [0], [1], [0, 0, 1, 1], [], []>} : vector<128x256xf32>, vector<256x128xf32>, vector<128x128xf32> -> vector<128x128xf32>
    %c0_33 = arith.constant 0 : index
    %c0_34 = arith.constant 0 : index
    %67 = vector.load %arg11[%c0_33, %c0_34] : memref<1x128xf32, #tpu.memory_space<vmem>>, vector<1x128xf32>
    %68 = vector.broadcast %67 : vector<1x128xf32> to vector<128x128xf32>
    %69 = arith.addf %66, %68 : vector<128x128xf32>
    %c0_35 = arith.constant 0 : index
    %c0_36 = arith.constant 0 : index
    %70 = vector.load %arg12[%c0_35, %c0_36] : memref<1x128xf32, #tpu.memory_space<vmem>>, vector<1x128xf32>
    %c0_37 = arith.constant 0 : index
    %c0_38 = arith.constant 0 : index
    %71 = vector.load %arg13[%c0_37, %c0_38] : memref<1x128xf32, #tpu.memory_space<vmem>>, vector<1x128xf32>
    %cst_39 = arith.constant dense<0.000000e+00> : vector<128xf32>
    %72 = vector.multi_reduction <add>, %69, %cst_39 [1] : vector<128x128xf32> to vector<128xf32>
    %73 = vector.shape_cast %72 : vector<128xf32> to vector<128x1xf32>
    %cst_40 = arith.constant 1.280000e+02 : f32
    %74 = vector.broadcast %cst_40 : f32 to vector<128x1xf32>
    %75 = arith.divf %73, %74 : vector<128x1xf32>
    %76 = arith.mulf %69, %69 : vector<128x128xf32>
    %cst_41 = arith.constant dense<0.000000e+00> : vector<128xf32>
    %77 = vector.multi_reduction <add>, %76, %cst_41 [1] : vector<128x128xf32> to vector<128xf32>
    %78 = vector.shape_cast %77 : vector<128xf32> to vector<128x1xf32>
    %cst_42 = arith.constant 1.280000e+02 : f32
    %79 = vector.broadcast %cst_42 : f32 to vector<128x1xf32>
    %80 = arith.divf %78, %79 : vector<128x1xf32>
    %81 = arith.mulf %75, %75 : vector<128x1xf32>
    %82 = arith.subf %80, %81 : vector<128x1xf32>
    %83 = vector.broadcast %75 : vector<128x1xf32> to vector<128x128xf32>
    %84 = arith.subf %69, %83 : vector<128x128xf32>
    %cst_43 = arith.constant 9.99999974E-6 : f32
    %85 = vector.broadcast %cst_43 : f32 to vector<128x1xf32>
    %86 = arith.addf %82, %85 : vector<128x1xf32>
    %87 = math.rsqrt %86 : vector<128x1xf32>
    %88 = vector.broadcast %87 : vector<128x1xf32> to vector<128x128xf32>
    %89 = arith.mulf %84, %88 : vector<128x128xf32>
    %90 = vector.broadcast %70 : vector<1x128xf32> to vector<128x128xf32>
    %91 = arith.mulf %89, %90 : vector<128x128xf32>
    %92 = vector.broadcast %71 : vector<1x128xf32> to vector<128x128xf32>
    %93 = arith.addf %91, %92 : vector<128x128xf32>
    %cst_44 = arith.constant 0.00999999977 : f32
    %94 = vector.broadcast %cst_44 : f32 to vector<128x128xf32>
    %95 = arith.mulf %94, %93 : vector<128x128xf32>
    %96 = arith.maximumf %93, %95 : vector<128x128xf32>
    %c0_45 = arith.constant 0 : index
    %c0_46 = arith.constant 0 : index
    %97 = vector.load %arg14[%c0_45, %c0_46] : memref<128x64xf32, #tpu.memory_space<vmem>>, vector<128x64xf32>
    %cst_47 = arith.constant dense<0.000000e+00> : vector<128x64xf32>
    %98 = tpu.matmul %96, %97, %cst_47 {dimension_numbers = #tpu.dot_dimension_numbers<[1], [0], [0], [1], [0, 0, 1, 1], [], []>} : vector<128x128xf32>, vector<128x64xf32>, vector<128x64xf32> -> vector<128x64xf32>
    %c0_48 = arith.constant 0 : index
    %c0_49 = arith.constant 0 : index
    %99 = vector.load %arg15[%c0_48, %c0_49] : memref<1x64xf32, #tpu.memory_space<vmem>>, vector<1x64xf32>
    %100 = vector.broadcast %99 : vector<1x64xf32> to vector<128x64xf32>
    %101 = arith.addf %98, %100 : vector<128x64xf32>
    %c0_50 = arith.constant 0 : index
    %c0_51 = arith.constant 0 : index
    %102 = vector.load %arg16[%c0_50, %c0_51] : memref<1x64xf32, #tpu.memory_space<vmem>>, vector<1x64xf32>
    %c0_52 = arith.constant 0 : index
    %c0_53 = arith.constant 0 : index
    %103 = vector.load %arg17[%c0_52, %c0_53] : memref<1x64xf32, #tpu.memory_space<vmem>>, vector<1x64xf32>
    %cst_54 = arith.constant dense<0.000000e+00> : vector<128xf32>
    %104 = vector.multi_reduction <add>, %101, %cst_54 [1] : vector<128x64xf32> to vector<128xf32>
    %105 = vector.shape_cast %104 : vector<128xf32> to vector<128x1xf32>
    %cst_55 = arith.constant 6.400000e+01 : f32
    %106 = vector.broadcast %cst_55 : f32 to vector<128x1xf32>
    %107 = arith.divf %105, %106 : vector<128x1xf32>
    %108 = arith.mulf %101, %101 : vector<128x64xf32>
    %cst_56 = arith.constant dense<0.000000e+00> : vector<128xf32>
    %109 = vector.multi_reduction <add>, %108, %cst_56 [1] : vector<128x64xf32> to vector<128xf32>
    %110 = vector.shape_cast %109 : vector<128xf32> to vector<128x1xf32>
    %cst_57 = arith.constant 6.400000e+01 : f32
    %111 = vector.broadcast %cst_57 : f32 to vector<128x1xf32>
    %112 = arith.divf %110, %111 : vector<128x1xf32>
    %113 = arith.mulf %107, %107 : vector<128x1xf32>
    %114 = arith.subf %112, %113 : vector<128x1xf32>
    %115 = vector.broadcast %107 : vector<128x1xf32> to vector<128x64xf32>
    %116 = arith.subf %101, %115 : vector<128x64xf32>
    %cst_58 = arith.constant 9.99999974E-6 : f32
    %117 = vector.broadcast %cst_58 : f32 to vector<128x1xf32>
    %118 = arith.addf %114, %117 : vector<128x1xf32>
    %119 = math.rsqrt %118 : vector<128x1xf32>
    %120 = vector.broadcast %119 : vector<128x1xf32> to vector<128x64xf32>
    %121 = arith.mulf %116, %120 : vector<128x64xf32>
    %122 = vector.broadcast %102 : vector<1x64xf32> to vector<128x64xf32>
    %123 = arith.mulf %121, %122 : vector<128x64xf32>
    %124 = vector.broadcast %103 : vector<1x64xf32> to vector<128x64xf32>
    %125 = arith.addf %123, %124 : vector<128x64xf32>
    %cst_59 = arith.constant 0.00999999977 : f32
    %126 = vector.broadcast %cst_59 : f32 to vector<128x64xf32>
    %127 = arith.mulf %126, %125 : vector<128x64xf32>
    %128 = arith.maximumf %125, %127 : vector<128x64xf32>
    %c0_60 = arith.constant 0 : index
    %c0_61 = arith.constant 0 : index
    %129 = vector.load %arg18[%c0_60, %c0_61] : memref<1x64xf32, #tpu.memory_space<vmem>>, vector<1x64xf32>
    %cst_62 = arith.constant dense<0.000000e+00> : vector<1x128xf32>
    %130 = tpu.matmul %129, %128, %cst_62 {dimension_numbers = #tpu.dot_dimension_numbers<[1], [1], [0], [0], [0, 0, 1, 0], [], []>} : vector<1x64xf32>, vector<128x64xf32>, vector<1x128xf32> -> vector<1x128xf32>
    %c0_63 = arith.constant 0 : index
    %c0_64 = arith.constant 0 : index
    %131 = vector.load %arg19[%c0_63, %c0_64] : memref<1x1xf32, #tpu.memory_space<vmem>>, vector<1x1xf32>
    %132 = vector.broadcast %131 : vector<1x1xf32> to vector<1x128xf32>
    %133 = arith.addf %130, %132 : vector<1x128xf32>
    %134 = vector.shape_cast %133 : vector<1x128xf32> to vector<1x1x128xf32>
    %c0_65 = arith.constant 0 : index
    %c0_66 = arith.constant 0 : index
    %c0_67 = arith.constant 0 : index
    %135 = vector.load %arg20[%c0_65, %c0_66, %c0_67] : memref<1x1x128xf32, #tpu.memory_space<vmem>>, vector<1x1x128xf32>
    tpu.vector_store %arg20[%c0_65, %c0_66, %c0_67], %134 {strides = array<i32>} : memref<1x1x128xf32, #tpu.memory_space<vmem>>, vector<1x1x128xf32>,
    return
  }
  func.func @transform_0(%arg0: i32) -> (i32, i32) {
    %c0_i32 = arith.constant 0 : i32
    %c0_i32_0 = arith.constant 0 : i32
    return %arg0, %c0_i32 : i32, i32
  }
  func.func @transform_1(%arg0: i32) -> (i32, i32) {
    %c0_i32 = arith.constant 0 : i32
    %c0_i32_0 = arith.constant 0 : i32
    %c0_i32_1 = arith.constant 0 : i32
    return %c0_i32, %c0_i32_0 : i32, i32
  }
  func.func @transform_2(%arg0: i32) -> (i32, i32) {
    %c0_i32 = arith.constant 0 : i32
    %c0_i32_0 = arith.constant 0 : i32
    %c0_i32_1 = arith.constant 0 : i32
    return %c0_i32, %c0_i32_0 : i32, i32
  }
  func.func @transform_3(%arg0: i32) -> (i32, i32) {
    %c0_i32 = arith.constant 0 : i32
    %c0_i32_0 = arith.constant 0 : i32
    %c0_i32_1 = arith.constant 0 : i32
    return %c0_i32, %c0_i32_0 : i32, i32
  }
  func.func @transform_4(%arg0: i32) -> (i32, i32) {
    %c0_i32 = arith.constant 0 : i32
    %c0_i32_0 = arith.constant 0 : i32
    %c0_i32_1 = arith.constant 0 : i32
    return %c0_i32, %c0_i32_0 : i32, i32
  }
  func.func @transform_5(%arg0: i32) -> (i32, i32) {
    %c0_i32 = arith.constant 0 : i32
    %c0_i32_0 = arith.constant 0 : i32
    %c0_i32_1 = arith.constant 0 : i32
    return %c0_i32, %c0_i32_0 : i32, i32
  }
  func.func @transform_6(%arg0: i32) -> (i32, i32) {
    %c0_i32 = arith.constant 0 : i32
    %c0_i32_0 = arith.constant 0 : i32
    %c0_i32_1 = arith.constant 0 : i32
    return %c0_i32, %c0_i32_0 : i32, i32
  }
  func.func @transform_7(%arg0: i32) -> (i32, i32) {
    %c0_i32 = arith.constant 0 : i32
    %c0_i32_0 = arith.constant 0 : i32
    %c0_i32_1 = arith.constant 0 : i32
    return %c0_i32, %c0_i32_0 : i32, i32
  }
  func.func @transform_8(%arg0: i32) -> (i32, i32) {
    %c0_i32 = arith.constant 0 : i32
    %c0_i32_0 = arith.constant 0 : i32
    %c0_i32_1 = arith.constant 0 : i32
    return %c0_i32, %c0_i32_0 : i32, i32
  }
  func.func @transform_9(%arg0: i32) -> (i32, i32) {
    %c0_i32 = arith.constant 0 : i32
    %c0_i32_0 = arith.constant 0 : i32
    %c0_i32_1 = arith.constant 0 : i32
    return %c0_i32, %c0_i32_0 : i32, i32
  }
  func.func @transform_10(%arg0: i32) -> (i32, i32) {
    %c0_i32 = arith.constant 0 : i32
    %c0_i32_0 = arith.constant 0 : i32
    %c0_i32_1 = arith.constant 0 : i32
    return %c0_i32, %c0_i32_0 : i32, i32
  }
  func.func @transform_11(%arg0: i32) -> (i32, i32) {
    %c0_i32 = arith.constant 0 : i32
    %c0_i32_0 = arith.constant 0 : i32
    %c0_i32_1 = arith.constant 0 : i32
    return %c0_i32, %c0_i32_0 : i32, i32
  }
  func.func @transform_12(%arg0: i32) -> (i32, i32) {
    %c0_i32 = arith.constant 0 : i32
    %c0_i32_0 = arith.constant 0 : i32
    %c0_i32_1 = arith.constant 0 : i32
    return %c0_i32, %c0_i32_0 : i32, i32
  }
  func.func @transform_13(%arg0: i32) -> (i32, i32) {
    %c0_i32 = arith.constant 0 : i32
    %c0_i32_0 = arith.constant 0 : i32
    %c0_i32_1 = arith.constant 0 : i32
    return %c0_i32, %c0_i32_0 : i32, i32
  }
  func.func @transform_14(%arg0: i32) -> (i32, i32) {
    %c0_i32 = arith.constant 0 : i32
    %c0_i32_0 = arith.constant 0 : i32
    %c0_i32_1 = arith.constant 0 : i32
    return %c0_i32, %c0_i32_0 : i32, i32
  }
  func.func @transform_15(%arg0: i32) -> (i32, i32) {
    %c0_i32 = arith.constant 0 : i32
    %c0_i32_0 = arith.constant 0 : i32
    %c0_i32_1 = arith.constant 0 : i32
    return %c0_i32, %c0_i32_0 : i32, i32
  }
  func.func @transform_16(%arg0: i32) -> (i32, i32) {
    %c0_i32 = arith.constant 0 : i32
    %c0_i32_0 = arith.constant 0 : i32
    %c0_i32_1 = arith.constant 0 : i32
    return %c0_i32, %c0_i32_0 : i32, i32
  }
  func.func @transform_17(%arg0: i32) -> (i32, i32) {
    %c0_i32 = arith.constant 0 : i32
    %c0_i32_0 = arith.constant 0 : i32
    %c0_i32_1 = arith.constant 0 : i32
    return %c0_i32, %c0_i32_0 : i32, i32
  }
  func.func @transform_18(%arg0: i32) -> (i32, i32) {
    %c0_i32 = arith.constant 0 : i32
    %c0_i32_0 = arith.constant 0 : i32
    %c0_i32_1 = arith.constant 0 : i32
    return %c0_i32, %c0_i32_0 : i32, i32
  }
  func.func @transform_19(%arg0: i32) -> (i32, i32, i32) {
    %c0_i32 = arith.constant 0 : i32
    %c0_i32_0 = arith.constant 0 : i32
    %c0_i32_1 = arith.constant 0 : i32
    return %arg0, %c0_i32, %c0_i32_0 : i32, i32, i32
  }
}

</mosaic_0001>

<llo_original>
// kernel: tpu_custom_call.1
$region0: #{tpu_custom_call.1}
  #allocation0 [shape = 'u32[]', space=smem, size = 0x4, offset = 0x4, fixed_abs, tag = 'smem constant byte address 0x4 - core index']
  #allocation1 [shape = 'u32[144,128]{1,0:T(1,128)}', space=vmem, size = 0x12000, scoped, tag = 'internal scratch']
  #allocation2 [shape = 'f32[1,1]{1,0:T(1,128)S(1)}', space=vmem, size = 0x200, scoped, tag = 'scoped memory for tpu_custom_call.1']
  %s0 = inlined_call_operand.vmem [shape: f32[128,32], index: 0, kind: input, shape index: {}]
  %s1 = inlined_call_operand.hbm [shape: f32[32,512], index: 1, kind: input, shape index: {}]
  %s2 = inlined_call_operand.vmem [shape: f32[1,512], index: 2, kind: input, shape index: {}]
  %s3 = inlined_call_operand.vmem [shape: f32[1,512], index: 3, kind: input, shape index: {}]
  %s4 = inlined_call_operand.vmem [shape: f32[1,512], index: 4, kind: input, shape index: {}]
  %s5 = inlined_call_operand.hbm [shape: f32[512,256], index: 5, kind: input, shape index: {}]
  %s6 = inlined_call_operand.vmem [shape: f32[1,256], index: 6, kind: input, shape index: {}]
  %s7 = inlined_call_operand.vmem [shape: f32[1,256], index: 7, kind: input, shape index: {}]
  %s8 = inlined_call_operand.vmem [shape: f32[1,256], index: 8, kind: input, shape index: {}]
  %s9 = inlined_call_operand.vmem [shape: f32[256,128], index: 9, kind: input, shape index: {}]
  %s10 = inlined_call_operand.vmem [shape: f32[1,128], index: 10, kind: input, shape index: {}]
  %s11 = inlined_call_operand.vmem [shape: f32[1,128], index: 11, kind: input, shape index: {}]
  %s12 = inlined_call_operand.vmem [shape: f32[1,128], index: 12, kind: input, shape index: {}]
  %s13 = inlined_call_operand.vmem [shape: f32[128,64], index: 13, kind: input, shape index: {}]
  %s14 = inlined_call_operand.vmem [shape: f32[1,64], index: 14, kind: input, shape index: {}]
  %s15 = inlined_call_operand.vmem [shape: f32[1,64], index: 15, kind: input, shape index: {}]
  %s16 = inlined_call_operand.vmem [shape: f32[1,64], index: 16, kind: input, shape index: {}]
  %s17 = inlined_call_operand.vmem [shape: f32[1,64], index: 17, kind: input, shape index: {}]
  %s18 = inlined_call_operand.<no memory space> [shape: f32[1,1], index: 18, kind: input, shape index: {}]
  %s19 = inlined_call_operand.hbm [shape: f32[1,1,128], index: 19, kind: output, shape index: {}]
  %s20 = sld [smem:[#allocation0]]
  $region94: #{tpu_custom_call.1} parent=0
    _
  %s22 = ssub.s32 1, %s20
  %s23 = scalar_select 0, %s22, %s20
  %v24 = vstv %s18
  %25 = vst [vmem:[#allocation2] sm:$0x1] %v24
  $region1: #{tpu_custom_call.1} parent=0
    #allocation3 [shape = 'u8[65536]{0}', space=vmem, size = 0x10000, scoped, tag = 'input window, operand 1, single buffered']
    #allocation4 [shape = 's32[1]{0}', space=sflag, size = 0x4, scoped, tag = 'scoped memory for tpu_custom_call.1']
    #allocation5 [shape = 's32[1]{0}', space=sflag, size = 0x4, scoped, tag = 'scoped memory for tpu_custom_call.1']
    #allocation6 [shape = 'u8[524288]{0}', space=vmem, size = 0x80000, scoped, tag = 'input window, operand 5, single buffered']
    #allocation7 [shape = 's32[1]{0}', space=sflag, size = 0x4, scoped, tag = 'scoped memory for tpu_custom_call.1']
    #allocation8 [shape = 'u8[512]{0}', space=vmem, size = 0x400, scoped, tag = 'output window, operand 0, single buffered']
    %26 = vsyncpa [#allocation4], 0
    %27 = vsyncpa [#allocation7], 0
    %28 = vsyncpa [#allocation5], 0
    // Predicated region
    $region2: #{tpu_custom_call.1} parent=1 // pred_check
      _
    $region3: #{tpu_custom_call.1} parent=1 // pred_check_branch
      %30 = sbr.rel (0) target = $region5
    $region4: #{tpu_custom_call.1} parent=1 // pred_region
      _
    $region5: #{tpu_custom_call.1} parent=1 // pred_fallthru
      _
    // Predicated region
    $region6: #{tpu_custom_call.1} parent=1 // pred_check
      _
    $region7: #{tpu_custom_call.1} parent=1 // pred_check_branch
      %32 = sbr.rel (0) target = $region9
    $region8: #{tpu_custom_call.1} parent=1 // pred_region
      %s34 = ssub.s32 2048, 2048
      %35 = vsyncadd [#allocation4], %s34
      %s36 = sshll.u32 [#allocation3], 4
      %s37 = int_to_ptr.vmem [resolvable:$true] %s36
      %42 = dma.hbm_to_vmem [thread:$0]  %s1, 2048, %s37, [#allocation4], 512, 512, 32
    $region9: #{tpu_custom_call.1} parent=1 // pred_fallthru
      _
    // Predicated region
    $region10: #{tpu_custom_call.1} parent=1 // pred_check
      _
    $region11: #{tpu_custom_call.1} parent=1 // pred_check_branch
      %44 = sbr.rel (0) target = $region13
    $region12: #{tpu_custom_call.1} parent=1 // pred_region
      _
    $region13: #{tpu_custom_call.1} parent=1 // pred_fallthru
      _
    // Predicated region
    $region14: #{tpu_custom_call.1} parent=1 // pred_check
      _
    $region15: #{tpu_custom_call.1} parent=1 // pred_check_branch
      %46 = sbr.rel (0) target = $region17
    $region16: #{tpu_custom_call.1} parent=1 // pred_region
      _
    $region17: #{tpu_custom_call.1} parent=1 // pred_fallthru
      _
    // Predicated region
    $region18: #{tpu_custom_call.1} parent=1 // pred_check
      _
    $region19: #{tpu_custom_call.1} parent=1 // pred_check_branch
      %48 = sbr.rel (0) target = $region21
    $region20: #{tpu_custom_call.1} parent=1 // pred_region
      _
    $region21: #{tpu_custom_call.1} parent=1 // pred_fallthru
      _
    // Predicated region
    $region22: #{tpu_custom_call.1} parent=1 // pred_check
      _
    $region23: #{tpu_custom_call.1} parent=1 // pred_check_branch
      %50 = sbr.rel (0) target = $region25
    $region24: #{tpu_custom_call.1} parent=1 // pred_region
      %s52 = ssub.s32 16384, 16384
      %53 = vsyncadd [#allocation7], %s52
      %s54 = sshll.u32 [#allocation6], 4
      %s55 = int_to_ptr.vmem [resolvable:$true] %s54
      %60 = dma.hbm_to_vmem [thread:$0]  %s5, 16384, %s55, [#allocation7], 256, 256, 16
    $region25: #{tpu_custom_call.1} parent=1 // pred_fallthru
      _
    // Predicated region
    $region26: #{tpu_custom_call.1} parent=1 // pred_check
      _
    $region27: #{tpu_custom_call.1} parent=1 // pred_check_branch
      %62 = sbr.rel (0) target = $region29
    $region28: #{tpu_custom_call.1} parent=1 // pred_region
      _
    $region29: #{tpu_custom_call.1} parent=1 // pred_fallthru
      _
    // Predicated region
    $region30: #{tpu_custom_call.1} parent=1 // pred_check
      _
    $region31: #{tpu_custom_call.1} parent=1 // pred_check_branch
      %64 = sbr.rel (0) target = $region33
    $region32: #{tpu_custom_call.1} parent=1 // pred_region
      _
    $region33: #{tpu_custom_call.1} parent=1 // pred_fallthru
      _
    // Predicated region
    $region34: #{tpu_custom_call.1} parent=1 // pred_check
      _
    $region35: #{tpu_custom_call.1} parent=1 // pred_check_branch
      %66 = sbr.rel (0) target = $region37
    $region36: #{tpu_custom_call.1} parent=1 // pred_region
      _
    $region37: #{tpu_custom_call.1} parent=1 // pred_fallthru
      _
    // Predicated region
    $region38: #{tpu_custom_call.1} parent=1 // pred_check
      _
    $region39: #{tpu_custom_call.1} parent=1 // pred_check_branch
      %68 = sbr.rel (0) target = $region41
    $region40: #{tpu_custom_call.1} parent=1 // pred_region
      _
    $region41: #{tpu_custom_call.1} parent=1 // pred_fallthru
      _
    // Predicated region
    $region42: #{tpu_custom_call.1} parent=1 // pred_check
      _
    $region43: #{tpu_custom_call.1} parent=1 // pred_check_branch
      %70 = sbr.rel (0) target = $region45
    $region44: #{tpu_custom_call.1} parent=1 // pred_region
      _
    $region45: #{tpu_custom_call.1} parent=1 // pred_fallthru
      _
    // Predicated region
    $region46: #{tpu_custom_call.1} parent=1 // pred_check
      _
    $region47: #{tpu_custom_call.1} parent=1 // pred_check_branch
      %72 = sbr.rel (0) target = $region49
    $region48: #{tpu_custom_call.1} parent=1 // pred_region
      _
    $region49: #{tpu_custom_call.1} parent=1 // pred_fallthru
      _
    // Predicated region
    $region50: #{tpu_custom_call.1} parent=1 // pred_check
      _
    $region51: #{tpu_custom_call.1} parent=1 // pred_check_branch
      %74 = sbr.rel (0) target = $region53
    $region52: #{tpu_custom_call.1} parent=1 // pred_region
      _
    $region53: #{tpu_custom_call.1} parent=1 // pred_fallthru
      _
    // Predicated region
    $region54: #{tpu_custom_call.1} parent=1 // pred_check
      _
    $region55: #{tpu_custom_call.1} parent=1 // pred_check_branch
      %76 = sbr.rel (0) target = $region57
    $region56: #{tpu_custom_call.1} parent=1 // pred_region
      _
    $region57: #{tpu_custom_call.1} parent=1 // pred_fallthru
      _
    // Predicated region
    $region58: #{tpu_custom_call.1} parent=1 // pred_check
      _
    $region59: #{tpu_custom_call.1} parent=1 // pred_check_branch
      %78 = sbr.rel (0) target = $region61
    $region60: #{tpu_custom_call.1} parent=1 // pred_region
      _
    $region61: #{tpu_custom_call.1} parent=1 // pred_fallthru
      _
    // Predicated region
    $region62: #{tpu_custom_call.1} parent=1 // pred_check
      _
    $region63: #{tpu_custom_call.1} parent=1 // pred_check_branch
      %80 = sbr.rel (0) target = $region65
    $region64: #{tpu_custom_call.1} parent=1 // pred_region
      _
    $region65: #{tpu_custom_call.1} parent=1 // pred_fallthru
      _
    // Predicated region
    $region66: #{tpu_custom_call.1} parent=1 // pred_check
      _
    $region67: #{tpu_custom_call.1} parent=1 // pred_check_branch
      %82 = sbr.rel (0) target = $region69
    $region68: #{tpu_custom_call.1} parent=1 // pred_region
      _
    $region69: #{tpu_custom_call.1} parent=1 // pred_fallthru
      _
    // Predicated region
    $region70: #{tpu_custom_call.1} parent=1 // pred_check
      _
    $region71: #{tpu_custom_call.1} parent=1 // pred_check_branch
      %84 = sbr.rel (0) target = $region73
    $region72: #{tpu_custom_call.1} parent=1 // pred_region
      _
    $region73: #{tpu_custom_call.1} parent=1 // pred_fallthru
      _
    // Predicated region
    $region74: #{tpu_custom_call.1} parent=1 // pred_check
      _
    $region75: #{tpu_custom_call.1} parent=1 // pred_check_branch
      %86 = sbr.rel (0) target = $region77
    $region76: #{tpu_custom_call.1} parent=1 // pred_region
      _
    $region77: #{tpu_custom_call.1} parent=1 // pred_fallthru
      _
    // Predicated region
    $region78: #{tpu_custom_call.1} parent=1 // pred_check
      _
    $region79: #{tpu_custom_call.1} parent=1 // pred_check_branch
      %88 = sbr.rel (0) target = $region81
    $region80: #{tpu_custom_call.1} parent=1 // pred_region
      %89 = dma.done [#allocation4], 2048
    $region81: #{tpu_custom_call.1} parent=1 // pred_fallthru
      _
    // Predicated region
    $region82: #{tpu_custom_call.1} parent=1 // pred_check
      _
    $region83: #{tpu_custom_call.1} parent=1 // pred_check_branch
      %91 = sbr.rel (0) target = $region85
    $region84: #{tpu_custom_call.1} parent=1 // pred_region
      %92 = dma.done [#allocation7], 16384
    $region85: #{tpu_custom_call.1} parent=1 // pred_fallthru
      _
    %v93 = vld [vmem:[%s0] sm:$0xff]
    %v94 = vld [vmem:[%s0 + $0x8] sm:$0xff]
    %v95 = vld [vmem:[%s0 + $0x10] sm:$0xff]
    %v96 = vld [vmem:[%s0 + $0x18] sm:$0xff]
    %v97 = vld [vmem:[%s0 + $0x20] sm:$0xff]
    %v98 = vld [vmem:[%s0 + $0x28] sm:$0xff]
    %v99 = vld [vmem:[%s0 + $0x30] sm:$0xff]
    %v100 = vld [vmem:[%s0 + $0x38] sm:$0xff]
    %v101 = vld [vmem:[%s0 + $0x40] sm:$0xff]
    %v102 = vld [vmem:[%s0 + $0x48] sm:$0xff]
    %v103 = vld [vmem:[%s0 + $0x50] sm:$0xff]
    %v104 = vld [vmem:[%s0 + $0x58] sm:$0xff]
    %v105 = vld [vmem:[%s0 + $0x60] sm:$0xff]
    %v106 = vld [vmem:[%s0 + $0x68] sm:$0xff]
    %v107 = vld [vmem:[%s0 + $0x70] sm:$0xff]
    %v108 = vld [vmem:[%s0 + $0x78] sm:$0xff]
    %v109 = vld [vmem:[#allocation3] sm:$0xff]
    %v110 = vld [vmem:[#allocation3 + $0x8] sm:$0xff]
    %v111 = vld [vmem:[#allocation3 + $0x10] sm:$0xff]
    %v112 = vld [vmem:[#allocation3 + $0x18] sm:$0xff]
    %v113 = vld [vmem:[#allocation3 + $0x20] sm:$0xff]
    %v114 = vld [vmem:[#allocation3 + $0x28] sm:$0xff]
    %v115 = vld [vmem:[#allocation3 + $0x30] sm:$0xff]
    %v116 = vld [vmem:[#allocation3 + $0x38] sm:$0xff]
    %v117 = vld [vmem:[#allocation3 + $0x40] sm:$0xff]
    %v118 = vld [vmem:[#allocation3 + $0x48] sm:$0xff]
    %v119 = vld [vmem:[#allocation3 + $0x50] sm:$0xff]
    %v120 = vld [vmem:[#allocation3 + $0x58] sm:$0xff]
    %v121 = vld [vmem:[#allocation3 + $0x60] sm:$0xff]
    %v122 = vld [vmem:[#allocation3 + $0x68] sm:$0xff]
    %v123 = vld [vmem:[#allocation3 + $0x70] sm:$0xff]
    %v124 = vld [vmem:[#allocation3 + $0x78] sm:$0xff]
    %v125 = vld [vmem:[%s2] sm:$0xf]
    %v127 = vlaneseq
    %v128 = vshrl.u32 %v127, 7
    %v129 = vsub.s32 0, %v128
    %v130 = vrot.slane %v125, %v129
    %v131 = vlaneseq
    %v132 = vshrl.u32 %v131, 7
    %v133 = vsub.s32 1, %v132
    %v134 = vrot.slane %v125, %v133
    %v135 = vlaneseq
    %v136 = vshrl.u32 %v135, 7
    %v137 = vsub.s32 2, %v136
    %v138 = vrot.slane %v125, %v137
    %v139 = vlaneseq
    %v140 = vshrl.u32 %v139, 7
    %v141 = vsub.s32 3, %v140
    %v142 = vrot.slane %v125, %v141
    %vm147 = vcmask 261120
    %v149 = vsel %vm147, %v93, 0
    %v152 = vsel %vm147, %v94, 0
    %v155 = vsel %vm147, %v95, 0
    %v158 = vsel %vm147, %v96, 0
    %v161 = vsel %vm147, %v97, 0
    %v164 = vsel %vm147, %v98, 0
    %v167 = vsel %vm147, %v99, 0
    %v170 = vsel %vm147, %v100, 0
    %v173 = vsel %vm147, %v101, 0
    %v176 = vsel %vm147, %v102, 0
    %v179 = vsel %vm147, %v103, 0
    %v182 = vsel %vm147, %v104, 0
    %v185 = vsel %vm147, %v105, 0
    %v188 = vsel %vm147, %v106, 0
    %v191 = vsel %vm147, %v107, 0
    %v194 = vsel %vm147, %v108, 0
    %196 = vmatprep.subr.mxu0 0.0
    %197 = vmatpush1.msra.mxu0 0.0
    %198 = vmatprep.subr.mxu0 0.0
    %199 = vmatpush1.msra.mxu0 0.0
    %200 = vmatprep.subr.mxu0 0.0
    %201 = vmatpush1.msra.mxu0 0.0
    %202 = vmatprep.subr.mxu0 0.0
    %203 = vmatpush1.msra.mxu0 0.0
    %204 = vmatprep.subr.mxu0 0.0
    %205 = vmatpush1.msra.mxu0 0.0
    %206 = vmatprep.subr.mxu0 0.0
    %207 = vmatpush1.msra.mxu0 0.0
    %208 = vmatprep.subr.mxu0 0.0
    %209 = vmatpush1.msra.mxu0 0.0
    %210 = vmatprep.subr.mxu0 0.0
    %211 = vmatpush1.msra.mxu0 0.0
    %212 = vmatprep.subr.mxu0 0.0
    %213 = vmatpush1.msra.mxu0 0.0
    %214 = vmatprep.subr.mxu0 0.0
    %215 = vmatpush1.msra.mxu0 0.0
    %216 = vmatprep.subr.mxu0 0.0
    %217 = vmatpush1.msra.mxu0 0.0
    %218 = vmatprep.subr.mxu0 0.0
    %219 = vmatpush1.msra.mxu0 0.0
    %220 = vmatprep.subr.mxu0 %v122
    %221 = vmatpush1.msra.mxu0 %v121
    %222 = vmatprep.subr.mxu0 %v118
    %223 = vmatpush1.msra.mxu0 %v117
    %224 = vmatprep.subr.mxu0 %v114
    %225 = vmatpush1.msra.mxu0 %v113
    %226 = vmatprep.subr.mxu0 %v110
    %227 = vmatpush1.msra.mxu0 %v109
    %228 = vmatprep.subr.mxu0 0.0
    %229 = vmatpush2.msra.mxu0 0.0
    %230 = vmatprep.subr.mxu0 0.0
    %231 = vmatpush2.msra.mxu0 0.0
    %232 = vmatprep.subr.mxu0 0.0
    %233 = vmatpush2.msra.mxu0 0.0
    %234 = vmatprep.subr.mxu0 0.0
    %235 = vmatpush2.msra.mxu0 0.0
    %236 = vmatprep.subr.mxu0 0.0
    %237 = vmatpush2.msra.mxu0 0.0
    %238 = vmatprep.subr.mxu0 0.0
    %239 = vmatpush2.msra.mxu0 0.0
    %240 = vmatprep.subr.mxu0 0.0
    %241 = vmatpush2.msra.mxu0 0.0
    %242 = vmatprep.subr.mxu0 0.0
    %243 = vmatpush2.msra.mxu0 0.0
    %244 = vmatprep.subr.mxu0 0.0
    %245 = vmatpush2.msra.mxu0 0.0
    %246 = vmatprep.subr.mxu0 0.0
    %247 = vmatpush2.msra.mxu0 0.0
    %248 = vmatprep.subr.mxu0 0.0
    %249 = vmatpush2.msra.mxu0 0.0
    %250 = vmatprep.subr.mxu0 0.0
    %251 = vmatpush2.msra.mxu0 0.0
    %252 = vmatprep.subr.mxu0 0.0
    %253 = vmatpush2.msra.mxu0 0.0
    %254 = vmatprep.subr.mxu0 0.0
    %255 = vmatpush2.msra.mxu0 0.0
    %256 = vmatprep.subr.mxu0 0.0
    %257 = vmatpush2.msra.mxu0 0.0
    %258 = vmatprep.subr.mxu0 0.0
    %259 = vmatpush2.msra.mxu0 0.0
    %260 = vmatprep.mubr.f32.mxu0 0.0
    %261 = vmatmul.mubr.f32.gmra.mxu0 %v149
    %v262 = vpop.f32.mrf.mxu0
    %v263 = vadd.f32 %v130, %v262
    %v264 = vpop.f32.mrf.mxu0
    %v265 = vadd.f32 %v134, %v264
    %266 = vmatprep.mubr.f32.mxu0 0.0
    %267 = vmatmul.mubr.f32.gmra.mxu0 %v152
    %v268 = vpop.f32.mrf.mxu0
    %v269 = vadd.f32 %v130, %v268
    %v270 = vpop.f32.mrf.mxu0
    %v271 = vadd.f32 %v134, %v270
    %272 = vmatprep.mubr.f32.mxu0 0.0
    %273 = vmatmul.mubr.f32.gmra.mxu0 %v155
    %v274 = vpop.f32.mrf.mxu0
    %v275 = vadd.f32 %v130, %v274
    %v276 = vpop.f32.mrf.mxu0
    %v277 = vadd.f32 %v134, %v276
    %278 = vmatprep.mubr.f32.mxu0 0.0
    %279 = vmatmul.mubr.f32.gmra.mxu0 %v158
    %v280 = vpop.f32.mrf.mxu0
    %v281 = vadd.f32 %v130, %v280
    %v282 = vpop.f32.mrf.mxu0
    %v283 = vadd.f32 %v134, %v282
    %284 = vmatprep.mubr.f32.mxu0 0.0
    %285 = vmatmul.mubr.f32.gmra.mxu0 %v161
    %v286 = vpop.f32.mrf.mxu0
    %v287 = vadd.f32 %v130, %v286
    %v288 = vpop.f32.mrf.mxu0
    %v289 = vadd.f32 %v134, %v288
    %290 = vmatprep.mubr.f32.mxu0 0.0
    %291 = vmatmul.mubr.f32.gmra.mxu0 %v164
    %v292 = vpop.f32.mrf.mxu0
    %v293 = vadd.f32 %v130, %v292
    %v294 = vpop.f32.mrf.mxu0
    %v295 = vadd.f32 %v134, %v294
    %296 = vmatprep.mubr.f32.mxu0 0.0
    %297 = vmatmul.mubr.f32.gmra.mxu0 %v167
    %v298 = vpop.f32.mrf.mxu0
    %v299 = vadd.f32 %v130, %v298
    %v300 = vpop.f32.mrf.mxu0
    %v301 = vadd.f32 %v134, %v300
    %302 = vmatprep.mubr.f32.mxu0 0.0
    %303 = vmatmul.mubr.f32.gmra.mxu0 %v170
    %v304 = vpop.f32.mrf.mxu0
    %v305 = vadd.f32 %v130, %v304
    %v306 = vpop.f32.mrf.mxu0
    %v307 = vadd.f32 %v134, %v306
    %308 = vmatprep.mubr.f32.mxu0 0.0
    %309 = vmatmul.mubr.f32.gmra.mxu0 %v173
    %v310 = vpop.f32.mrf.mxu0
    %v311 = vadd.f32 %v130, %v310
    %v312 = vpop.f32.mrf.mxu0
    %v313 = vadd.f32 %v134, %v312
    %314 = vmatprep.mubr.f32.mxu0 0.0
    %315 = vmatmul.mubr.f32.gmra.mxu0 %v176
    %v316 = vpop.f32.mrf.mxu0
    %v317 = vadd.f32 %v130, %v316
    %v318 = vpop.f32.mrf.mxu0
    %v319 = vadd.f32 %v134, %v318
    %320 = vmatprep.mubr.f32.mxu0 0.0
    %321 = vmatmul.mubr.f32.gmra.mxu0 %v179
    %v322 = vpop.f32.mrf.mxu0
    %v323 = vadd.f32 %v130, %v322
    %v324 = vpop.f32.mrf.mxu0
    %v325 = vadd.f32 %v134, %v324
    %326 = vmatprep.mubr.f32.mxu0 0.0
    %327 = vmatmul.mubr.f32.gmra.mxu0 %v182
    %v328 = vpop.f32.mrf.mxu0
    %v329 = vadd.f32 %v130, %v328
    %v330 = vpop.f32.mrf.mxu0
    %v331 = vadd.f32 %v134, %v330
    %332 = vmatprep.mubr.f32.mxu0 0.0
    %333 = vmatmul.mubr.f32.gmra.mxu0 %v185
    %v334 = vpop.f32.mrf.mxu0
    %v335 = vadd.f32 %v130, %v334
    %v336 = vpop.f32.mrf.mxu0
    %v337 = vadd.f32 %v134, %v336
    %338 = vmatprep.mubr.f32.mxu0 0.0
    %339 = vmatmul.mubr.f32.gmra.mxu0 %v188
    %v340 = vpop.f32.mrf.mxu0
    %v341 = vadd.f32 %v130, %v340
    %v342 = vpop.f32.mrf.mxu0
    %v343 = vadd.f32 %v134, %v342
    %344 = vmatprep.mubr.f32.mxu0 0.0
    %345 = vmatmul.mubr.f32.gmra.mxu0 %v191
    %v346 = vpop.f32.mrf.mxu0
    %v347 = vadd.f32 %v130, %v346
    %v348 = vpop.f32.mrf.mxu0
    %v349 = vadd.f32 %v134, %v348
    %350 = vmatprep.mubr.f32.mxu0 0.0
    %351 = vmatmul.mubr.f32.gmra.mxu0 %v194
    %v352 = vpop.f32.mrf.mxu0
    %v353 = vadd.f32 %v130, %v352
    %v354 = vpop.f32.mrf.mxu0
    %v355 = vadd.f32 %v134, %v354
    %356 = vdwg.mxu0
    %357 = vmatprep.subr.mxu0 0.0
    %358 = vmatpush1.msra.mxu0 0.0
    %359 = vmatprep.subr.mxu0 0.0
    %360 = vmatpush1.msra.mxu0 0.0
    %361 = vmatprep.subr.mxu0 0.0
    %362 = vmatpush1.msra.mxu0 0.0
    %363 = vmatprep.subr.mxu0 0.0
    %364 = vmatpush1.msra.mxu0 0.0
    %365 = vmatprep.subr.mxu0 0.0
    %366 = vmatpush1.msra.mxu0 0.0
    %367 = vmatprep.subr.mxu0 0.0
    %368 = vmatpush1.msra.mxu0 0.0
    %369 = vmatprep.subr.mxu0 0.0
    %370 = vmatpush1.msra.mxu0 0.0
    %371 = vmatprep.subr.mxu0 0.0
    %372 = vmatpush1.msra.mxu0 0.0
    %373 = vmatprep.subr.mxu0 0.0
    %374 = vmatpush1.msra.mxu0 0.0
    %375 = vmatprep.subr.mxu0 0.0
    %376 = vmatpush1.msra.mxu0 0.0
    %377 = vmatprep.subr.mxu0 0.0
    %378 = vmatpush1.msra.mxu0 0.0
    %379 = vmatprep.subr.mxu0 0.0
    %380 = vmatpush1.msra.mxu0 0.0
    %381 = vmatprep.subr.mxu0 %v124
    %382 = vmatpush1.msra.mxu0 %v123
    %383 = vmatprep.subr.mxu0 %v120
    %384 = vmatpush1.msra.mxu0 %v119
    %385 = vmatprep.subr.mxu0 %v116
    %386 = vmatpush1.msra.mxu0 %v115
    %387 = vmatprep.subr.mxu0 %v112
    %388 = vmatpush1.msra.mxu0 %v111
    %389 = vmatprep.subr.mxu0 0.0
    %390 = vmatpush2.msra.mxu0 0.0
    %391 = vmatprep.subr.mxu0 0.0
    %392 = vmatpush2.msra.mxu0 0.0
    %393 = vmatprep.subr.mxu0 0.0
    %394 = vmatpush2.msra.mxu0 0.0
    %395 = vmatprep.subr.mxu0 0.0
    %396 = vmatpush2.msra.mxu0 0.0
    %397 = vmatprep.subr.mxu0 0.0
    %398 = vmatpush2.msra.mxu0 0.0
    %399 = vmatprep.subr.mxu0 0.0
    %400 = vmatpush2.msra.mxu0 0.0
    %401 = vmatprep.subr.mxu0 0.0
    %402 = vmatpush2.msra.mxu0 0.0
    %403 = vmatprep.subr.mxu0 0.0
    %404 = vmatpush2.msra.mxu0 0.0
    %405 = vmatprep.subr.mxu0 0.0
    %406 = vmatpush2.msra.mxu0 0.0
    %407 = vmatprep.subr.mxu0 0.0
    %408 = vmatpush2.msra.mxu0 0.0
    %409 = vmatprep.subr.mxu0 0.0
    %410 = vmatpush2.msra.mxu0 0.0
    %411 = vmatprep.subr.mxu0 0.0
    %412 = vmatpush2.msra.mxu0 0.0
    %413 = vmatprep.subr.mxu0 0.0
    %414 = vmatpush2.msra.mxu0 0.0
    %415 = vmatprep.subr.mxu0 0.0
    %416 = vmatpush2.msra.mxu0 0.0
    %417 = vmatprep.subr.mxu0 0.0
    %418 = vmatpush2.msra.mxu0 0.0
    %419 = vmatprep.subr.mxu0 0.0
    %420 = vmatpush2.msra.mxu0 0.0
    %421 = vmatprep.mubr.f32.mxu0 0.0
    %422 = vmatmul.mubr.f32.gmra.mxu0 %v149
    %v423 = vpop.f32.mrf.mxu0
    %v424 = vadd.f32 %v138, %v423
    %v425 = vpop.f32.mrf.mxu0
    %v426 = vadd.f32 %v142, %v425
    %427 = vmatprep.mubr.f32.mxu0 0.0
    %428 = vmatmul.mubr.f32.gmra.mxu0 %v152
    %v429 = vpop.f32.mrf.mxu0
    %v430 = vadd.f32 %v138, %v429
    %v431 = vpop.f32.mrf.mxu0
    %v432 = vadd.f32 %v142, %v431
    %433 = vmatprep.mubr.f32.mxu0 0.0
    %434 = vmatmul.mubr.f32.gmra.mxu0 %v155
    %v435 = vpop.f32.mrf.mxu0
    %v436 = vadd.f32 %v138, %v435
    %v437 = vpop.f32.mrf.mxu0
    %v438 = vadd.f32 %v142, %v437
    %439 = vmatprep.mubr.f32.mxu0 0.0
    %440 = vmatmul.mubr.f32.gmra.mxu0 %v158
    %v441 = vpop.f32.mrf.mxu0
    %v442 = vadd.f32 %v138, %v441
    %v443 = vpop.f32.mrf.mxu0
    %v444 = vadd.f32 %v142, %v443
    %445 = vmatprep.mubr.f32.mxu0 0.0
    %446 = vmatmul.mubr.f32.gmra.mxu0 %v161
    %v447 = vpop.f32.mrf.mxu0
    %v448 = vadd.f32 %v138, %v447
    %v449 = vpop.f32.mrf.mxu0
    %v450 = vadd.f32 %v142, %v449
    %451 = vmatprep.mubr.f32.mxu0 0.0
    %452 = vmatmul.mubr.f32.gmra.mxu0 %v164
    %v453 = vpop.f32.mrf.mxu0
    %v454 = vadd.f32 %v138, %v453
    %v455 = vpop.f32.mrf.mxu0
    %v456 = vadd.f32 %v142, %v455
    %457 = vmatprep.mubr.f32.mxu0 0.0
    %458 = vmatmul.mubr.f32.gmra.mxu0 %v167
    %v459 = vpop.f32.mrf.mxu0
    %v460 = vadd.f32 %v138, %v459
    %v461 = vpop.f32.mrf.mxu0
    %v462 = vadd.f32 %v142, %v461
    %463 = vmatprep.mubr.f32.mxu0 0.0
    %464 = vmatmul.mubr.f32.gmra.mxu0 %v170
    %v465 = vpop.f32.mrf.mxu0
    %v466 = vadd.f32 %v138, %v465
    %v467 = vpop.f32.mrf.mxu0
    %v468 = vadd.f32 %v142, %v467
    %469 = vmatprep.mubr.f32.mxu0 0.0
    %470 = vmatmul.mubr.f32.gmra.mxu0 %v173
    %v471 = vpop.f32.mrf.mxu0
    %v472 = vadd.f32 %v138, %v471
    %v473 = vpop.f32.mrf.mxu0
    %v474 = vadd.f32 %v142, %v473
    %475 = vmatprep.mubr.f32.mxu0 0.0
    %476 = vmatmul.mubr.f32.gmra.mxu0 %v176
    %v477 = vpop.f32.mrf.mxu0
    %v478 = vadd.f32 %v138, %v477
    %v479 = vpop.f32.mrf.mxu0
    %v480 = vadd.f32 %v142, %v479
    %481 = vmatprep.mubr.f32.mxu0 0.0
    %482 = vmatmul.mubr.f32.gmra.mxu0 %v179
    %v483 = vpop.f32.mrf.mxu0
    %v484 = vadd.f32 %v138, %v483
    %v485 = vpop.f32.mrf.mxu0
    %v486 = vadd.f32 %v142, %v485
    %487 = vmatprep.mubr.f32.mxu0 0.0
    %488 = vmatmul.mubr.f32.gmra.mxu0 %v182
    %v489 = vpop.f32.mrf.mxu0
    %v490 = vadd.f32 %v138, %v489
    %v491 = vpop.f32.mrf.mxu0
    %v492 = vadd.f32 %v142, %v491
    %493 = vmatprep.mubr.f32.mxu0 0.0
    %494 = vmatmul.mubr.f32.gmra.mxu0 %v185
    %v495 = vpop.f32.mrf.mxu0
    %v496 = vadd.f32 %v138, %v495
    %v497 = vpop.f32.mrf.mxu0
    %v498 = vadd.f32 %v142, %v497
    %499 = vmatprep.mubr.f32.mxu0 0.0
    %500 = vmatmul.mubr.f32.gmra.mxu0 %v188
    %v501 = vpop.f32.mrf.mxu0
    %v502 = vadd.f32 %v138, %v501
    %v503 = vpop.f32.mrf.mxu0
    %v504 = vadd.f32 %v142, %v503
    %505 = vmatprep.mubr.f32.mxu0 0.0
    %506 = vmatmul.mubr.f32.gmra.mxu0 %v191
    %v507 = vpop.f32.mrf.mxu0
    %v508 = vadd.f32 %v138, %v507
    %v509 = vpop.f32.mrf.mxu0
    %v510 = vadd.f32 %v142, %v509
    %511 = vmatprep.mubr.f32.mxu0 0.0
    %512 = vmatmul.mubr.f32.gmra.mxu0 %v194
    %v513 = vpop.f32.mrf.mxu0
    %v514 = vadd.f32 %v138, %v513
    %v515 = vpop.f32.mrf.mxu0
    %v516 = vadd.f32 %v142, %v515
    %517 = vdwg.mxu0
    %v518 = vld [vmem:[%s3] sm:$0xf]
    %v519 = vld [vmem:[%s4] sm:$0xf]
    %v520 = vadd.f32 %v263, %v265
    %v521 = vadd.f32 %v520, %v424
    %v522 = vadd.f32 %v521, %v426
    %523 = vadd.xlane.f32.xlu0 %v522
    %v524 = vpop.xlane.xlu0 %523
    %v525 = vadd.f32 %v269, %v271
    %v526 = vadd.f32 %v525, %v430
    %v527 = vadd.f32 %v526, %v432
    %528 = vadd.xlane.f32.xlu0 %v527
    %v529 = vpop.xlane.xlu0 %528
    %v530 = vadd.f32 %v275, %v277
    %v531 = vadd.f32 %v530, %v436
    %v532 = vadd.f32 %v531, %v438
    %533 = vadd.xlane.f32.xlu0 %v532
    %v534 = vpop.xlane.xlu0 %533
    %v535 = vadd.f32 %v281, %v283
    %v536 = vadd.f32 %v535, %v442
    %v537 = vadd.f32 %v536, %v444
    %538 = vadd.xlane.f32.xlu0 %v537
    %v539 = vpop.xlane.xlu0 %538
    %v540 = vadd.f32 %v287, %v289
    %v541 = vadd.f32 %v540, %v448
    %v542 = vadd.f32 %v541, %v450
    %543 = vadd.xlane.f32.xlu0 %v542
    %v544 = vpop.xlane.xlu0 %543
    %v545 = vadd.f32 %v293, %v295
    %v546 = vadd.f32 %v545, %v454
    %v547 = vadd.f32 %v546, %v456
    %548 = vadd.xlane.f32.xlu0 %v547
    %v549 = vpop.xlane.xlu0 %548
    %v550 = vadd.f32 %v299, %v301
    %v551 = vadd.f32 %v550, %v460
    %v552 = vadd.f32 %v551, %v462
    %553 = vadd.xlane.f32.xlu0 %v552
    %v554 = vpop.xlane.xlu0 %553
    %v555 = vadd.f32 %v305, %v307
    %v556 = vadd.f32 %v555, %v466
    %v557 = vadd.f32 %v556, %v468
    %558 = vadd.xlane.f32.xlu0 %v557
    %v559 = vpop.xlane.xlu0 %558
    %v560 = vadd.f32 %v311, %v313
    %v561 = vadd.f32 %v560, %v472
    %v562 = vadd.f32 %v561, %v474
    %563 = vadd.xlane.f32.xlu0 %v562
    %v564 = vpop.xlane.xlu0 %563
    %v565 = vadd.f32 %v317, %v319
    %v566 = vadd.f32 %v565, %v478
    %v567 = vadd.f32 %v566, %v480
    %568 = vadd.xlane.f32.xlu0 %v567
    %v569 = vpop.xlane.xlu0 %568
    %v570 = vadd.f32 %v323, %v325
    %v571 = vadd.f32 %v570, %v484
    %v572 = vadd.f32 %v571, %v486
    %573 = vadd.xlane.f32.xlu0 %v572
    %v574 = vpop.xlane.xlu0 %573
    %v575 = vadd.f32 %v329, %v331
    %v576 = vadd.f32 %v575, %v490
    %v577 = vadd.f32 %v576, %v492
    %578 = vadd.xlane.f32.xlu0 %v577
    %v579 = vpop.xlane.xlu0 %578
    %v580 = vadd.f32 %v335, %v337
    %v581 = vadd.f32 %v580, %v496
    %v582 = vadd.f32 %v581, %v498
    %583 = vadd.xlane.f32.xlu0 %v582
    %v584 = vpop.xlane.xlu0 %583
    %v585 = vadd.f32 %v341, %v343
    %v586 = vadd.f32 %v585, %v502
    %v587 = vadd.f32 %v586, %v504
    %588 = vadd.xlane.f32.xlu0 %v587
    %v589 = vpop.xlane.xlu0 %588
    %v590 = vadd.f32 %v347, %v349
    %v591 = vadd.f32 %v590, %v508
    %v592 = vadd.f32 %v591, %v510
    %593 = vadd.xlane.f32.xlu0 %v592
    %v594 = vpop.xlane.xlu0 %593
    %v595 = vadd.f32 %v353, %v355
    %v596 = vadd.f32 %v595, %v514
    %v597 = vadd.f32 %v596, %v516
    %598 = vadd.xlane.f32.xlu0 %v597
    %v599 = vpop.xlane.xlu0 %598
    %v600 = vrcp.pop 512.0
    %v601 = vmul.f32 %v524, %v600
    %v602 = vmul.f32 %v529, %v600
    %v603 = vmul.f32 %v534, %v600
    %v604 = vmul.f32 %v539, %v600
    %v605 = vmul.f32 %v544, %v600
    %v606 = vmul.f32 %v549, %v600
    %v607 = vmul.f32 %v554, %v600
    %v608 = vmul.f32 %v559, %v600
    %v609 = vmul.f32 %v564, %v600
    %v610 = vmul.f32 %v569, %v600
    %v611 = vmul.f32 %v574, %v600
    %v612 = vmul.f32 %v579, %v600
    %v613 = vmul.f32 %v584, %v600
    %v614 = vmul.f32 %v589, %v600
    %v615 = vmul.f32 %v594, %v600
    %v616 = vmul.f32 %v599, %v600
    %v617 = vmul.f32 %v263, %v263
    %v618 = vmul.f32 %v265, %v265
    %v619 = vmul.f32 %v424, %v424
    %v620 = vmul.f32 %v426, %v426
    %v621 = vmul.f32 %v269, %v269
    %v622 = vmul.f32 %v271, %v271
    %v623 = vmul.f32 %v430, %v430
    %v624 = vmul.f32 %v432, %v432
    %v625 = vmul.f32 %v275, %v275
    %v626 = vmul.f32 %v277, %v277
    %v627 = vmul.f32 %v436, %v436
    %v628 = vmul.f32 %v438, %v438
    %v629 = vmul.f32 %v281, %v281
    %v630 = vmul.f32 %v283, %v283
    %v631 = vmul.f32 %v442, %v442
    %v632 = vmul.f32 %v444, %v444
    %v633 = vmul.f32 %v287, %v287
    %v634 = vmul.f32 %v289, %v289
    %v635 = vmul.f32 %v448, %v448
    %v636 = vmul.f32 %v450, %v450
    %v637 = vmul.f32 %v293, %v293
    %v638 = vmul.f32 %v295, %v295
    %v639 = vmul.f32 %v454, %v454
    %v640 = vmul.f32 %v456, %v456
    %v641 = vmul.f32 %v299, %v299
    %v642 = vmul.f32 %v301, %v301
    %v643 = vmul.f32 %v460, %v460
    %v644 = vmul.f32 %v462, %v462
    %v645 = vmul.f32 %v305, %v305
    %v646 = vmul.f32 %v307, %v307
    %v647 = vmul.f32 %v466, %v466
    %v648 = vmul.f32 %v468, %v468
    %v649 = vmul.f32 %v311, %v311
    %v650 = vmul.f32 %v313, %v313
    %v651 = vmul.f32 %v472, %v472
    %v652 = vmul.f32 %v474, %v474
    %v653 = vmul.f32 %v317, %v317
    %v654 = vmul.f32 %v319, %v319
    %v655 = vmul.f32 %v478, %v478
    %v656 = vmul.f32 %v480, %v480
    %v657 = vmul.f32 %v323, %v323
    %v658 = vmul.f32 %v325, %v325
    %v659 = vmul.f32 %v484, %v484
    %v660 = vmul.f32 %v486, %v486
    %v661 = vmul.f32 %v329, %v329
    %v662 = vmul.f32 %v331, %v331
    %v663 = vmul.f32 %v490, %v490
    %v664 = vmul.f32 %v492, %v492
    %v665 = vmul.f32 %v335, %v335
    %v666 = vmul.f32 %v337, %v337
    %v667 = vmul.f32 %v496, %v496
    %v668 = vmul.f32 %v498, %v498
    %v669 = vmul.f32 %v341, %v341
    %v670 = vmul.f32 %v343, %v343
    %v671 = vmul.f32 %v502, %v502
    %v672 = vmul.f32 %v504, %v504
    %v673 = vmul.f32 %v347, %v347
    %v674 = vmul.f32 %v349, %v349
    %v675 = vmul.f32 %v508, %v508
    %v676 = vmul.f32 %v510, %v510
    %v677 = vmul.f32 %v353, %v353
    %v678 = vmul.f32 %v355, %v355
    %v679 = vmul.f32 %v514, %v514
    %v680 = vmul.f32 %v516, %v516
    %v681 = vadd.f32 %v617, %v618
    %v682 = vadd.f32 %v681, %v619
    %v683 = vadd.f32 %v682, %v620
    %684 = vadd.xlane.f32.xlu0 %v683
    %v685 = vpop.xlane.xlu0 %684
    %v686 = vadd.f32 %v621, %v622
    %v687 = vadd.f32 %v686, %v623
    %v688 = vadd.f32 %v687, %v624
    %689 = vadd.xlane.f32.xlu0 %v688
    %v690 = vpop.xlane.xlu0 %689
    %v691 = vadd.f32 %v625, %v626
    %v692 = vadd.f32 %v691, %v627
    %v693 = vadd.f32 %v692, %v628
    %694 = vadd.xlane.f32.xlu0 %v693
    %v695 = vpop.xlane.xlu0 %694
    %v696 = vadd.f32 %v629, %v630
    %v697 = vadd.f32 %v696, %v631
    %v698 = vadd.f32 %v697, %v632
    %699 = vadd.xlane.f32.xlu0 %v698
    %v700 = vpop.xlane.xlu0 %699
    %v701 = vadd.f32 %v633, %v634
    %v702 = vadd.f32 %v701, %v635
    %v703 = vadd.f32 %v702, %v636
    %704 = vadd.xlane.f32.xlu0 %v703
    %v705 = vpop.xlane.xlu0 %704
    %v706 = vadd.f32 %v637, %v638
    %v707 = vadd.f32 %v706, %v639
    %v708 = vadd.f32 %v707, %v640
    %709 = vadd.xlane.f32.xlu0 %v708
    %v710 = vpop.xlane.xlu0 %709
    %v711 = vadd.f32 %v641, %v642
    %v712 = vadd.f32 %v711, %v643
    %v713 = vadd.f32 %v712, %v644
    %714 = vadd.xlane.f32.xlu0 %v713
    %v715 = vpop.xlane.xlu0 %714
    %v716 = vadd.f32 %v645, %v646
    %v717 = vadd.f32 %v716, %v647
    %v718 = vadd.f32 %v717, %v648
    %719 = vadd.xlane.f32.xlu0 %v718
    %v720 = vpop.xlane.xlu0 %719
    %v721 = vadd.f32 %v649, %v650
    %v722 = vadd.f32 %v721, %v651
    %v723 = vadd.f32 %v722, %v652
    %724 = vadd.xlane.f32.xlu0 %v723
    %v725 = vpop.xlane.xlu0 %724
    %v726 = vadd.f32 %v653, %v654
    %v727 = vadd.f32 %v726, %v655
    %v728 = vadd.f32 %v727, %v656
    %729 = vadd.xlane.f32.xlu0 %v728
    %v730 = vpop.xlane.xlu0 %729
    %v731 = vadd.f32 %v657, %v658
    %v732 = vadd.f32 %v731, %v659
    %v733 = vadd.f32 %v732, %v660
    %734 = vadd.xlane.f32.xlu0 %v733
    %v735 = vpop.xlane.xlu0 %734
    %v736 = vadd.f32 %v661, %v662
    %v737 = vadd.f32 %v736, %v663
    %v738 = vadd.f32 %v737, %v664
    %739 = vadd.xlane.f32.xlu0 %v738
    %v740 = vpop.xlane.xlu0 %739
    %v741 = vadd.f32 %v665, %v666
    %v742 = vadd.f32 %v741, %v667
    %v743 = vadd.f32 %v742, %v668
    %744 = vadd.xlane.f32.xlu0 %v743
    %v745 = vpop.xlane.xlu0 %744
    %v746 = vadd.f32 %v669, %v670
    %v747 = vadd.f32 %v746, %v671
    %v748 = vadd.f32 %v747, %v672
    %749 = vadd.xlane.f32.xlu0 %v748
    %v750 = vpop.xlane.xlu0 %749
    %v751 = vadd.f32 %v673, %v674
    %v752 = vadd.f32 %v751, %v675
    %v753 = vadd.f32 %v752, %v676
    %754 = vadd.xlane.f32.xlu0 %v753
    %v755 = vpop.xlane.xlu0 %754
    %v756 = vadd.f32 %v677, %v678
    %v757 = vadd.f32 %v756, %v679
    %v758 = vadd.f32 %v757, %v680
    %759 = vadd.xlane.f32.xlu0 %v758
    %v760 = vpop.xlane.xlu0 %759
    %v761 = vmul.f32 %v685, %v600
    %v762 = vmul.f32 %v690, %v600
    %v763 = vmul.f32 %v695, %v600
    %v764 = vmul.f32 %v700, %v600
    %v765 = vmul.f32 %v705, %v600
    %v766 = vmul.f32 %v710, %v600
    %v767 = vmul.f32 %v715, %v600
    %v768 = vmul.f32 %v720, %v600
    %v769 = vmul.f32 %v725, %v600
    %v770 = vmul.f32 %v730, %v600
    %v771 = vmul.f32 %v735, %v600
    %v772 = vmul.f32 %v740, %v600
    %v773 = vmul.f32 %v745, %v600
    %v774 = vmul.f32 %v750, %v600
    %v775 = vmul.f32 %v755, %v600
    %v776 = vmul.f32 %v760, %v600
    %v777 = vmul.f32 %v601, %v601
    %v778 = vmul.f32 %v602, %v602
    %v779 = vmul.f32 %v603, %v603
    %v780 = vmul.f32 %v604, %v604
    %v781 = vmul.f32 %v605, %v605
    %v782 = vmul.f32 %v606, %v606
    %v783 = vmul.f32 %v607, %v607
    %v784 = vmul.f32 %v608, %v608
    %v785 = vmul.f32 %v609, %v609
    %v786 = vmul.f32 %v610, %v610
    %v787 = vmul.f32 %v611, %v611
    %v788 = vmul.f32 %v612, %v612
    %v789 = vmul.f32 %v613, %v613
    %v790 = vmul.f32 %v614, %v614
    %v791 = vmul.f32 %v615, %v615
    %v792 = vmul.f32 %v616, %v616
    %v793 = vsub.f32 %v761, %v777
    %v794 = vsub.f32 %v762, %v778
    %v795 = vsub.f32 %v763, %v779
    %v796 = vsub.f32 %v764, %v780
    %v797 = vsub.f32 %v765, %v781
    %v798 = vsub.f32 %v766, %v782
    %v799 = vsub.f32 %v767, %v783
    %v800 = vsub.f32 %v768, %v784
    %v801 = vsub.f32 %v769, %v785
    %v802 = vsub.f32 %v770, %v786
    %v803 = vsub.f32 %v771, %v787
    %v804 = vsub.f32 %v772, %v788
    %v805 = vsub.f32 %v773, %v789
    %v806 = vsub.f32 %v774, %v790
    %v807 = vsub.f32 %v775, %v791
    %v808 = vsub.f32 %v776, %v792
    %v809 = vsub.f32 %v263, %v601
    %v810 = vsub.f32 %v265, %v601
    %v811 = vsub.f32 %v424, %v601
    %v812 = vsub.f32 %v426, %v601
    %v813 = vsub.f32 %v269, %v602
    %v814 = vsub.f32 %v271, %v602
    %v815 = vsub.f32 %v430, %v602
    %v816 = vsub.f32 %v432, %v602
    %v817 = vsub.f32 %v275, %v603
    %v818 = vsub.f32 %v277, %v603
    %v819 = vsub.f32 %v436, %v603
    %v820 = vsub.f32 %v438, %v603
    %v821 = vsub.f32 %v281, %v604
    %v822 = vsub.f32 %v283, %v604
    %v823 = vsub.f32 %v442, %v604
    %v824 = vsub.f32 %v444, %v604
    %v825 = vsub.f32 %v287, %v605
    %v826 = vsub.f32 %v289, %v605
    %v827 = vsub.f32 %v448, %v605
    %v828 = vsub.f32 %v450, %v605
    %v829 = vsub.f32 %v293, %v606
    %v830 = vsub.f32 %v295, %v606
    %v831 = vsub.f32 %v454, %v606
    %v832 = vsub.f32 %v456, %v606
    %v833 = vsub.f32 %v299, %v607
    %v834 = vsub.f32 %v301, %v607
    %v835 = vsub.f32 %v460, %v607
    %v836 = vsub.f32 %v462, %v607
    %v837 = vsub.f32 %v305, %v608
    %v838 = vsub.f32 %v307, %v608
    %v839 = vsub.f32 %v466, %v608
    %v840 = vsub.f32 %v468, %v608
    %v841 = vsub.f32 %v311, %v609
    %v842 = vsub.f32 %v313, %v609
    %v843 = vsub.f32 %v472, %v609
    %v844 = vsub.f32 %v474, %v609
    %v845 = vsub.f32 %v317, %v610
    %v846 = vsub.f32 %v319, %v610
    %v847 = vsub.f32 %v478, %v610
    %v848 = vsub.f32 %v480, %v610
    %v849 = vsub.f32 %v323, %v611
    %v850 = vsub.f32 %v325, %v611
    %v851 = vsub.f32 %v484, %v611
    %v852 = vsub.f32 %v486, %v611
    %v853 = vsub.f32 %v329, %v612
    %v854 = vsub.f32 %v331, %v612
    %v855 = vsub.f32 %v490, %v612
    %v856 = vsub.f32 %v492, %v612
    %v857 = vsub.f32 %v335, %v613
    %v858 = vsub.f32 %v337, %v613
    %v859 = vsub.f32 %v496, %v613
    %v860 = vsub.f32 %v498, %v613
    %v861 = vsub.f32 %v341, %v614
    %v862 = vsub.f32 %v343, %v614
    %v863 = vsub.f32 %v502, %v614
    %v864 = vsub.f32 %v504, %v614
    %v865 = vsub.f32 %v347, %v615
    %v866 = vsub.f32 %v349, %v615
    %v867 = vsub.f32 %v508, %v615
    %v868 = vsub.f32 %v510, %v615
    %v869 = vsub.f32 %v353, %v616
    %v870 = vsub.f32 %v355, %v616
    %v871 = vsub.f32 %v514, %v616
    %v872 = vsub.f32 %v516, %v616
    %v873 = vadd.f32 %v793, 1e-05
    %v874 = vadd.f32 %v794, 1e-05
    %v875 = vadd.f32 %v795, 1e-05
    %v876 = vadd.f32 %v796, 1e-05
    %v877 = vadd.f32 %v797, 1e-05
    %v878 = vadd.f32 %v798, 1e-05
    %v879 = vadd.f32 %v799, 1e-05
    %v880 = vadd.f32 %v800, 1e-05
    %v881 = vadd.f32 %v801, 1e-05
    %v882 = vadd.f32 %v802, 1e-05
    %v883 = vadd.f32 %v803, 1e-05
    %v884 = vadd.f32 %v804, 1e-05
    %v885 = vadd.f32 %v805, 1e-05
    %v886 = vadd.f32 %v806, 1e-05
    %v887 = vadd.f32 %v807, 1e-05
    %v888 = vadd.f32 %v808, 1e-05
    %v889 = vrsqrt.pop %v873
    %v890 = vrsqrt.pop %v874
    %v891 = vrsqrt.pop %v875
    %v892 = vrsqrt.pop %v876
    %v893 = vrsqrt.pop %v877
    %v894 = vrsqrt.pop %v878
    %v895 = vrsqrt.pop %v879
    %v896 = vrsqrt.pop %v880
    %v897 = vrsqrt.pop %v881
    %v898 = vrsqrt.pop %v882
    %v899 = vrsqrt.pop %v883
    %v900 = vrsqrt.pop %v884
    %v901 = vrsqrt.pop %v885
    %v902 = vrsqrt.pop %v886
    %v903 = vrsqrt.pop %v887
    %v904 = vrsqrt.pop %v888
    %v905 = vmul.f32 %v809, %v889
    %v906 = vmul.f32 %v810, %v889
    %v907 = vmul.f32 %v811, %v889
    %v908 = vmul.f32 %v812, %v889
    %v909 = vmul.f32 %v813, %v890
    %v910 = vmul.f32 %v814, %v890
    %v911 = vmul.f32 %v815, %v890
    %v912 = vmul.f32 %v816, %v890
    %v913 = vmul.f32 %v817, %v891
    %v914 = vmul.f32 %v818, %v891
    %v915 = vmul.f32 %v819, %v891
    %v916 = vmul.f32 %v820, %v891
    %v917 = vmul.f32 %v821, %v892
    %v918 = vmul.f32 %v822, %v892
    %v919 = vmul.f32 %v823, %v892
    %v920 = vmul.f32 %v824, %v892
    %v921 = vmul.f32 %v825, %v893
    %v922 = vmul.f32 %v826, %v893
    %v923 = vmul.f32 %v827, %v893
    %v924 = vmul.f32 %v828, %v893
    %v925 = vmul.f32 %v829, %v894
    %v926 = vmul.f32 %v830, %v894
    %v927 = vmul.f32 %v831, %v894
    %v928 = vmul.f32 %v832, %v894
    %v929 = vmul.f32 %v833, %v895
    %v930 = vmul.f32 %v834, %v895
    %v931 = vmul.f32 %v835, %v895
    %v932 = vmul.f32 %v836, %v895
    %v933 = vmul.f32 %v837, %v896
    %v934 = vmul.f32 %v838, %v896
    %v935 = vmul.f32 %v839, %v896
    %v936 = vmul.f32 %v840, %v896
    %v937 = vmul.f32 %v841, %v897
    %v938 = vmul.f32 %v842, %v897
    %v939 = vmul.f32 %v843, %v897
    %v940 = vmul.f32 %v844, %v897
    %v941 = vmul.f32 %v845, %v898
    %v942 = vmul.f32 %v846, %v898
    %v943 = vmul.f32 %v847, %v898
    %v944 = vmul.f32 %v848, %v898
    %v945 = vmul.f32 %v849, %v899
    %v946 = vmul.f32 %v850, %v899
    %v947 = vmul.f32 %v851, %v899
    %v948 = vmul.f32 %v852, %v899
    %v949 = vmul.f32 %v853, %v900
    %v950 = vmul.f32 %v854, %v900
    %v951 = vmul.f32 %v855, %v900
    %v952 = vmul.f32 %v856, %v900
    %v953 = vmul.f32 %v857, %v901
    %v954 = vmul.f32 %v858, %v901
    %v955 = vmul.f32 %v859, %v901
    %v956 = vmul.f32 %v860, %v901
    %v957 = vmul.f32 %v861, %v902
    %v958 = vmul.f32 %v862, %v902
    %v959 = vmul.f32 %v863, %v902
    %v960 = vmul.f32 %v864, %v902
    %v961 = vmul.f32 %v865, %v903
    %v962 = vmul.f32 %v866, %v903
    %v963 = vmul.f32 %v867, %v903
    %v964 = vmul.f32 %v868, %v903
    %v965 = vmul.f32 %v869, %v904
    %v966 = vmul.f32 %v870, %v904
    %v967 = vmul.f32 %v871, %v904
    %v968 = vmul.f32 %v872, %v904
    %v970 = vlaneseq
    %v971 = vshrl.u32 %v970, 7
    %v972 = vsub.s32 0, %v971
    %v973 = vrot.slane %v518, %v972
    %v974 = vlaneseq
    %v975 = vshrl.u32 %v974, 7
    %v976 = vsub.s32 1, %v975
    %v977 = vrot.slane %v518, %v976
    %v978 = vlaneseq
    %v979 = vshrl.u32 %v978, 7
    %v980 = vsub.s32 2, %v979
    %v981 = vrot.slane %v518, %v980
    %v982 = vlaneseq
    %v983 = vshrl.u32 %v982, 7
    %v984 = vsub.s32 3, %v983
    %v985 = vrot.slane %v518, %v984
    %v990 = vmul.f32 %v905, %v973
    %v991 = vmul.f32 %v906, %v977
    %v992 = vmul.f32 %v907, %v981
    %v993 = vmul.f32 %v908, %v985
    %v994 = vmul.f32 %v909, %v973
    %v995 = vmul.f32 %v910, %v977
    %v996 = vmul.f32 %v911, %v981
    %v997 = vmul.f32 %v912, %v985
    %v998 = vmul.f32 %v913, %v973
    %v999 = vmul.f32 %v914, %v977
    %v1000 = vmul.f32 %v915, %v981
    %v1001 = vmul.f32 %v916, %v985
    %v1002 = vmul.f32 %v917, %v973
    %v1003 = vmul.f32 %v918, %v977
    %v1004 = vmul.f32 %v919, %v981
    %v1005 = vmul.f32 %v920, %v985
    %v1006 = vmul.f32 %v921, %v973
    %v1007 = vmul.f32 %v922, %v977
    %v1008 = vmul.f32 %v923, %v981
    %v1009 = vmul.f32 %v924, %v985
    %v1010 = vmul.f32 %v925, %v973
    %v1011 = vmul.f32 %v926, %v977
    %v1012 = vmul.f32 %v927, %v981
    %v1013 = vmul.f32 %v928, %v985
    %v1014 = vmul.f32 %v929, %v973
    %v1015 = vmul.f32 %v930, %v977
    %v1016 = vmul.f32 %v931, %v981
    %v1017 = vmul.f32 %v932, %v985
    %v1018 = vmul.f32 %v933, %v973
    %v1019 = vmul.f32 %v934, %v977
    %v1020 = vmul.f32 %v935, %v981
    %v1021 = vmul.f32 %v936, %v985
    %v1022 = vmul.f32 %v937, %v973
    %v1023 = vmul.f32 %v938, %v977
    %v1024 = vmul.f32 %v939, %v981
    %v1025 = vmul.f32 %v940, %v985
    %v1026 = vmul.f32 %v941, %v973
    %v1027 = vmul.f32 %v942, %v977
    %v1028 = vmul.f32 %v943, %v981
    %v1029 = vmul.f32 %v944, %v985
    %v1030 = vmul.f32 %v945, %v973
    %v1031 = vmul.f32 %v946, %v977
    %v1032 = vmul.f32 %v947, %v981
    %v1033 = vmul.f32 %v948, %v985
    %v1034 = vmul.f32 %v949, %v973
    %v1035 = vmul.f32 %v950, %v977
    %v1036 = vmul.f32 %v951, %v981
    %v1037 = vmul.f32 %v952, %v985
    %v1038 = vmul.f32 %v953, %v973
    %v1039 = vmul.f32 %v954, %v977
    %v1040 = vmul.f32 %v955, %v981
    %v1041 = vmul.f32 %v956, %v985
    %v1042 = vmul.f32 %v957, %v973
    %v1043 = vmul.f32 %v958, %v977
    %v1044 = vmul.f32 %v959, %v981
    %v1045 = vmul.f32 %v960, %v985
    %v1046 = vmul.f32 %v961, %v973
    %v1047 = vmul.f32 %v962, %v977
    %v1048 = vmul.f32 %v963, %v981
    %v1049 = vmul.f32 %v964, %v985
    %v1050 = vmul.f32 %v965, %v973
    %v1051 = vmul.f32 %v966, %v977
    %v1052 = vmul.f32 %v967, %v981
    %v1053 = vmul.f32 %v968, %v985
    %v1055 = vlaneseq
    %v1056 = vshrl.u32 %v1055, 7
    %v1057 = vsub.s32 0, %v1056
    %v1058 = vrot.slane %v519, %v1057
    %v1059 = vlaneseq
    %v1060 = vshrl.u32 %v1059, 7
    %v1061 = vsub.s32 1, %v1060
    %v1062 = vrot.slane %v519, %v1061
    %v1063 = vlaneseq
    %v1064 = vshrl.u32 %v1063, 7
    %v1065 = vsub.s32 2, %v1064
    %v1066 = vrot.slane %v519, %v1065
    %v1067 = vlaneseq
    %v1068 = vshrl.u32 %v1067, 7
    %v1069 = vsub.s32 3, %v1068
    %v1070 = vrot.slane %v519, %v1069
    %v1075 = vadd.f32 %v990, %v1058
    %v1076 = vadd.f32 %v991, %v1062
    %v1077 = vadd.f32 %v992, %v1066
    %v1078 = vadd.f32 %v993, %v1070
    %v1079 = vadd.f32 %v994, %v1058
    %v1080 = vadd.f32 %v995, %v1062
    %v1081 = vadd.f32 %v996, %v1066
    %v1082 = vadd.f32 %v997, %v1070
    %v1083 = vadd.f32 %v998, %v1058
    %v1084 = vadd.f32 %v999, %v1062
    %v1085 = vadd.f32 %v1000, %v1066
    %v1086 = vadd.f32 %v1001, %v1070
    %v1087 = vadd.f32 %v1002, %v1058
    %v1088 = vadd.f32 %v1003, %v1062
    %v1089 = vadd.f32 %v1004, %v1066
    %v1090 = vadd.f32 %v1005, %v1070
    %v1091 = vadd.f32 %v1006, %v1058
    %v1092 = vadd.f32 %v1007, %v1062
    %v1093 = vadd.f32 %v1008, %v1066
    %v1094 = vadd.f32 %v1009, %v1070
    %v1095 = vadd.f32 %v1010, %v1058
    %v1096 = vadd.f32 %v1011, %v1062
    %v1097 = vadd.f32 %v1012, %v1066
    %v1098 = vadd.f32 %v1013, %v1070
    %v1099 = vadd.f32 %v1014, %v1058
    %v1100 = vadd.f32 %v1015, %v1062
    %v1101 = vadd.f32 %v1016, %v1066
    %v1102 = vadd.f32 %v1017, %v1070
    %v1103 = vadd.f32 %v1018, %v1058
    %v1104 = vadd.f32 %v1019, %v1062
    %v1105 = vadd.f32 %v1020, %v1066
    %v1106 = vadd.f32 %v1021, %v1070
    %v1107 = vadd.f32 %v1022, %v1058
    %v1108 = vadd.f32 %v1023, %v1062
    %v1109 = vadd.f32 %v1024, %v1066
    %v1110 = vadd.f32 %v1025, %v1070
    %v1111 = vadd.f32 %v1026, %v1058
    %v1112 = vadd.f32 %v1027, %v1062
    %v1113 = vadd.f32 %v1028, %v1066
    %v1114 = vadd.f32 %v1029, %v1070
    %v1115 = vadd.f32 %v1030, %v1058
    %v1116 = vadd.f32 %v1031, %v1062
    %v1117 = vadd.f32 %v1032, %v1066
    %v1118 = vadd.f32 %v1033, %v1070
    %v1119 = vadd.f32 %v1034, %v1058
    %v1120 = vadd.f32 %v1035, %v1062
    %v1121 = vadd.f32 %v1036, %v1066
    %v1122 = vadd.f32 %v1037, %v1070
    %v1123 = vadd.f32 %v1038, %v1058
    %v1124 = vadd.f32 %v1039, %v1062
    %v1125 = vadd.f32 %v1040, %v1066
    %v1126 = vadd.f32 %v1041, %v1070
    %v1127 = vadd.f32 %v1042, %v1058
    %v1128 = vadd.f32 %v1043, %v1062
    %v1129 = vadd.f32 %v1044, %v1066
    %v1130 = vadd.f32 %v1045, %v1070
    %v1131 = vadd.f32 %v1046, %v1058
    %v1132 = vadd.f32 %v1047, %v1062
    %v1133 = vadd.f32 %v1048, %v1066
    %v1134 = vadd.f32 %v1049, %v1070
    %v1135 = vadd.f32 %v1050, %v1058
    %v1136 = vadd.f32 %v1051, %v1062
    %v1137 = vadd.f32 %v1052, %v1066
    %v1138 = vadd.f32 %v1053, %v1070
    %v1139 = vmul.f32 %v1075, 0.01
    %v1140 = vmul.f32 %v1076, 0.01
    %v1141 = vmul.f32 %v1077, 0.01
    %v1142 = vmul.f32 %v1078, 0.01
    %v1143 = vmul.f32 %v1079, 0.01
    %v1144 = vmul.f32 %v1080, 0.01
    %v1145 = vmul.f32 %v1081, 0.01
    %v1146 = vmul.f32 %v1082, 0.01
    %v1147 = vmul.f32 %v1083, 0.01
    %v1148 = vmul.f32 %v1084, 0.01
    %v1149 = vmul.f32 %v1085, 0.01
    %v1150 = vmul.f32 %v1086, 0.01
    %v1151 = vmul.f32 %v1087, 0.01
    %v1152 = vmul.f32 %v1088, 0.01
    %v1153 = vmul.f32 %v1089, 0.01
    %v1154 = vmul.f32 %v1090, 0.01
    %v1155 = vmul.f32 %v1091, 0.01
    %v1156 = vmul.f32 %v1092, 0.01
    %v1157 = vmul.f32 %v1093, 0.01
    %v1158 = vmul.f32 %v1094, 0.01
    %v1159 = vmul.f32 %v1095, 0.01
    %v1160 = vmul.f32 %v1096, 0.01
    %v1161 = vmul.f32 %v1097, 0.01
    %v1162 = vmul.f32 %v1098, 0.01
    %v1163 = vmul.f32 %v1099, 0.01
    %v1164 = vmul.f32 %v1100, 0.01
    %v1165 = vmul.f32 %v1101, 0.01
    %v1166 = vmul.f32 %v1102, 0.01
    %v1167 = vmul.f32 %v1103, 0.01
    %v1168 = vmul.f32 %v1104, 0.01
    %v1169 = vmul.f32 %v1105, 0.01
    %v1170 = vmul.f32 %v1106, 0.01
    %v1171 = vmul.f32 %v1107, 0.01
    %v1172 = vmul.f32 %v1108, 0.01
    %v1173 = vmul.f32 %v1109, 0.01
    %v1174 = vmul.f32 %v1110, 0.01
    %v1175 = vmul.f32 %v1111, 0.01
    %v1176 = vmul.f32 %v1112, 0.01
    %v1177 = vmul.f32 %v1113, 0.01
    %v1178 = vmul.f32 %v1114, 0.01
    %v1179 = vmul.f32 %v1115, 0.01
    %v1180 = vmul.f32 %v1116, 0.01
    %v1181 = vmul.f32 %v1117, 0.01
    %v1182 = vmul.f32 %v1118, 0.01
    %v1183 = vmul.f32 %v1119, 0.01
    %v1184 = vmul.f32 %v1120, 0.01
    %v1185 = vmul.f32 %v1121, 0.01
    %v1186 = vmul.f32 %v1122, 0.01
    %v1187 = vmul.f32 %v1123, 0.01
    %v1188 = vmul.f32 %v1124, 0.01
    %v1189 = vmul.f32 %v1125, 0.01
    %v1190 = vmul.f32 %v1126, 0.01
    %v1191 = vmul.f32 %v1127, 0.01
    %v1192 = vmul.f32 %v1128, 0.01
    %v1193 = vmul.f32 %v1129, 0.01
    %v1194 = vmul.f32 %v1130, 0.01
    %v1195 = vmul.f32 %v1131, 0.01
    %v1196 = vmul.f32 %v1132, 0.01
    %v1197 = vmul.f32 %v1133, 0.01
    %v1198 = vmul.f32 %v1134, 0.01
    %v1199 = vmul.f32 %v1135, 0.01
    %v1200 = vmul.f32 %v1136, 0.01
    %v1201 = vmul.f32 %v1137, 0.01
    %v1202 = vmul.f32 %v1138, 0.01
    %v1203 = vmax.f32 %v1075, %v1139
    %v1204 = vmax.f32 %v1076, %v1140
    %v1205 = vmax.f32 %v1077, %v1141
    %v1206 = vmax.f32 %v1078, %v1142
    %v1207 = vmax.f32 %v1079, %v1143
    %v1208 = vmax.f32 %v1080, %v1144
    %v1209 = vmax.f32 %v1081, %v1145
    %v1210 = vmax.f32 %v1082, %v1146
    %v1211 = vmax.f32 %v1083, %v1147
    %v1212 = vmax.f32 %v1084, %v1148
    %v1213 = vmax.f32 %v1085, %v1149
    %v1214 = vmax.f32 %v1086, %v1150
    %v1215 = vmax.f32 %v1087, %v1151
    %v1216 = vmax.f32 %v1088, %v1152
    %v1217 = vmax.f32 %v1089, %v1153
    %v1218 = vmax.f32 %v1090, %v1154
    %v1219 = vmax.f32 %v1091, %v1155
    %v1220 = vmax.f32 %v1092, %v1156
    %v1221 = vmax.f32 %v1093, %v1157
    %v1222 = vmax.f32 %v1094, %v1158
    %v1223 = vmax.f32 %v1095, %v1159
    %v1224 = vmax.f32 %v1096, %v1160
    %v1225 = vmax.f32 %v1097, %v1161
    %v1226 = vmax.f32 %v1098, %v1162
    %v1227 = vmax.f32 %v1099, %v1163
    %v1228 = vmax.f32 %v1100, %v1164
    %v1229 = vmax.f32 %v1101, %v1165
    %v1230 = vmax.f32 %v1102, %v1166
    %v1231 = vmax.f32 %v1103, %v1167
    %v1232 = vmax.f32 %v1104, %v1168
    %v1233 = vmax.f32 %v1105, %v1169
    %v1234 = vmax.f32 %v1106, %v1170
    %v1235 = vmax.f32 %v1107, %v1171
    %v1236 = vmax.f32 %v1108, %v1172
    %v1237 = vmax.f32 %v1109, %v1173
    %v1238 = vmax.f32 %v1110, %v1174
    %v1239 = vmax.f32 %v1111, %v1175
    %v1240 = vmax.f32 %v1112, %v1176
    %v1241 = vmax.f32 %v1113, %v1177
    %v1242 = vmax.f32 %v1114, %v1178
    %v1243 = vmax.f32 %v1115, %v1179
    %v1244 = vmax.f32 %v1116, %v1180
    %v1245 = vmax.f32 %v1117, %v1181
    %v1246 = vmax.f32 %v1118, %v1182
    %v1247 = vmax.f32 %v1119, %v1183
    %v1248 = vmax.f32 %v1120, %v1184
    %v1249 = vmax.f32 %v1121, %v1185
    %v1250 = vmax.f32 %v1122, %v1186
    %v1251 = vmax.f32 %v1123, %v1187
    %v1252 = vmax.f32 %v1124, %v1188
    %v1253 = vmax.f32 %v1125, %v1189
    %v1254 = vmax.f32 %v1126, %v1190
    %v1255 = vmax.f32 %v1127, %v1191
    %v1256 = vmax.f32 %v1128, %v1192
    %v1257 = vmax.f32 %v1129, %v1193
    %v1258 = vmax.f32 %v1130, %v1194
    %v1259 = vmax.f32 %v1131, %v1195
    %v1260 = vmax.f32 %v1132, %v1196
    %v1261 = vmax.f32 %v1133, %v1197
    %v1262 = vmax.f32 %v1134, %v1198
    %v1263 = vmax.f32 %v1135, %v1199
    %v1264 = vmax.f32 %v1136, %v1200
    %v1265 = vmax.f32 %v1137, %v1201
    %v1266 = vmax.f32 %v1138, %v1202
    %v1267 = vld [vmem:[#allocation6] sm:$0xff]
    %v1268 = vld [vmem:[#allocation6 + $0x8] sm:$0xff]
    %v1269 = vld [vmem:[#allocation6 + $0x10] sm:$0xff]
    %v1270 = vld [vmem:[#allocation6 + $0x18] sm:$0xff]
    %v1271 = vld [vmem:[#allocation6 + $0x20] sm:$0xff]
    %v1272 = vld [vmem:[#allocation6 + $0x28] sm:$0xff]
    %v1273 = vld [vmem:[#allocation6 + $0x30] sm:$0xff]
    %v1274 = vld [vmem:[#allocation6 + $0x38] sm:$0xff]
    %v1275 = vld [vmem:[#allocation6 + $0x40] sm:$0xff]
    %v1276 = vld [vmem:[#allocation6 + $0x48] sm:$0xff]
    %v1277 = vld [vmem:[#allocation6 + $0x50] sm:$0xff]
    %v1278 = vld [vmem:[#allocation6 + $0x58] sm:$0xff]
    %v1279 = vld [vmem:[#allocation6 + $0x60] sm:$0xff]
    %v1280 = vld [vmem:[#allocation6 + $0x68] sm:$0xff]
    %v1281 = vld [vmem:[#allocation6 + $0x70] sm:$0xff]
    %v1282 = vld [vmem:[#allocation6 + $0x78] sm:$0xff]
    %v1283 = vld [vmem:[#allocation6 + $0x80] sm:$0xff]
    %v1284 = vld [vmem:[#allocation6 + $0x88] sm:$0xff]
    %v1285 = vld [vmem:[#allocation6 + $0x90] sm:$0xff]
    %v1286 = vld [vmem:[#allocation6 + $0x98] sm:$0xff]
    %v1287 = vld [vmem:[#allocation6 + $0xa0] sm:$0xff]
    %v1288 = vld [vmem:[#allocation6 + $0xa8] sm:$0xff]
    %v1289 = vld [vmem:[#allocation6 + $0xb0] sm:$0xff]
    %v1290 = vld [vmem:[#allocation6 + $0xb8] sm:$0xff]
    %v1291 = vld [vmem:[#allocation6 + $0xc0] sm:$0xff]
    %v1292 = vld [vmem:[#allocation6 + $0xc8] sm:$0xff]
    %v1293 = vld [vmem:[#allocation6 + $0xd0] sm:$0xff]
    %v1294 = vld [vmem:[#allocation6 + $0xd8] sm:$0xff]
    %v1295 = vld [vmem:[#allocation6 + $0xe0] sm:$0xff]
    %v1296 = vld [vmem:[#allocation6 + $0xe8] sm:$0xff]
    %v1297 = vld [vmem:[#allocation6 + $0xf0] sm:$0xff]
    %v1298 = vld [vmem:[#allocation6 + $0xf8] sm:$0xff]
    %v1299 = vld [vmem:[#allocation6 + $0x100] sm:$0xff]
    %v1300 = vld [vmem:[#allocation6 + $0x108] sm:$0xff]
    %v1301 = vld [vmem:[#allocation6 + $0x110] sm:$0xff]
    %v1302 = vld [vmem:[#allocation6 + $0x118] sm:$0xff]
    %v1303 = vld [vmem:[#allocation6 + $0x120] sm:$0xff]
    %v1304 = vld [vmem:[#allocation6 + $0x128] sm:$0xff]
    %v1305 = vld [vmem:[#allocation6 + $0x130] sm:$0xff]
    %v1306 = vld [vmem:[#allocation6 + $0x138] sm:$0xff]
    %v1307 = vld [vmem:[#allocation6 + $0x140] sm:$0xff]
    %v1308 = vld [vmem:[#allocation6 + $0x148] sm:$0xff]
    %v1309 = vld [vmem:[#allocation6 + $0x150] sm:$0xff]
    %v1310 = vld [vmem:[#allocation6 + $0x158] sm:$0xff]
    %v1311 = vld [vmem:[#allocation6 + $0x160] sm:$0xff]
    %v1312 = vld [vmem:[#allocation6 + $0x168] sm:$0xff]
    %v1313 = vld [vmem:[#allocation6 + $0x170] sm:$0xff]
    %v1314 = vld [vmem:[#allocation6 + $0x178] sm:$0xff]
    %v1315 = vld [vmem:[#allocation6 + $0x180] sm:$0xff]
    %v1316 = vld [vmem:[#allocation6 + $0x188] sm:$0xff]
    %v1317 = vld [vmem:[#allocation6 + $0x190] sm:$0xff]
    %v1318 = vld [vmem:[#allocation6 + $0x198] sm:$0xff]
    %v1319 = vld [vmem:[#allocation6 + $0x1a0] sm:$0xff]
    %v1320 = vld [vmem:[#allocation6 + $0x1a8] sm:$0xff]
    %v1321 = vld [vmem:[#allocation6 + $0x1b0] sm:$0xff]
    %v1322 = vld [vmem:[#allocation6 + $0x1b8] sm:$0xff]
    %v1323 = vld [vmem:[#allocation6 + $0x1c0] sm:$0xff]
    %v1324 = vld [vmem:[#allocation6 + $0x1c8] sm:$0xff]
    %v1325 = vld [vmem:[#allocation6 + $0x1d0] sm:$0xff]
    %v1326 = vld [vmem:[#allocation6 + $0x1d8] sm:$0xff]
    %v1327 = vld [vmem:[#allocation6 + $0x1e0] sm:$0xff]
    %v1328 = vld [vmem:[#allocation6 + $0x1e8] sm:$0xff]
    %v1329 = vld [vmem:[#allocation6 + $0x1f0] sm:$0xff]
    %v1330 = vld [vmem:[#allocation6 + $0x1f8] sm:$0xff]
    %v1331 = vld [vmem:[#allocation6 + $0x200] sm:$0xff]
    %v1332 = vld [vmem:[#allocation6 + $0x208] sm:$0xff]
    %v1333 = vld [vmem:[#allocation6 + $0x210] sm:$0xff]
    %v1334 = vld [vmem:[#allocation6 + $0x218] sm:$0xff]
    %v1335 = vld [vmem:[#allocation6 + $0x220] sm:$0xff]
    %v1336 = vld [vmem:[#allocation6 + $0x228] sm:$0xff]
    %v1337 = vld [vmem:[#allocation6 + $0x230] sm:$0xff]
    %v1338 = vld [vmem:[#allocation6 + $0x238] sm:$0xff]
    %v1339 = vld [vmem:[#allocation6 + $0x240] sm:$0xff]
    %v1340 = vld [vmem:[#allocation6 + $0x248] sm:$0xff]
    %v1341 = vld [vmem:[#allocation6 + $0x250] sm:$0xff]
    %v1342 = vld [vmem:[#allocation6 + $0x258] sm:$0xff]
    %v1343 = vld [vmem:[#allocation6 + $0x260] sm:$0xff]
    %v1344 = vld [vmem:[#allocation6 + $0x268] sm:$0xff]
    %v1345 = vld [vmem:[#allocation6 + $0x270] sm:$0xff]
    %v1346 = vld [vmem:[#allocation6 + $0x278] sm:$0xff]
    %v1347 = vld [vmem:[#allocation6 + $0x280] sm:$0xff]
    %v1348 = vld [vmem:[#allocation6 + $0x288] sm:$0xff]
    %v1349 = vld [vmem:[#allocation6 + $0x290] sm:$0xff]
    %v1350 = vld [vmem:[#allocation6 + $0x298] sm:$0xff]
    %v1351 = vld [vmem:[#allocation6 + $0x2a0] sm:$0xff]
    %v1352 = vld [vmem:[#allocation6 + $0x2a8] sm:$0xff]
    %v1353 = vld [vmem:[#allocation6 + $0x2b0] sm:$0xff]
    %v1354 = vld [vmem:[#allocation6 + $0x2b8] sm:$0xff]
    %v1355 = vld [vmem:[#allocation6 + $0x2c0] sm:$0xff]
    %v1356 = vld [vmem:[#allocation6 + $0x2c8] sm:$0xff]
    %v1357 = vld [vmem:[#allocation6 + $0x2d0] sm:$0xff]
    %v1358 = vld [vmem:[#allocation6 + $0x2d8] sm:$0xff]
    %v1359 = vld [vmem:[#allocation6 + $0x2e0] sm:$0xff]
    %v1360 = vld [vmem:[#allocation6 + $0x2e8] sm:$0xff]
    %v1361 = vld [vmem:[#allocation6 + $0x2f0] sm:$0xff]
    %v1362 = vld [vmem:[#allocation6 + $0x2f8] sm:$0xff]
    %v1363 = vld [vmem:[#allocation6 + $0x300] sm:$0xff]
    %v1364 = vld [vmem:[#allocation6 + $0x308] sm:$0xff]
    %v1365 = vld [vmem:[#allocation6 + $0x310] sm:$0xff]
    %v1366 = vld [vmem:[#allocation6 + $0x318] sm:$0xff]
    %v1367 = vld [vmem:[#allocation6 + $0x320] sm:$0xff]
    %v1368 = vld [vmem:[#allocation6 + $0x328] sm:$0xff]
    %v1369 = vld [vmem:[#allocation6 + $0x330] sm:$0xff]
    %v1370 = vld [vmem:[#allocation6 + $0x338] sm:$0xff]
    %v1371 = vld [vmem:[#allocation6 + $0x340] sm:$0xff]
    %v1372 = vld [vmem:[#allocation6 + $0x348] sm:$0xff]
    %v1373 = vld [vmem:[#allocation6 + $0x350] sm:$0xff]
    %v1374 = vld [vmem:[#allocation6 + $0x358] sm:$0xff]
    %v1375 = vld [vmem:[#allocation6 + $0x360] sm:$0xff]
    %v1376 = vld [vmem:[#allocation6 + $0x368] sm:$0xff]
    %v1377 = vld [vmem:[#allocation6 + $0x370] sm:$0xff]
    %v1378 = vld [vmem:[#allocation6 + $0x378] sm:$0xff]
    %v1379 = vld [vmem:[#allocation6 + $0x380] sm:$0xff]
    %v1380 = vld [vmem:[#allocation6 + $0x388] sm:$0xff]
    %v1381 = vld [vmem:[#allocation6 + $0x390] sm:$0xff]
    %v1382 = vld [vmem:[#allocation6 + $0x398] sm:$0xff]
    %v1383 = vld [vmem:[#allocation6 + $0x3a0] sm:$0xff]
    %v1384 = vld [vmem:[#allocation6 + $0x3a8] sm:$0xff]
    %v1385 = vld [vmem:[#allocation6 + $0x3b0] sm:$0xff]
    %v1386 = vld [vmem:[#allocation6 + $0x3b8] sm:$0xff]
    %v1387 = vld [vmem:[#allocation6 + $0x3c0] sm:$0xff]
    %v1388 = vld [vmem:[#allocation6 + $0x3c8] sm:$0xff]
    %v1389 = vld [vmem:[#allocation6 + $0x3d0] sm:$0xff]
    %v1390 = vld [vmem:[#allocation6 + $0x3d8] sm:$0xff]
    %v1391 = vld [vmem:[#allocation6 + $0x3e0] sm:$0xff]
    %v1392 = vld [vmem:[#allocation6 + $0x3e8] sm:$0xff]
    %v1393 = vld [vmem:[#allocation6 + $0x3f0] sm:$0xff]
    %v1394 = vld [vmem:[#allocation6 + $0x3f8] sm:$0xff]
    %v1395 = vld [vmem:[%s6] sm:$0x3]
    %v1397 = vlaneseq
    %v1398 = vshrl.u32 %v1397, 7
    %v1399 = vsub.s32 0, %v1398
    %v1400 = vrot.slane %v1395, %v1399
    %v1401 = vlaneseq
    %v1402 = vshrl.u32 %v1401, 7
    %v1403 = vsub.s32 1, %v1402
    %v1404 = vrot.slane %v1395, %v1403
    %1407 = vmatprep.subr.mxu0 %v1298
    %1408 = vmatpush1.msra.mxu0 %v1297
    %1409 = vmatprep.subr.mxu0 %v1296
    %1410 = vmatpush1.msra.mxu0 %v1295
    %1411 = vmatprep.subr.mxu0 %v1294
    %1412 = vmatpush1.msra.mxu0 %v1293
    %1413 = vmatprep.subr.mxu0 %v1292
    %1414 = vmatpush1.msra.mxu0 %v1291
    %1415 = vmatprep.subr.mxu0 %v1290
    %1416 = vmatpush1.msra.mxu0 %v1289
    %1417 = vmatprep.subr.mxu0 %v1288
    %1418 = vmatpush1.msra.mxu0 %v1287
    %1419 = vmatprep.subr.mxu0 %v1286
    %1420 = vmatpush1.msra.mxu0 %v1285
    %1421 = vmatprep.subr.mxu0 %v1284
    %1422 = vmatpush1.msra.mxu0 %v1283
    %1423 = vmatprep.subr.mxu0 %v1282
    %1424 = vmatpush1.msra.mxu0 %v1281
    %1425 = vmatprep.subr.mxu0 %v1280
    %1426 = vmatpush1.msra.mxu0 %v1279
    %1427 = vmatprep.subr.mxu0 %v1278
    %1428 = vmatpush1.msra.mxu0 %v1277
    %1429 = vmatprep.subr.mxu0 %v1276
    %1430 = vmatpush1.msra.mxu0 %v1275
    %1431 = vmatprep.subr.mxu0 %v1274
    %1432 = vmatpush1.msra.mxu0 %v1273
    %1433 = vmatprep.subr.mxu0 %v1272
    %1434 = vmatpush1.msra.mxu0 %v1271
    %1435 = vmatprep.subr.mxu0 %v1270
    %1436 = vmatpush1.msra.mxu0 %v1269
    %1437 = vmatprep.subr.mxu0 %v1268
    %1438 = vmatpush1.msra.mxu0 %v1267
    %1439 = vmatprep.subr.mxu0 %v1330
    %1440 = vmatpush2.msra.mxu0 %v1329
    %1441 = vmatprep.subr.mxu0 %v1328
    %1442 = vmatpush2.msra.mxu0 %v1327
    %1443 = vmatprep.subr.mxu0 %v1326
    %1444 = vmatpush2.msra.mxu0 %v1325
    %1445 = vmatprep.subr.mxu0 %v1324
    %1446 = vmatpush2.msra.mxu0 %v1323
    %1447 = vmatprep.subr.mxu0 %v1322
    %1448 = vmatpush2.msra.mxu0 %v1321
    %1449 = vmatprep.subr.mxu0 %v1320
    %1450 = vmatpush2.msra.mxu0 %v1319
    %1451 = vmatprep.subr.mxu0 %v1318
    %1452 = vmatpush2.msra.mxu0 %v1317
    %1453 = vmatprep.subr.mxu0 %v1316
    %1454 = vmatpush2.msra.mxu0 %v1315
    %1455 = vmatprep.subr.mxu0 %v1314
    %1456 = vmatpush2.msra.mxu0 %v1313
    %1457 = vmatprep.subr.mxu0 %v1312
    %1458 = vmatpush2.msra.mxu0 %v1311
    %1459 = vmatprep.subr.mxu0 %v1310
    %1460 = vmatpush2.msra.mxu0 %v1309
    %1461 = vmatprep.subr.mxu0 %v1308
    %1462 = vmatpush2.msra.mxu0 %v1307
    %1463 = vmatprep.subr.mxu0 %v1306
    %1464 = vmatpush2.msra.mxu0 %v1305
    %1465 = vmatprep.subr.mxu0 %v1304
    %1466 = vmatpush2.msra.mxu0 %v1303
    %1467 = vmatprep.subr.mxu0 %v1302
    %1468 = vmatpush2.msra.mxu0 %v1301
    %1469 = vmatprep.subr.mxu0 %v1300
    %1470 = vmatpush2.msra.mxu0 %v1299
    %1471 = vmatprep.mubr.f32.mxu0 %v1204
    %1472 = vmatmul.mubr.f32.gmra.mxu0 %v1203
    %v1473 = vpop.f32.mrf.mxu0
    %v1474 = vadd.f32 %v1400, %v1473
    %v1475 = vpop.f32.mrf.mxu0
    %v1476 = vadd.f32 %v1404, %v1475
    %1477 = vmatprep.mubr.f32.mxu0 %v1208
    %1478 = vmatmul.mubr.f32.gmra.mxu0 %v1207
    %v1479 = vpop.f32.mrf.mxu0
    %v1480 = vadd.f32 %v1400, %v1479
    %v1481 = vpop.f32.mrf.mxu0
    %v1482 = vadd.f32 %v1404, %v1481
    %1483 = vmatprep.mubr.f32.mxu0 %v1212
    %1484 = vmatmul.mubr.f32.gmra.mxu0 %v1211
    %v1485 = vpop.f32.mrf.mxu0
    %v1486 = vadd.f32 %v1400, %v1485
    %v1487 = vpop.f32.mrf.mxu0
    %v1488 = vadd.f32 %v1404, %v1487
    %1489 = vmatprep.mubr.f32.mxu0 %v1216
    %1490 = vmatmul.mubr.f32.gmra.mxu0 %v1215
    %v1491 = vpop.f32.mrf.mxu0
    %v1492 = vadd.f32 %v1400, %v1491
    %v1493 = vpop.f32.mrf.mxu0
    %v1494 = vadd.f32 %v1404, %v1493
    %1495 = vmatprep.mubr.f32.mxu0 %v1220
    %1496 = vmatmul.mubr.f32.gmra.mxu0 %v1219
    %v1497 = vpop.f32.mrf.mxu0
    %v1498 = vadd.f32 %v1400, %v1497
    %v1499 = vpop.f32.mrf.mxu0
    %v1500 = vadd.f32 %v1404, %v1499
    %1501 = vmatprep.mubr.f32.mxu0 %v1224
    %1502 = vmatmul.mubr.f32.gmra.mxu0 %v1223
    %v1503 = vpop.f32.mrf.mxu0
    %v1504 = vadd.f32 %v1400, %v1503
    %v1505 = vpop.f32.mrf.mxu0
    %v1506 = vadd.f32 %v1404, %v1505
    %1507 = vmatprep.mubr.f32.mxu0 %v1228
    %1508 = vmatmul.mubr.f32.gmra.mxu0 %v1227
    %v1509 = vpop.f32.mrf.mxu0
    %v1510 = vadd.f32 %v1400, %v1509
    %v1511 = vpop.f32.mrf.mxu0
    %v1512 = vadd.f32 %v1404, %v1511
    %1513 = vmatprep.mubr.f32.mxu0 %v1232
    %1514 = vmatmul.mubr.f32.gmra.mxu0 %v1231
    %v1515 = vpop.f32.mrf.mxu0
    %v1516 = vadd.f32 %v1400, %v1515
    %v1517 = vpop.f32.mrf.mxu0
    %v1518 = vadd.f32 %v1404, %v1517
    %1519 = vmatprep.mubr.f32.mxu0 %v1236
    %1520 = vmatmul.mubr.f32.gmra.mxu0 %v1235
    %v1521 = vpop.f32.mrf.mxu0
    %v1522 = vadd.f32 %v1400, %v1521
    %v1523 = vpop.f32.mrf.mxu0
    %v1524 = vadd.f32 %v1404, %v1523
    %1525 = vmatprep.mubr.f32.mxu0 %v1240
    %1526 = vmatmul.mubr.f32.gmra.mxu0 %v1239
    %v1527 = vpop.f32.mrf.mxu0
    %v1528 = vadd.f32 %v1400, %v1527
    %v1529 = vpop.f32.mrf.mxu0
    %v1530 = vadd.f32 %v1404, %v1529
    %1531 = vmatprep.mubr.f32.mxu0 %v1244
    %1532 = vmatmul.mubr.f32.gmra.mxu0 %v1243
    %v1533 = vpop.f32.mrf.mxu0
    %v1534 = vadd.f32 %v1400, %v1533
    %v1535 = vpop.f32.mrf.mxu0
    %v1536 = vadd.f32 %v1404, %v1535
    %1537 = vmatprep.mubr.f32.mxu0 %v1248
    %1538 = vmatmul.mubr.f32.gmra.mxu0 %v1247
    %v1539 = vpop.f32.mrf.mxu0
    %v1540 = vadd.f32 %v1400, %v1539
    %v1541 = vpop.f32.mrf.mxu0
    %v1542 = vadd.f32 %v1404, %v1541
    %1543 = vmatprep.mubr.f32.mxu0 %v1252
    %1544 = vmatmul.mubr.f32.gmra.mxu0 %v1251
    %v1545 = vpop.f32.mrf.mxu0
    %v1546 = vadd.f32 %v1400, %v1545
    %v1547 = vpop.f32.mrf.mxu0
    %v1548 = vadd.f32 %v1404, %v1547
    %1549 = vmatprep.mubr.f32.mxu0 %v1256
    %1550 = vmatmul.mubr.f32.gmra.mxu0 %v1255
    %v1551 = vpop.f32.mrf.mxu0
    %v1552 = vadd.f32 %v1400, %v1551
    %v1553 = vpop.f32.mrf.mxu0
    %v1554 = vadd.f32 %v1404, %v1553
    %1555 = vmatprep.mubr.f32.mxu0 %v1260
    %1556 = vmatmul.mubr.f32.gmra.mxu0 %v1259
    %v1557 = vpop.f32.mrf.mxu0
    %v1558 = vadd.f32 %v1400, %v1557
    %v1559 = vpop.f32.mrf.mxu0
    %v1560 = vadd.f32 %v1404, %v1559
    %1561 = vmatprep.mubr.f32.mxu0 %v1264
    %1562 = vmatmul.mubr.f32.gmra.mxu0 %v1263
    %v1563 = vpop.f32.mrf.mxu0
    %v1564 = vadd.f32 %v1400, %v1563
    %v1565 = vpop.f32.mrf.mxu0
    %v1566 = vadd.f32 %v1404, %v1565
    %1567 = vdwg.mxu0
    %1568 = vmatprep.subr.mxu0 %v1362
    %1569 = vmatpush1.msra.mxu0 %v1361
    %1570 = vmatprep.subr.mxu0 %v1360
    %1571 = vmatpush1.msra.mxu0 %v1359
    %1572 = vmatprep.subr.mxu0 %v1358
    %1573 = vmatpush1.msra.mxu0 %v1357
    %1574 = vmatprep.subr.mxu0 %v1356
    %1575 = vmatpush1.msra.mxu0 %v1355
    %1576 = vmatprep.subr.mxu0 %v1354
    %1577 = vmatpush1.msra.mxu0 %v1353
    %1578 = vmatprep.subr.mxu0 %v1352
    %1579 = vmatpush1.msra.mxu0 %v1351
    %1580 = vmatprep.subr.mxu0 %v1350
    %1581 = vmatpush1.msra.mxu0 %v1349
    %1582 = vmatprep.subr.mxu0 %v1348
    %1583 = vmatpush1.msra.mxu0 %v1347
    %1584 = vmatprep.subr.mxu0 %v1346
    %1585 = vmatpush1.msra.mxu0 %v1345
    %1586 = vmatprep.subr.mxu0 %v1344
    %1587 = vmatpush1.msra.mxu0 %v1343
    %1588 = vmatprep.subr.mxu0 %v1342
    %1589 = vmatpush1.msra.mxu0 %v1341
    %1590 = vmatprep.subr.mxu0 %v1340
    %1591 = vmatpush1.msra.mxu0 %v1339
    %1592 = vmatprep.subr.mxu0 %v1338
    %1593 = vmatpush1.msra.mxu0 %v1337
    %1594 = vmatprep.subr.mxu0 %v1336
    %1595 = vmatpush1.msra.mxu0 %v1335
    %1596 = vmatprep.subr.mxu0 %v1334
    %1597 = vmatpush1.msra.mxu0 %v1333
    %1598 = vmatprep.subr.mxu0 %v1332
    %1599 = vmatpush1.msra.mxu0 %v1331
    %1600 = vmatprep.subr.mxu0 %v1394
    %1601 = vmatpush2.msra.mxu0 %v1393
    %1602 = vmatprep.subr.mxu0 %v1392
    %1603 = vmatpush2.msra.mxu0 %v1391
    %1604 = vmatprep.subr.mxu0 %v1390
    %1605 = vmatpush2.msra.mxu0 %v1389
    %1606 = vmatprep.subr.mxu0 %v1388
    %1607 = vmatpush2.msra.mxu0 %v1387
    %1608 = vmatprep.subr.mxu0 %v1386
    %1609 = vmatpush2.msra.mxu0 %v1385
    %1610 = vmatprep.subr.mxu0 %v1384
    %1611 = vmatpush2.msra.mxu0 %v1383
    %1612 = vmatprep.subr.mxu0 %v1382
    %1613 = vmatpush2.msra.mxu0 %v1381
    %1614 = vmatprep.subr.mxu0 %v1380
    %1615 = vmatpush2.msra.mxu0 %v1379
    %1616 = vmatprep.subr.mxu0 %v1378
    %1617 = vmatpush2.msra.mxu0 %v1377
    %1618 = vmatprep.subr.mxu0 %v1376
    %1619 = vmatpush2.msra.mxu0 %v1375
    %1620 = vmatprep.subr.mxu0 %v1374
    %1621 = vmatpush2.msra.mxu0 %v1373
    %1622 = vmatprep.subr.mxu0 %v1372
    %1623 = vmatpush2.msra.mxu0 %v1371
    %1624 = vmatprep.subr.mxu0 %v1370
    %1625 = vmatpush2.msra.mxu0 %v1369
    %1626 = vmatprep.subr.mxu0 %v1368
    %1627 = vmatpush2.msra.mxu0 %v1367
    %1628 = vmatprep.subr.mxu0 %v1366
    %1629 = vmatpush2.msra.mxu0 %v1365
    %1630 = vmatprep.subr.mxu0 %v1364
    %1631 = vmatpush2.msra.mxu0 %v1363
    %1632 = vmatprep.mubr.f32.mxu0 %v1206
    %1633 = vmatmul.mubr.f32.gmra.mxu0 %v1205
    %v1634 = vpop.f32.mrf.mxu0
    %v1635 = vadd.f32 %v1474, %v1634
    %v1636 = vpop.f32.mrf.mxu0
    %v1637 = vadd.f32 %v1476, %v1636
    %1638 = vmatprep.mubr.f32.mxu0 %v1210
    %1639 = vmatmul.mubr.f32.gmra.mxu0 %v1209
    %v1640 = vpop.f32.mrf.mxu0
    %v1641 = vadd.f32 %v1480, %v1640
    %v1642 = vpop.f32.mrf.mxu0
    %v1643 = vadd.f32 %v1482, %v1642
    %1644 = vmatprep.mubr.f32.mxu0 %v1214
    %1645 = vmatmul.mubr.f32.gmra.mxu0 %v1213
    %v1646 = vpop.f32.mrf.mxu0
    %v1647 = vadd.f32 %v1486, %v1646
    %v1648 = vpop.f32.mrf.mxu0
    %v1649 = vadd.f32 %v1488, %v1648
    %1650 = vmatprep.mubr.f32.mxu0 %v1218
    %1651 = vmatmul.mubr.f32.gmra.mxu0 %v1217
    %v1652 = vpop.f32.mrf.mxu0
    %v1653 = vadd.f32 %v1492, %v1652
    %v1654 = vpop.f32.mrf.mxu0
    %v1655 = vadd.f32 %v1494, %v1654
    %1656 = vmatprep.mubr.f32.mxu0 %v1222
    %1657 = vmatmul.mubr.f32.gmra.mxu0 %v1221
    %v1658 = vpop.f32.mrf.mxu0
    %v1659 = vadd.f32 %v1498, %v1658
    %v1660 = vpop.f32.mrf.mxu0
    %v1661 = vadd.f32 %v1500, %v1660
    %1662 = vmatprep.mubr.f32.mxu0 %v1226
    %1663 = vmatmul.mubr.f32.gmra.mxu0 %v1225
    %v1664 = vpop.f32.mrf.mxu0
    %v1665 = vadd.f32 %v1504, %v1664
    %v1666 = vpop.f32.mrf.mxu0
    %v1667 = vadd.f32 %v1506, %v1666
    %1668 = vmatprep.mubr.f32.mxu0 %v1230
    %1669 = vmatmul.mubr.f32.gmra.mxu0 %v1229
    %v1670 = vpop.f32.mrf.mxu0
    %v1671 = vadd.f32 %v1510, %v1670
    %v1672 = vpop.f32.mrf.mxu0
    %v1673 = vadd.f32 %v1512, %v1672
    %1674 = vmatprep.mubr.f32.mxu0 %v1234
    %1675 = vmatmul.mubr.f32.gmra.mxu0 %v1233
    %v1676 = vpop.f32.mrf.mxu0
    %v1677 = vadd.f32 %v1516, %v1676
    %v1678 = vpop.f32.mrf.mxu0
    %v1679 = vadd.f32 %v1518, %v1678
    %1680 = vmatprep.mubr.f32.mxu0 %v1238
    %1681 = vmatmul.mubr.f32.gmra.mxu0 %v1237
    %v1682 = vpop.f32.mrf.mxu0
    %v1683 = vadd.f32 %v1522, %v1682
    %v1684 = vpop.f32.mrf.mxu0
    %v1685 = vadd.f32 %v1524, %v1684
    %1686 = vmatprep.mubr.f32.mxu0 %v1242
    %1687 = vmatmul.mubr.f32.gmra.mxu0 %v1241
    %v1688 = vpop.f32.mrf.mxu0
    %v1689 = vadd.f32 %v1528, %v1688
    %v1690 = vpop.f32.mrf.mxu0
    %v1691 = vadd.f32 %v1530, %v1690
    %1692 = vmatprep.mubr.f32.mxu0 %v1246
    %1693 = vmatmul.mubr.f32.gmra.mxu0 %v1245
    %v1694 = vpop.f32.mrf.mxu0
    %v1695 = vadd.f32 %v1534, %v1694
    %v1696 = vpop.f32.mrf.mxu0
    %v1697 = vadd.f32 %v1536, %v1696
    %1698 = vmatprep.mubr.f32.mxu0 %v1250
    %1699 = vmatmul.mubr.f32.gmra.mxu0 %v1249
    %v1700 = vpop.f32.mrf.mxu0
    %v1701 = vadd.f32 %v1540, %v1700
    %v1702 = vpop.f32.mrf.mxu0
    %v1703 = vadd.f32 %v1542, %v1702
    %1704 = vmatprep.mubr.f32.mxu0 %v1254
    %1705 = vmatmul.mubr.f32.gmra.mxu0 %v1253
    %v1706 = vpop.f32.mrf.mxu0
    %v1707 = vadd.f32 %v1546, %v1706
    %v1708 = vpop.f32.mrf.mxu0
    %v1709 = vadd.f32 %v1548, %v1708
    %1710 = vmatprep.mubr.f32.mxu0 %v1258
    %1711 = vmatmul.mubr.f32.gmra.mxu0 %v1257
    %v1712 = vpop.f32.mrf.mxu0
    %v1713 = vadd.f32 %v1552, %v1712
    %v1714 = vpop.f32.mrf.mxu0
    %v1715 = vadd.f32 %v1554, %v1714
    %1716 = vmatprep.mubr.f32.mxu0 %v1262
    %1717 = vmatmul.mubr.f32.gmra.mxu0 %v1261
    %v1718 = vpop.f32.mrf.mxu0
    %v1719 = vadd.f32 %v1558, %v1718
    %v1720 = vpop.f32.mrf.mxu0
    %v1721 = vadd.f32 %v1560, %v1720
    %1722 = vmatprep.mubr.f32.mxu0 %v1266
    %1723 = vmatmul.mubr.f32.gmra.mxu0 %v1265
    %v1724 = vpop.f32.mrf.mxu0
    %v1725 = vadd.f32 %v1564, %v1724
    %v1726 = vpop.f32.mrf.mxu0
    %v1727 = vadd.f32 %v1566, %v1726
    %1728 = vdwg.mxu0
    %v1729 = vld [vmem:[%s7] sm:$0x3]
    %v1730 = vld [vmem:[%s8] sm:$0x3]
    %v1731 = vadd.f32 %v1635, %v1637
    %1732 = vadd.xlane.f32.xlu0 %v1731
    %v1733 = vpop.xlane.xlu0 %1732
    %v1734 = vadd.f32 %v1641, %v1643
    %1735 = vadd.xlane.f32.xlu0 %v1734
    %v1736 = vpop.xlane.xlu0 %1735
    %v1737 = vadd.f32 %v1647, %v1649
    %1738 = vadd.xlane.f32.xlu0 %v1737
    %v1739 = vpop.xlane.xlu0 %1738
    %v1740 = vadd.f32 %v1653, %v1655
    %1741 = vadd.xlane.f32.xlu0 %v1740
    %v1742 = vpop.xlane.xlu0 %1741
    %v1743 = vadd.f32 %v1659, %v1661
    %1744 = vadd.xlane.f32.xlu0 %v1743
    %v1745 = vpop.xlane.xlu0 %1744
    %v1746 = vadd.f32 %v1665, %v1667
    %1747 = vadd.xlane.f32.xlu0 %v1746
    %v1748 = vpop.xlane.xlu0 %1747
    %v1749 = vadd.f32 %v1671, %v1673
    %1750 = vadd.xlane.f32.xlu0 %v1749
    %v1751 = vpop.xlane.xlu0 %1750
    %v1752 = vadd.f32 %v1677, %v1679
    %1753 = vadd.xlane.f32.xlu0 %v1752
    %v1754 = vpop.xlane.xlu0 %1753
    %v1755 = vadd.f32 %v1683, %v1685
    %1756 = vadd.xlane.f32.xlu0 %v1755
    %v1757 = vpop.xlane.xlu0 %1756
    %v1758 = vadd.f32 %v1689, %v1691
    %1759 = vadd.xlane.f32.xlu0 %v1758
    %v1760 = vpop.xlane.xlu0 %1759
    %v1761 = vadd.f32 %v1695, %v1697
    %1762 = vadd.xlane.f32.xlu0 %v1761
    %v1763 = vpop.xlane.xlu0 %1762
    %v1764 = vadd.f32 %v1701, %v1703
    %1765 = vadd.xlane.f32.xlu0 %v1764
    %v1766 = vpop.xlane.xlu0 %1765
    %v1767 = vadd.f32 %v1707, %v1709
    %1768 = vadd.xlane.f32.xlu0 %v1767
    %v1769 = vpop.xlane.xlu0 %1768
    %v1770 = vadd.f32 %v1713, %v1715
    %1771 = vadd.xlane.f32.xlu0 %v1770
    %v1772 = vpop.xlane.xlu0 %1771
    %v1773 = vadd.f32 %v1719, %v1721
    %1774 = vadd.xlane.f32.xlu0 %v1773
    %v1775 = vpop.xlane.xlu0 %1774
    %v1776 = vadd.f32 %v1725, %v1727
    %1777 = vadd.xlane.f32.xlu0 %v1776
    %v1778 = vpop.xlane.xlu0 %1777
    %v1779 = vrcp.pop 256.0
    %v1780 = vmul.f32 %v1733, %v1779
    %v1781 = vmul.f32 %v1736, %v1779
    %v1782 = vmul.f32 %v1739, %v1779
    %v1783 = vmul.f32 %v1742, %v1779
    %v1784 = vmul.f32 %v1745, %v1779
    %v1785 = vmul.f32 %v1748, %v1779
    %v1786 = vmul.f32 %v1751, %v1779
    %v1787 = vmul.f32 %v1754, %v1779
    %v1788 = vmul.f32 %v1757, %v1779
    %v1789 = vmul.f32 %v1760, %v1779
    %v1790 = vmul.f32 %v1763, %v1779
    %v1791 = vmul.f32 %v1766, %v1779
    %v1792 = vmul.f32 %v1769, %v1779
    %v1793 = vmul.f32 %v1772, %v1779
    %v1794 = vmul.f32 %v1775, %v1779
    %v1795 = vmul.f32 %v1778, %v1779
    %v1796 = vmul.f32 %v1635, %v1635
    %v1797 = vmul.f32 %v1637, %v1637
    %v1798 = vmul.f32 %v1641, %v1641
    %v1799 = vmul.f32 %v1643, %v1643
    %v1800 = vmul.f32 %v1647, %v1647
    %v1801 = vmul.f32 %v1649, %v1649
    %v1802 = vmul.f32 %v1653, %v1653
    %v1803 = vmul.f32 %v1655, %v1655
    %v1804 = vmul.f32 %v1659, %v1659
    %v1805 = vmul.f32 %v1661, %v1661
    %v1806 = vmul.f32 %v1665, %v1665
    %v1807 = vmul.f32 %v1667, %v1667
    %v1808 = vmul.f32 %v1671, %v1671
    %v1809 = vmul.f32 %v1673, %v1673
    %v1810 = vmul.f32 %v1677, %v1677
    %v1811 = vmul.f32 %v1679, %v1679
    %v1812 = vmul.f32 %v1683, %v1683
    %v1813 = vmul.f32 %v1685, %v1685
    %v1814 = vmul.f32 %v1689, %v1689
    %v1815 = vmul.f32 %v1691, %v1691
    %v1816 = vmul.f32 %v1695, %v1695
    %v1817 = vmul.f32 %v1697, %v1697
    %v1818 = vmul.f32 %v1701, %v1701
    %v1819 = vmul.f32 %v1703, %v1703
    %v1820 = vmul.f32 %v1707, %v1707
    %v1821 = vmul.f32 %v1709, %v1709
    %v1822 = vmul.f32 %v1713, %v1713
    %v1823 = vmul.f32 %v1715, %v1715
    %v1824 = vmul.f32 %v1719, %v1719
    %v1825 = vmul.f32 %v1721, %v1721
    %v1826 = vmul.f32 %v1725, %v1725
    %v1827 = vmul.f32 %v1727, %v1727
    %v1828 = vadd.f32 %v1796, %v1797
    %1829 = vadd.xlane.f32.xlu0 %v1828
    %v1830 = vpop.xlane.xlu0 %1829
    %v1831 = vadd.f32 %v1798, %v1799
    %1832 = vadd.xlane.f32.xlu0 %v1831
    %v1833 = vpop.xlane.xlu0 %1832
    %v1834 = vadd.f32 %v1800, %v1801
    %1835 = vadd.xlane.f32.xlu0 %v1834
    %v1836 = vpop.xlane.xlu0 %1835
    %v1837 = vadd.f32 %v1802, %v1803
    %1838 = vadd.xlane.f32.xlu0 %v1837
    %v1839 = vpop.xlane.xlu0 %1838
    %v1840 = vadd.f32 %v1804, %v1805
    %1841 = vadd.xlane.f32.xlu0 %v1840
    %v1842 = vpop.xlane.xlu0 %1841
    %v1843 = vadd.f32 %v1806, %v1807
    %1844 = vadd.xlane.f32.xlu0 %v1843
    %v1845 = vpop.xlane.xlu0 %1844
    %v1846 = vadd.f32 %v1808, %v1809
    %1847 = vadd.xlane.f32.xlu0 %v1846
    %v1848 = vpop.xlane.xlu0 %1847
    %v1849 = vadd.f32 %v1810, %v1811
    %1850 = vadd.xlane.f32.xlu0 %v1849
    %v1851 = vpop.xlane.xlu0 %1850
    %v1852 = vadd.f32 %v1812, %v1813
    %1853 = vadd.xlane.f32.xlu0 %v1852
    %v1854 = vpop.xlane.xlu0 %1853
    %v1855 = vadd.f32 %v1814, %v1815
    %1856 = vadd.xlane.f32.xlu0 %v1855
    %v1857 = vpop.xlane.xlu0 %1856
    %v1858 = vadd.f32 %v1816, %v1817
    %1859 = vadd.xlane.f32.xlu0 %v1858
    %v1860 = vpop.xlane.xlu0 %1859
    %v1861 = vadd.f32 %v1818, %v1819
    %1862 = vadd.xlane.f32.xlu0 %v1861
    %v1863 = vpop.xlane.xlu0 %1862
    %v1864 = vadd.f32 %v1820, %v1821
    %1865 = vadd.xlane.f32.xlu0 %v1864
    %v1866 = vpop.xlane.xlu0 %1865
    %v1867 = vadd.f32 %v1822, %v1823
    %1868 = vadd.xlane.f32.xlu0 %v1867
    %v1869 = vpop.xlane.xlu0 %1868
    %v1870 = vadd.f32 %v1824, %v1825
    %1871 = vadd.xlane.f32.xlu0 %v1870
    %v1872 = vpop.xlane.xlu0 %1871
    %v1873 = vadd.f32 %v1826, %v1827
    %1874 = vadd.xlane.f32.xlu0 %v1873
    %v1875 = vpop.xlane.xlu0 %1874
    %v1876 = vmul.f32 %v1830, %v1779
    %v1877 = vmul.f32 %v1833, %v1779
    %v1878 = vmul.f32 %v1836, %v1779
    %v1879 = vmul.f32 %v1839, %v1779
    %v1880 = vmul.f32 %v1842, %v1779
    %v1881 = vmul.f32 %v1845, %v1779
    %v1882 = vmul.f32 %v1848, %v1779
    %v1883 = vmul.f32 %v1851, %v1779
    %v1884 = vmul.f32 %v1854, %v1779
    %v1885 = vmul.f32 %v1857, %v1779
    %v1886 = vmul.f32 %v1860, %v1779
    %v1887 = vmul.f32 %v1863, %v1779
    %v1888 = vmul.f32 %v1866, %v1779
    %v1889 = vmul.f32 %v1869, %v1779
    %v1890 = vmul.f32 %v1872, %v1779
    %v1891 = vmul.f32 %v1875, %v1779
    %v1892 = vmul.f32 %v1780, %v1780
    %v1893 = vmul.f32 %v1781, %v1781
    %v1894 = vmul.f32 %v1782, %v1782
    %v1895 = vmul.f32 %v1783, %v1783
    %v1896 = vmul.f32 %v1784, %v1784
    %v1897 = vmul.f32 %v1785, %v1785
    %v1898 = vmul.f32 %v1786, %v1786
    %v1899 = vmul.f32 %v1787, %v1787
    %v1900 = vmul.f32 %v1788, %v1788
    %v1901 = vmul.f32 %v1789, %v1789
    %v1902 = vmul.f32 %v1790, %v1790
    %v1903 = vmul.f32 %v1791, %v1791
    %v1904 = vmul.f32 %v1792, %v1792
    %v1905 = vmul.f32 %v1793, %v1793
    %v1906 = vmul.f32 %v1794, %v1794
    %v1907 = vmul.f32 %v1795, %v1795
    %v1908 = vsub.f32 %v1876, %v1892
    %v1909 = vsub.f32 %v1877, %v1893
    %v1910 = vsub.f32 %v1878, %v1894
    %v1911 = vsub.f32 %v1879, %v1895
    %v1912 = vsub.f32 %v1880, %v1896
    %v1913 = vsub.f32 %v1881, %v1897
    %v1914 = vsub.f32 %v1882, %v1898
    %v1915 = vsub.f32 %v1883, %v1899
    %v1916 = vsub.f32 %v1884, %v1900
    %v1917 = vsub.f32 %v1885, %v1901
    %v1918 = vsub.f32 %v1886, %v1902
    %v1919 = vsub.f32 %v1887, %v1903
    %v1920 = vsub.f32 %v1888, %v1904
    %v1921 = vsub.f32 %v1889, %v1905
    %v1922 = vsub.f32 %v1890, %v1906
    %v1923 = vsub.f32 %v1891, %v1907
    %v1924 = vsub.f32 %v1635, %v1780
    %v1925 = vsub.f32 %v1637, %v1780
    %v1926 = vsub.f32 %v1641, %v1781
    %v1927 = vsub.f32 %v1643, %v1781
    %v1928 = vsub.f32 %v1647, %v1782
    %v1929 = vsub.f32 %v1649, %v1782
    %v1930 = vsub.f32 %v1653, %v1783
    %v1931 = vsub.f32 %v1655, %v1783
    %v1932 = vsub.f32 %v1659, %v1784
    %v1933 = vsub.f32 %v1661, %v1784
    %v1934 = vsub.f32 %v1665, %v1785
    %v1935 = vsub.f32 %v1667, %v1785
    %v1936 = vsub.f32 %v1671, %v1786
    %v1937 = vsub.f32 %v1673, %v1786
    %v1938 = vsub.f32 %v1677, %v1787
    %v1939 = vsub.f32 %v1679, %v1787
    %v1940 = vsub.f32 %v1683, %v1788
    %v1941 = vsub.f32 %v1685, %v1788
    %v1942 = vsub.f32 %v1689, %v1789
    %v1943 = vsub.f32 %v1691, %v1789
    %v1944 = vsub.f32 %v1695, %v1790
    %v1945 = vsub.f32 %v1697, %v1790
    %v1946 = vsub.f32 %v1701, %v1791
    %v1947 = vsub.f32 %v1703, %v1791
    %v1948 = vsub.f32 %v1707, %v1792
    %v1949 = vsub.f32 %v1709, %v1792
    %v1950 = vsub.f32 %v1713, %v1793
    %v1951 = vsub.f32 %v1715, %v1793
    %v1952 = vsub.f32 %v1719, %v1794
    %v1953 = vsub.f32 %v1721, %v1794
    %v1954 = vsub.f32 %v1725, %v1795
    %v1955 = vsub.f32 %v1727, %v1795
    %v1956 = vadd.f32 %v1908, 1e-05
    %v1957 = vadd.f32 %v1909, 1e-05
    %v1958 = vadd.f32 %v1910, 1e-05
    %v1959 = vadd.f32 %v1911, 1e-05
    %v1960 = vadd.f32 %v1912, 1e-05
    %v1961 = vadd.f32 %v1913, 1e-05
    %v1962 = vadd.f32 %v1914, 1e-05
    %v1963 = vadd.f32 %v1915, 1e-05
    %v1964 = vadd.f32 %v1916, 1e-05
    %v1965 = vadd.f32 %v1917, 1e-05
    %v1966 = vadd.f32 %v1918, 1e-05
    %v1967 = vadd.f32 %v1919, 1e-05
    %v1968 = vadd.f32 %v1920, 1e-05
    %v1969 = vadd.f32 %v1921, 1e-05
    %v1970 = vadd.f32 %v1922, 1e-05
    %v1971 = vadd.f32 %v1923, 1e-05
    %v1972 = vrsqrt.pop %v1956
    %v1973 = vrsqrt.pop %v1957
    %v1974 = vrsqrt.pop %v1958
    %v1975 = vrsqrt.pop %v1959
    %v1976 = vrsqrt.pop %v1960
    %v1977 = vrsqrt.pop %v1961
    %v1978 = vrsqrt.pop %v1962
    %v1979 = vrsqrt.pop %v1963
    %v1980 = vrsqrt.pop %v1964
    %v1981 = vrsqrt.pop %v1965
    %v1982 = vrsqrt.pop %v1966
    %v1983 = vrsqrt.pop %v1967
    %v1984 = vrsqrt.pop %v1968
    %v1985 = vrsqrt.pop %v1969
    %v1986 = vrsqrt.pop %v1970
    %v1987 = vrsqrt.pop %v1971
    %v1988 = vmul.f32 %v1924, %v1972
    %v1989 = vmul.f32 %v1925, %v1972
    %v1990 = vmul.f32 %v1926, %v1973
    %v1991 = vmul.f32 %v1927, %v1973
    %v1992 = vmul.f32 %v1928, %v1974
    %v1993 = vmul.f32 %v1929, %v1974
    %v1994 = vmul.f32 %v1930, %v1975
    %v1995 = vmul.f32 %v1931, %v1975
    %v1996 = vmul.f32 %v1932, %v1976
    %v1997 = vmul.f32 %v1933, %v1976
    %v1998 = vmul.f32 %v1934, %v1977
    %v1999 = vmul.f32 %v1935, %v1977
    %v2000 = vmul.f32 %v1936, %v1978
    %v2001 = vmul.f32 %v1937, %v1978
    %v2002 = vmul.f32 %v1938, %v1979
    %v2003 = vmul.f32 %v1939, %v1979
    %v2004 = vmul.f32 %v1940, %v1980
    %v2005 = vmul.f32 %v1941, %v1980
    %v2006 = vmul.f32 %v1942, %v1981
    %v2007 = vmul.f32 %v1943, %v1981
    %v2008 = vmul.f32 %v1944, %v1982
    %v2009 = vmul.f32 %v1945, %v1982
    %v2010 = vmul.f32 %v1946, %v1983
    %v2011 = vmul.f32 %v1947, %v1983
    %v2012 = vmul.f32 %v1948, %v1984
    %v2013 = vmul.f32 %v1949, %v1984
    %v2014 = vmul.f32 %v1950, %v1985
    %v2015 = vmul.f32 %v1951, %v1985
    %v2016 = vmul.f32 %v1952, %v1986
    %v2017 = vmul.f32 %v1953, %v1986
    %v2018 = vmul.f32 %v1954, %v1987
    %v2019 = vmul.f32 %v1955, %v1987
    %v2021 = vlaneseq
    %v2022 = vshrl.u32 %v2021, 7
    %v2023 = vsub.s32 0, %v2022
    %v2024 = vrot.slane %v1729, %v2023
    %v2025 = vlaneseq
    %v2026 = vshrl.u32 %v2025, 7
    %v2027 = vsub.s32 1, %v2026
    %v2028 = vrot.slane %v1729, %v2027
    %v2031 = vmul.f32 %v1988, %v2024
    %v2032 = vmul.f32 %v1989, %v2028
    %v2033 = vmul.f32 %v1990, %v2024
    %v2034 = vmul.f32 %v1991, %v2028
    %v2035 = vmul.f32 %v1992, %v2024
    %v2036 = vmul.f32 %v1993, %v2028
    %v2037 = vmul.f32 %v1994, %v2024
    %v2038 = vmul.f32 %v1995, %v2028
    %v2039 = vmul.f32 %v1996, %v2024
    %v2040 = vmul.f32 %v1997, %v2028
    %v2041 = vmul.f32 %v1998, %v2024
    %v2042 = vmul.f32 %v1999, %v2028
    %v2043 = vmul.f32 %v2000, %v2024
    %v2044 = vmul.f32 %v2001, %v2028
    %v2045 = vmul.f32 %v2002, %v2024
    %v2046 = vmul.f32 %v2003, %v2028
    %v2047 = vmul.f32 %v2004, %v2024
    %v2048 = vmul.f32 %v2005, %v2028
    %v2049 = vmul.f32 %v2006, %v2024
    %v2050 = vmul.f32 %v2007, %v2028
    %v2051 = vmul.f32 %v2008, %v2024
    %v2052 = vmul.f32 %v2009, %v2028
    %v2053 = vmul.f32 %v2010, %v2024
    %v2054 = vmul.f32 %v2011, %v2028
    %v2055 = vmul.f32 %v2012, %v2024
    %v2056 = vmul.f32 %v2013, %v2028
    %v2057 = vmul.f32 %v2014, %v2024
    %v2058 = vmul.f32 %v2015, %v2028
    %v2059 = vmul.f32 %v2016, %v2024
    %v2060 = vmul.f32 %v2017, %v2028
    %v2061 = vmul.f32 %v2018, %v2024
    %v2062 = vmul.f32 %v2019, %v2028
    %v2064 = vlaneseq
    %v2065 = vshrl.u32 %v2064, 7
    %v2066 = vsub.s32 0, %v2065
    %v2067 = vrot.slane %v1730, %v2066
    %v2068 = vlaneseq
    %v2069 = vshrl.u32 %v2068, 7
    %v2070 = vsub.s32 1, %v2069
    %v2071 = vrot.slane %v1730, %v2070
    %v2074 = vadd.f32 %v2031, %v2067
    %v2075 = vadd.f32 %v2032, %v2071
    %v2076 = vadd.f32 %v2033, %v2067
    %v2077 = vadd.f32 %v2034, %v2071
    %v2078 = vadd.f32 %v2035, %v2067
    %v2079 = vadd.f32 %v2036, %v2071
    %v2080 = vadd.f32 %v2037, %v2067
    %v2081 = vadd.f32 %v2038, %v2071
    %v2082 = vadd.f32 %v2039, %v2067
    %v2083 = vadd.f32 %v2040, %v2071
    %v2084 = vadd.f32 %v2041, %v2067
    %v2085 = vadd.f32 %v2042, %v2071
    %v2086 = vadd.f32 %v2043, %v2067
    %v2087 = vadd.f32 %v2044, %v2071
    %v2088 = vadd.f32 %v2045, %v2067
    %v2089 = vadd.f32 %v2046, %v2071
    %v2090 = vadd.f32 %v2047, %v2067
    %v2091 = vadd.f32 %v2048, %v2071
    %v2092 = vadd.f32 %v2049, %v2067
    %v2093 = vadd.f32 %v2050, %v2071
    %v2094 = vadd.f32 %v2051, %v2067
    %v2095 = vadd.f32 %v2052, %v2071
    %v2096 = vadd.f32 %v2053, %v2067
    %v2097 = vadd.f32 %v2054, %v2071
    %v2098 = vadd.f32 %v2055, %v2067
    %v2099 = vadd.f32 %v2056, %v2071
    %v2100 = vadd.f32 %v2057, %v2067
    %v2101 = vadd.f32 %v2058, %v2071
    %v2102 = vadd.f32 %v2059, %v2067
    %v2103 = vadd.f32 %v2060, %v2071
    %v2104 = vadd.f32 %v2061, %v2067
    %v2105 = vadd.f32 %v2062, %v2071
    %v2106 = vmul.f32 %v2074, 0.01
    %v2107 = vmul.f32 %v2075, 0.01
    %v2108 = vmul.f32 %v2076, 0.01
    %v2109 = vmul.f32 %v2077, 0.01
    %v2110 = vmul.f32 %v2078, 0.01
    %v2111 = vmul.f32 %v2079, 0.01
    %v2112 = vmul.f32 %v2080, 0.01
    %v2113 = vmul.f32 %v2081, 0.01
    %v2114 = vmul.f32 %v2082, 0.01
    %v2115 = vmul.f32 %v2083, 0.01
    %v2116 = vmul.f32 %v2084, 0.01
    %v2117 = vmul.f32 %v2085, 0.01
    %v2118 = vmul.f32 %v2086, 0.01
    %v2119 = vmul.f32 %v2087, 0.01
    %v2120 = vmul.f32 %v2088, 0.01
    %v2121 = vmul.f32 %v2089, 0.01
    %v2122 = vmul.f32 %v2090, 0.01
    %v2123 = vmul.f32 %v2091, 0.01
    %v2124 = vmul.f32 %v2092, 0.01
    %v2125 = vmul.f32 %v2093, 0.01
    %v2126 = vmul.f32 %v2094, 0.01
    %v2127 = vmul.f32 %v2095, 0.01
    %v2128 = vmul.f32 %v2096, 0.01
    %v2129 = vmul.f32 %v2097, 0.01
    %v2130 = vmul.f32 %v2098, 0.01
    %v2131 = vmul.f32 %v2099, 0.01
    %v2132 = vmul.f32 %v2100, 0.01
    %v2133 = vmul.f32 %v2101, 0.01
    %v2134 = vmul.f32 %v2102, 0.01
    %v2135 = vmul.f32 %v2103, 0.01
    %v2136 = vmul.f32 %v2104, 0.01
    %v2137 = vmul.f32 %v2105, 0.01
    %v2138 = vmax.f32 %v2074, %v2106
    %v2139 = vmax.f32 %v2075, %v2107
    %v2140 = vmax.f32 %v2076, %v2108
    %v2141 = vmax.f32 %v2077, %v2109
    %v2142 = vmax.f32 %v2078, %v2110
    %v2143 = vmax.f32 %v2079, %v2111
    %v2144 = vmax.f32 %v2080, %v2112
    %v2145 = vmax.f32 %v2081, %v2113
    %v2146 = vmax.f32 %v2082, %v2114
    %v2147 = vmax.f32 %v2083, %v2115
    %v2148 = vmax.f32 %v2084, %v2116
    %v2149 = vmax.f32 %v2085, %v2117
    %v2150 = vmax.f32 %v2086, %v2118
    %v2151 = vmax.f32 %v2087, %v2119
    %v2152 = vmax.f32 %v2088, %v2120
    %v2153 = vmax.f32 %v2089, %v2121
    %v2154 = vmax.f32 %v2090, %v2122
    %v2155 = vmax.f32 %v2091, %v2123
    %v2156 = vmax.f32 %v2092, %v2124
    %v2157 = vmax.f32 %v2093, %v2125
    %v2158 = vmax.f32 %v2094, %v2126
    %v2159 = vmax.f32 %v2095, %v2127
    %v2160 = vmax.f32 %v2096, %v2128
    %v2161 = vmax.f32 %v2097, %v2129
    %v2162 = vmax.f32 %v2098, %v2130
    %v2163 = vmax.f32 %v2099, %v2131
    %v2164 = vmax.f32 %v2100, %v2132
    %v2165 = vmax.f32 %v2101, %v2133
    %v2166 = vmax.f32 %v2102, %v2134
    %v2167 = vmax.f32 %v2103, %v2135
    %v2168 = vmax.f32 %v2104, %v2136
    %v2169 = vmax.f32 %v2105, %v2137
    %v2170 = vld [vmem:[%s9] sm:$0xff]
    %v2171 = vld [vmem:[%s9 + $0x8] sm:$0xff]
    %v2172 = vld [vmem:[%s9 + $0x10] sm:$0xff]
    %v2173 = vld [vmem:[%s9 + $0x18] sm:$0xff]
    %v2174 = vld [vmem:[%s9 + $0x20] sm:$0xff]
    %v2175 = vld [vmem:[%s9 + $0x28] sm:$0xff]
    %v2176 = vld [vmem:[%s9 + $0x30] sm:$0xff]
    %v2177 = vld [vmem:[%s9 + $0x38] sm:$0xff]
    %v2178 = vld [vmem:[%s9 + $0x40] sm:$0xff]
    %v2179 = vld [vmem:[%s9 + $0x48] sm:$0xff]
    %v2180 = vld [vmem:[%s9 + $0x50] sm:$0xff]
    %v2181 = vld [vmem:[%s9 + $0x58] sm:$0xff]
    %v2182 = vld [vmem:[%s9 + $0x60] sm:$0xff]
    %v2183 = vld [vmem:[%s9 + $0x68] sm:$0xff]
    %v2184 = vld [vmem:[%s9 + $0x70] sm:$0xff]
    %v2185 = vld [vmem:[%s9 + $0x78] sm:$0xff]
    %v2186 = vld [vmem:[%s9 + $0x80] sm:$0xff]
    %v2187 = vld [vmem:[%s9 + $0x88] sm:$0xff]
    %v2188 = vld [vmem:[%s9 + $0x90] sm:$0xff]
    %v2189 = vld [vmem:[%s9 + $0x98] sm:$0xff]
    %v2190 = vld [vmem:[%s9 + $0xa0] sm:$0xff]
    %v2191 = vld [vmem:[%s9 + $0xa8] sm:$0xff]
    %v2192 = vld [vmem:[%s9 + $0xb0] sm:$0xff]
    %v2193 = vld [vmem:[%s9 + $0xb8] sm:$0xff]
    %v2194 = vld [vmem:[%s9 + $0xc0] sm:$0xff]
    %v2195 = vld [vmem:[%s9 + $0xc8] sm:$0xff]
    %v2196 = vld [vmem:[%s9 + $0xd0] sm:$0xff]
    %v2197 = vld [vmem:[%s9 + $0xd8] sm:$0xff]
    %v2198 = vld [vmem:[%s9 + $0xe0] sm:$0xff]
    %v2199 = vld [vmem:[%s9 + $0xe8] sm:$0xff]
    %v2200 = vld [vmem:[%s9 + $0xf0] sm:$0xff]
    %v2201 = vld [vmem:[%s9 + $0xf8] sm:$0xff]
    %v2202 = vld [vmem:[%s10] sm:$0x1]
    %v2204 = vlaneseq
    %v2205 = vshrl.u32 %v2204, 7
    %v2206 = vsub.s32 0, %v2205
    %v2207 = vrot.slane %v2202, %v2206
    %2209 = vmatprep.subr.mxu0 0.0
    %2210 = vmatpush1.msra.mxu0 %v2185
    %2211 = vmatprep.subr.mxu0 0.0
    %2212 = vmatpush1.msra.mxu0 %v2184
    %2213 = vmatprep.subr.mxu0 0.0
    %2214 = vmatpush1.msra.mxu0 %v2183
    %2215 = vmatprep.subr.mxu0 0.0
    %2216 = vmatpush1.msra.mxu0 %v2182
    %2217 = vmatprep.subr.mxu0 0.0
    %2218 = vmatpush1.msra.mxu0 %v2181
    %2219 = vmatprep.subr.mxu0 0.0
    %2220 = vmatpush1.msra.mxu0 %v2180
    %2221 = vmatprep.subr.mxu0 0.0
    %2222 = vmatpush1.msra.mxu0 %v2179
    %2223 = vmatprep.subr.mxu0 0.0
    %2224 = vmatpush1.msra.mxu0 %v2178
    %2225 = vmatprep.subr.mxu0 0.0
    %2226 = vmatpush1.msra.mxu0 %v2177
    %2227 = vmatprep.subr.mxu0 0.0
    %2228 = vmatpush1.msra.mxu0 %v2176
    %2229 = vmatprep.subr.mxu0 0.0
    %2230 = vmatpush1.msra.mxu0 %v2175
    %2231 = vmatprep.subr.mxu0 0.0
    %2232 = vmatpush1.msra.mxu0 %v2174
    %2233 = vmatprep.subr.mxu0 0.0
    %2234 = vmatpush1.msra.mxu0 %v2173
    %2235 = vmatprep.subr.mxu0 0.0
    %2236 = vmatpush1.msra.mxu0 %v2172
    %2237 = vmatprep.subr.mxu0 0.0
    %2238 = vmatpush1.msra.mxu0 %v2171
    %2239 = vmatprep.subr.mxu0 0.0
    %2240 = vmatpush1.msra.mxu0 %v2170
    %2241 = vmatprep.subr.mxu0 0.0
    %2242 = vmatpush2.msra.mxu0 %v2201
    %2243 = vmatprep.subr.mxu0 0.0
    %2244 = vmatpush2.msra.mxu0 %v2200
    %2245 = vmatprep.subr.mxu0 0.0
    %2246 = vmatpush2.msra.mxu0 %v2199
    %2247 = vmatprep.subr.mxu0 0.0
    %2248 = vmatpush2.msra.mxu0 %v2198
    %2249 = vmatprep.subr.mxu0 0.0
    %2250 = vmatpush2.msra.mxu0 %v2197
    %2251 = vmatprep.subr.mxu0 0.0
    %2252 = vmatpush2.msra.mxu0 %v2196
    %2253 = vmatprep.subr.mxu0 0.0
    %2254 = vmatpush2.msra.mxu0 %v2195
    %2255 = vmatprep.subr.mxu0 0.0
    %2256 = vmatpush2.msra.mxu0 %v2194
    %2257 = vmatprep.subr.mxu0 0.0
    %2258 = vmatpush2.msra.mxu0 %v2193
    %2259 = vmatprep.subr.mxu0 0.0
    %2260 = vmatpush2.msra.mxu0 %v2192
    %2261 = vmatprep.subr.mxu0 0.0
    %2262 = vmatpush2.msra.mxu0 %v2191
    %2263 = vmatprep.subr.mxu0 0.0
    %2264 = vmatpush2.msra.mxu0 %v2190
    %2265 = vmatprep.subr.mxu0 0.0
    %2266 = vmatpush2.msra.mxu0 %v2189
    %2267 = vmatprep.subr.mxu0 0.0
    %2268 = vmatpush2.msra.mxu0 %v2188
    %2269 = vmatprep.subr.mxu0 0.0
    %2270 = vmatpush2.msra.mxu0 %v2187
    %2271 = vmatprep.subr.mxu0 0.0
    %2272 = vmatpush2.msra.mxu0 %v2186
    %2273 = vmatprep.mubr.f32.mxu0 %v2139
    %2274 = vmatmul.mubr.f32.gmra.mxu0 %v2138
    %v2275 = vpop.f32.mrf.mxu0
    %v2276 = vadd.f32 %v2207, %v2275
    %v2277 = vpop.f32.mrf.mxu0
    %2278 = vmatprep.mubr.f32.mxu0 %v2141
    %2279 = vmatmul.mubr.f32.gmra.mxu0 %v2140
    %v2280 = vpop.f32.mrf.mxu0
    %v2281 = vadd.f32 %v2207, %v2280
    %v2282 = vpop.f32.mrf.mxu0
    %2283 = vmatprep.mubr.f32.mxu0 %v2143
    %2284 = vmatmul.mubr.f32.gmra.mxu0 %v2142
    %v2285 = vpop.f32.mrf.mxu0
    %v2286 = vadd.f32 %v2207, %v2285
    %v2287 = vpop.f32.mrf.mxu0
    %2288 = vmatprep.mubr.f32.mxu0 %v2145
    %2289 = vmatmul.mubr.f32.gmra.mxu0 %v2144
    %v2290 = vpop.f32.mrf.mxu0
    %v2291 = vadd.f32 %v2207, %v2290
    %v2292 = vpop.f32.mrf.mxu0
    %2293 = vmatprep.mubr.f32.mxu0 %v2147
    %2294 = vmatmul.mubr.f32.gmra.mxu0 %v2146
    %v2295 = vpop.f32.mrf.mxu0
    %v2296 = vadd.f32 %v2207, %v2295
    %v2297 = vpop.f32.mrf.mxu0
    %2298 = vmatprep.mubr.f32.mxu0 %v2149
    %2299 = vmatmul.mubr.f32.gmra.mxu0 %v2148
    %v2300 = vpop.f32.mrf.mxu0
    %v2301 = vadd.f32 %v2207, %v2300
    %v2302 = vpop.f32.mrf.mxu0
    %2303 = vmatprep.mubr.f32.mxu0 %v2151
    %2304 = vmatmul.mubr.f32.gmra.mxu0 %v2150
    %v2305 = vpop.f32.mrf.mxu0
    %v2306 = vadd.f32 %v2207, %v2305
    %v2307 = vpop.f32.mrf.mxu0
    %2308 = vmatprep.mubr.f32.mxu0 %v2153
    %2309 = vmatmul.mubr.f32.gmra.mxu0 %v2152
    %v2310 = vpop.f32.mrf.mxu0
    %v2311 = vadd.f32 %v2207, %v2310
    %v2312 = vpop.f32.mrf.mxu0
    %2313 = vmatprep.mubr.f32.mxu0 %v2155
    %2314 = vmatmul.mubr.f32.gmra.mxu0 %v2154
    %v2315 = vpop.f32.mrf.mxu0
    %v2316 = vadd.f32 %v2207, %v2315
    %v2317 = vpop.f32.mrf.mxu0
    %2318 = vmatprep.mubr.f32.mxu0 %v2157
    %2319 = vmatmul.mubr.f32.gmra.mxu0 %v2156
    %v2320 = vpop.f32.mrf.mxu0
    %v2321 = vadd.f32 %v2207, %v2320
    %v2322 = vpop.f32.mrf.mxu0
    %2323 = vmatprep.mubr.f32.mxu0 %v2159
    %2324 = vmatmul.mubr.f32.gmra.mxu0 %v2158
    %v2325 = vpop.f32.mrf.mxu0
    %v2326 = vadd.f32 %v2207, %v2325
    %v2327 = vpop.f32.mrf.mxu0
    %2328 = vmatprep.mubr.f32.mxu0 %v2161
    %2329 = vmatmul.mubr.f32.gmra.mxu0 %v2160
    %v2330 = vpop.f32.mrf.mxu0
    %v2331 = vadd.f32 %v2207, %v2330
    %v2332 = vpop.f32.mrf.mxu0
    %2333 = vmatprep.mubr.f32.mxu0 %v2163
    %2334 = vmatmul.mubr.f32.gmra.mxu0 %v2162
    %v2335 = vpop.f32.mrf.mxu0
    %v2336 = vadd.f32 %v2207, %v2335
    %v2337 = vpop.f32.mrf.mxu0
    %2338 = vmatprep.mubr.f32.mxu0 %v2165
    %2339 = vmatmul.mubr.f32.gmra.mxu0 %v2164
    %v2340 = vpop.f32.mrf.mxu0
    %v2341 = vadd.f32 %v2207, %v2340
    %v2342 = vpop.f32.mrf.mxu0
    %2343 = vmatprep.mubr.f32.mxu0 %v2167
    %2344 = vmatmul.mubr.f32.gmra.mxu0 %v2166
    %v2345 = vpop.f32.mrf.mxu0
    %v2346 = vadd.f32 %v2207, %v2345
    %v2347 = vpop.f32.mrf.mxu0
    %2348 = vmatprep.mubr.f32.mxu0 %v2169
    %2349 = vmatmul.mubr.f32.gmra.mxu0 %v2168
    %v2350 = vpop.f32.mrf.mxu0
    %v2351 = vadd.f32 %v2207, %v2350
    %v2352 = vpop.f32.mrf.mxu0
    %2353 = vdwg.mxu0
    %v2354 = vld [vmem:[%s11] sm:$0x1]
    %v2355 = vld [vmem:[%s12] sm:$0x1]
    %2356 = vadd.xlane.f32.xlu0 %v2276
    %v2357 = vpop.xlane.xlu0 %2356
    %2358 = vadd.xlane.f32.xlu0 %v2281
    %v2359 = vpop.xlane.xlu0 %2358
    %2360 = vadd.xlane.f32.xlu0 %v2286
    %v2361 = vpop.xlane.xlu0 %2360
    %2362 = vadd.xlane.f32.xlu0 %v2291
    %v2363 = vpop.xlane.xlu0 %2362
    %2364 = vadd.xlane.f32.xlu0 %v2296
    %v2365 = vpop.xlane.xlu0 %2364
    %2366 = vadd.xlane.f32.xlu0 %v2301
    %v2367 = vpop.xlane.xlu0 %2366
    %2368 = vadd.xlane.f32.xlu0 %v2306
    %v2369 = vpop.xlane.xlu0 %2368
    %2370 = vadd.xlane.f32.xlu0 %v2311
    %v2371 = vpop.xlane.xlu0 %2370
    %2372 = vadd.xlane.f32.xlu0 %v2316
    %v2373 = vpop.xlane.xlu0 %2372
    %2374 = vadd.xlane.f32.xlu0 %v2321
    %v2375 = vpop.xlane.xlu0 %2374
    %2376 = vadd.xlane.f32.xlu0 %v2326
    %v2377 = vpop.xlane.xlu0 %2376
    %2378 = vadd.xlane.f32.xlu0 %v2331
    %v2379 = vpop.xlane.xlu0 %2378
    %2380 = vadd.xlane.f32.xlu0 %v2336
    %v2381 = vpop.xlane.xlu0 %2380
    %2382 = vadd.xlane.f32.xlu0 %v2341
    %v2383 = vpop.xlane.xlu0 %2382
    %2384 = vadd.xlane.f32.xlu0 %v2346
    %v2385 = vpop.xlane.xlu0 %2384
    %2386 = vadd.xlane.f32.xlu0 %v2351
    %v2387 = vpop.xlane.xlu0 %2386
    %v2388 = vrcp.pop 128.0
    %v2389 = vmul.f32 %v2357, %v2388
    %v2390 = vmul.f32 %v2359, %v2388
    %v2391 = vmul.f32 %v2361, %v2388
    %v2392 = vmul.f32 %v2363, %v2388
    %v2393 = vmul.f32 %v2365, %v2388
    %v2394 = vmul.f32 %v2367, %v2388
    %v2395 = vmul.f32 %v2369, %v2388
    %v2396 = vmul.f32 %v2371, %v2388
    %v2397 = vmul.f32 %v2373, %v2388
    %v2398 = vmul.f32 %v2375, %v2388
    %v2399 = vmul.f32 %v2377, %v2388
    %v2400 = vmul.f32 %v2379, %v2388
    %v2401 = vmul.f32 %v2381, %v2388
    %v2402 = vmul.f32 %v2383, %v2388
    %v2403 = vmul.f32 %v2385, %v2388
    %v2404 = vmul.f32 %v2387, %v2388
    %v2405 = vmul.f32 %v2276, %v2276
    %v2406 = vmul.f32 %v2281, %v2281
    %v2407 = vmul.f32 %v2286, %v2286
    %v2408 = vmul.f32 %v2291, %v2291
    %v2409 = vmul.f32 %v2296, %v2296
    %v2410 = vmul.f32 %v2301, %v2301
    %v2411 = vmul.f32 %v2306, %v2306
    %v2412 = vmul.f32 %v2311, %v2311
    %v2413 = vmul.f32 %v2316, %v2316
    %v2414 = vmul.f32 %v2321, %v2321
    %v2415 = vmul.f32 %v2326, %v2326
    %v2416 = vmul.f32 %v2331, %v2331
    %v2417 = vmul.f32 %v2336, %v2336
    %v2418 = vmul.f32 %v2341, %v2341
    %v2419 = vmul.f32 %v2346, %v2346
    %v2420 = vmul.f32 %v2351, %v2351
    %2421 = vadd.xlane.f32.xlu0 %v2405
    %v2422 = vpop.xlane.xlu0 %2421
    %2423 = vadd.xlane.f32.xlu0 %v2406
    %v2424 = vpop.xlane.xlu0 %2423
    %2425 = vadd.xlane.f32.xlu0 %v2407
    %v2426 = vpop.xlane.xlu0 %2425
    %2427 = vadd.xlane.f32.xlu0 %v2408
    %v2428 = vpop.xlane.xlu0 %2427
    %2429 = vadd.xlane.f32.xlu0 %v2409
    %v2430 = vpop.xlane.xlu0 %2429
    %2431 = vadd.xlane.f32.xlu0 %v2410
    %v2432 = vpop.xlane.xlu0 %2431
    %2433 = vadd.xlane.f32.xlu0 %v2411
    %v2434 = vpop.xlane.xlu0 %2433
    %2435 = vadd.xlane.f32.xlu0 %v2412
    %v2436 = vpop.xlane.xlu0 %2435
    %2437 = vadd.xlane.f32.xlu0 %v2413
    %v2438 = vpop.xlane.xlu0 %2437
    %2439 = vadd.xlane.f32.xlu0 %v2414
    %v2440 = vpop.xlane.xlu0 %2439
    %2441 = vadd.xlane.f32.xlu0 %v2415
    %v2442 = vpop.xlane.xlu0 %2441
    %2443 = vadd.xlane.f32.xlu0 %v2416
    %v2444 = vpop.xlane.xlu0 %2443
    %2445 = vadd.xlane.f32.xlu0 %v2417
    %v2446 = vpop.xlane.xlu0 %2445
    %2447 = vadd.xlane.f32.xlu0 %v2418
    %v2448 = vpop.xlane.xlu0 %2447
    %2449 = vadd.xlane.f32.xlu0 %v2419
    %v2450 = vpop.xlane.xlu0 %2449
    %2451 = vadd.xlane.f32.xlu0 %v2420
    %v2452 = vpop.xlane.xlu0 %2451
    %v2453 = vmul.f32 %v2422, %v2388
    %v2454 = vmul.f32 %v2424, %v2388
    %v2455 = vmul.f32 %v2426, %v2388
    %v2456 = vmul.f32 %v2428, %v2388
    %v2457 = vmul.f32 %v2430, %v2388
    %v2458 = vmul.f32 %v2432, %v2388
    %v2459 = vmul.f32 %v2434, %v2388
    %v2460 = vmul.f32 %v2436, %v2388
    %v2461 = vmul.f32 %v2438, %v2388
    %v2462 = vmul.f32 %v2440, %v2388
    %v2463 = vmul.f32 %v2442, %v2388
    %v2464 = vmul.f32 %v2444, %v2388
    %v2465 = vmul.f32 %v2446, %v2388
    %v2466 = vmul.f32 %v2448, %v2388
    %v2467 = vmul.f32 %v2450, %v2388
    %v2468 = vmul.f32 %v2452, %v2388
    %v2469 = vmul.f32 %v2389, %v2389
    %v2470 = vmul.f32 %v2390, %v2390
    %v2471 = vmul.f32 %v2391, %v2391
    %v2472 = vmul.f32 %v2392, %v2392
    %v2473 = vmul.f32 %v2393, %v2393
    %v2474 = vmul.f32 %v2394, %v2394
    %v2475 = vmul.f32 %v2395, %v2395
    %v2476 = vmul.f32 %v2396, %v2396
    %v2477 = vmul.f32 %v2397, %v2397
    %v2478 = vmul.f32 %v2398, %v2398
    %v2479 = vmul.f32 %v2399, %v2399
    %v2480 = vmul.f32 %v2400, %v2400
    %v2481 = vmul.f32 %v2401, %v2401
    %v2482 = vmul.f32 %v2402, %v2402
    %v2483 = vmul.f32 %v2403, %v2403
    %v2484 = vmul.f32 %v2404, %v2404
    %v2485 = vsub.f32 %v2453, %v2469
    %v2486 = vsub.f32 %v2454, %v2470
    %v2487 = vsub.f32 %v2455, %v2471
    %v2488 = vsub.f32 %v2456, %v2472
    %v2489 = vsub.f32 %v2457, %v2473
    %v2490 = vsub.f32 %v2458, %v2474
    %v2491 = vsub.f32 %v2459, %v2475
    %v2492 = vsub.f32 %v2460, %v2476
    %v2493 = vsub.f32 %v2461, %v2477
    %v2494 = vsub.f32 %v2462, %v2478
    %v2495 = vsub.f32 %v2463, %v2479
    %v2496 = vsub.f32 %v2464, %v2480
    %v2497 = vsub.f32 %v2465, %v2481
    %v2498 = vsub.f32 %v2466, %v2482
    %v2499 = vsub.f32 %v2467, %v2483
    %v2500 = vsub.f32 %v2468, %v2484
    %v2501 = vsub.f32 %v2276, %v2389
    %v2502 = vsub.f32 %v2281, %v2390
    %v2503 = vsub.f32 %v2286, %v2391
    %v2504 = vsub.f32 %v2291, %v2392
    %v2505 = vsub.f32 %v2296, %v2393
    %v2506 = vsub.f32 %v2301, %v2394
    %v2507 = vsub.f32 %v2306, %v2395
    %v2508 = vsub.f32 %v2311, %v2396
    %v2509 = vsub.f32 %v2316, %v2397
    %v2510 = vsub.f32 %v2321, %v2398
    %v2511 = vsub.f32 %v2326, %v2399
    %v2512 = vsub.f32 %v2331, %v2400
    %v2513 = vsub.f32 %v2336, %v2401
    %v2514 = vsub.f32 %v2341, %v2402
    %v2515 = vsub.f32 %v2346, %v2403
    %v2516 = vsub.f32 %v2351, %v2404
    %v2517 = vadd.f32 %v2485, 1e-05
    %v2518 = vadd.f32 %v2486, 1e-05
    %v2519 = vadd.f32 %v2487, 1e-05
    %v2520 = vadd.f32 %v2488, 1e-05
    %v2521 = vadd.f32 %v2489, 1e-05
    %v2522 = vadd.f32 %v2490, 1e-05
    %v2523 = vadd.f32 %v2491, 1e-05
    %v2524 = vadd.f32 %v2492, 1e-05
    %v2525 = vadd.f32 %v2493, 1e-05
    %v2526 = vadd.f32 %v2494, 1e-05
    %v2527 = vadd.f32 %v2495, 1e-05
    %v2528 = vadd.f32 %v2496, 1e-05
    %v2529 = vadd.f32 %v2497, 1e-05
    %v2530 = vadd.f32 %v2498, 1e-05
    %v2531 = vadd.f32 %v2499, 1e-05
    %v2532 = vadd.f32 %v2500, 1e-05
    %v2533 = vrsqrt.pop %v2517
    %v2534 = vrsqrt.pop %v2518
    %v2535 = vrsqrt.pop %v2519
    %v2536 = vrsqrt.pop %v2520
    %v2537 = vrsqrt.pop %v2521
    %v2538 = vrsqrt.pop %v2522
    %v2539 = vrsqrt.pop %v2523
    %v2540 = vrsqrt.pop %v2524
    %v2541 = vrsqrt.pop %v2525
    %v2542 = vrsqrt.pop %v2526
    %v2543 = vrsqrt.pop %v2527
    %v2544 = vrsqrt.pop %v2528
    %v2545 = vrsqrt.pop %v2529
    %v2546 = vrsqrt.pop %v2530
    %v2547 = vrsqrt.pop %v2531
    %v2548 = vrsqrt.pop %v2532
    %v2549 = vmul.f32 %v2501, %v2533
    %v2550 = vmul.f32 %v2502, %v2534
    %v2551 = vmul.f32 %v2503, %v2535
    %v2552 = vmul.f32 %v2504, %v2536
    %v2553 = vmul.f32 %v2505, %v2537
    %v2554 = vmul.f32 %v2506, %v2538
    %v2555 = vmul.f32 %v2507, %v2539
    %v2556 = vmul.f32 %v2508, %v2540
    %v2557 = vmul.f32 %v2509, %v2541
    %v2558 = vmul.f32 %v2510, %v2542
    %v2559 = vmul.f32 %v2511, %v2543
    %v2560 = vmul.f32 %v2512, %v2544
    %v2561 = vmul.f32 %v2513, %v2545
    %v2562 = vmul.f32 %v2514, %v2546
    %v2563 = vmul.f32 %v2515, %v2547
    %v2564 = vmul.f32 %v2516, %v2548
    %v2566 = vlaneseq
    %v2567 = vshrl.u32 %v2566, 7
    %v2568 = vsub.s32 0, %v2567
    %v2569 = vrot.slane %v2354, %v2568
    %v2571 = vmul.f32 %v2549, %v2569
    %v2572 = vmul.f32 %v2550, %v2569
    %v2573 = vmul.f32 %v2551, %v2569
    %v2574 = vmul.f32 %v2552, %v2569
    %v2575 = vmul.f32 %v2553, %v2569
    %v2576 = vmul.f32 %v2554, %v2569
    %v2577 = vmul.f32 %v2555, %v2569
    %v2578 = vmul.f32 %v2556, %v2569
    %v2579 = vmul.f32 %v2557, %v2569
    %v2580 = vmul.f32 %v2558, %v2569
    %v2581 = vmul.f32 %v2559, %v2569
    %v2582 = vmul.f32 %v2560, %v2569
    %v2583 = vmul.f32 %v2561, %v2569
    %v2584 = vmul.f32 %v2562, %v2569
    %v2585 = vmul.f32 %v2563, %v2569
    %v2586 = vmul.f32 %v2564, %v2569
    %v2588 = vlaneseq
    %v2589 = vshrl.u32 %v2588, 7
    %v2590 = vsub.s32 0, %v2589
    %v2591 = vrot.slane %v2355, %v2590
    %v2593 = vadd.f32 %v2571, %v2591
    %v2594 = vadd.f32 %v2572, %v2591
    %v2595 = vadd.f32 %v2573, %v2591
    %v2596 = vadd.f32 %v2574, %v2591
    %v2597 = vadd.f32 %v2575, %v2591
    %v2598 = vadd.f32 %v2576, %v2591
    %v2599 = vadd.f32 %v2577, %v2591
    %v2600 = vadd.f32 %v2578, %v2591
    %v2601 = vadd.f32 %v2579, %v2591
    %v2602 = vadd.f32 %v2580, %v2591
    %v2603 = vadd.f32 %v2581, %v2591
    %v2604 = vadd.f32 %v2582, %v2591
    %v2605 = vadd.f32 %v2583, %v2591
    %v2606 = vadd.f32 %v2584, %v2591
    %v2607 = vadd.f32 %v2585, %v2591
    %v2608 = vadd.f32 %v2586, %v2591
    %v2609 = vmul.f32 %v2593, 0.01
    %v2610 = vmul.f32 %v2594, 0.01
    %v2611 = vmul.f32 %v2595, 0.01
    %v2612 = vmul.f32 %v2596, 0.01
    %v2613 = vmul.f32 %v2597, 0.01
    %v2614 = vmul.f32 %v2598, 0.01
    %v2615 = vmul.f32 %v2599, 0.01
    %v2616 = vmul.f32 %v2600, 0.01
    %v2617 = vmul.f32 %v2601, 0.01
    %v2618 = vmul.f32 %v2602, 0.01
    %v2619 = vmul.f32 %v2603, 0.01
    %v2620 = vmul.f32 %v2604, 0.01
    %v2621 = vmul.f32 %v2605, 0.01
    %v2622 = vmul.f32 %v2606, 0.01
    %v2623 = vmul.f32 %v2607, 0.01
    %v2624 = vmul.f32 %v2608, 0.01
    %v2625 = vmax.f32 %v2593, %v2609
    %v2626 = vmax.f32 %v2594, %v2610
    %v2627 = vmax.f32 %v2595, %v2611
    %v2628 = vmax.f32 %v2596, %v2612
    %v2629 = vmax.f32 %v2597, %v2613
    %v2630 = vmax.f32 %v2598, %v2614
    %v2631 = vmax.f32 %v2599, %v2615
    %v2632 = vmax.f32 %v2600, %v2616
    %v2633 = vmax.f32 %v2601, %v2617
    %v2634 = vmax.f32 %v2602, %v2618
    %v2635 = vmax.f32 %v2603, %v2619
    %v2636 = vmax.f32 %v2604, %v2620
    %v2637 = vmax.f32 %v2605, %v2621
    %v2638 = vmax.f32 %v2606, %v2622
    %v2639 = vmax.f32 %v2607, %v2623
    %v2640 = vmax.f32 %v2608, %v2624
    %v2641 = vld [vmem:[%s13] sm:$0xff]
    %v2642 = vld [vmem:[%s13 + $0x8] sm:$0xff]
    %v2643 = vld [vmem:[%s13 + $0x10] sm:$0xff]
    %v2644 = vld [vmem:[%s13 + $0x18] sm:$0xff]
    %v2645 = vld [vmem:[%s13 + $0x20] sm:$0xff]
    %v2646 = vld [vmem:[%s13 + $0x28] sm:$0xff]
    %v2647 = vld [vmem:[%s13 + $0x30] sm:$0xff]
    %v2648 = vld [vmem:[%s13 + $0x38] sm:$0xff]
    %v2649 = vld [vmem:[%s13 + $0x40] sm:$0xff]
    %v2650 = vld [vmem:[%s13 + $0x48] sm:$0xff]
    %v2651 = vld [vmem:[%s13 + $0x50] sm:$0xff]
    %v2652 = vld [vmem:[%s13 + $0x58] sm:$0xff]
    %v2653 = vld [vmem:[%s13 + $0x60] sm:$0xff]
    %v2654 = vld [vmem:[%s13 + $0x68] sm:$0xff]
    %v2655 = vld [vmem:[%s13 + $0x70] sm:$0xff]
    %v2656 = vld [vmem:[%s13 + $0x78] sm:$0xff]
    %v2657 = vld [vmem:[%s14] sm:$0x1]
    %v2659 = vlaneseq
    %v2660 = vshrl.u32 %v2659, 7
    %v2661 = vsub.s32 0, %v2660
    %v2662 = vrot.slane %v2657, %v2661
    %2664 = vmatprep.subr.mxu0 0.0
    %2665 = vmatpush1.msra.mxu0 %v2656
    %2666 = vmatprep.subr.mxu0 0.0
    %2667 = vmatpush1.msra.mxu0 %v2655
    %2668 = vmatprep.subr.mxu0 0.0
    %2669 = vmatpush1.msra.mxu0 %v2654
    %2670 = vmatprep.subr.mxu0 0.0
    %2671 = vmatpush1.msra.mxu0 %v2653
    %2672 = vmatprep.subr.mxu0 0.0
    %2673 = vmatpush1.msra.mxu0 %v2652
    %2674 = vmatprep.subr.mxu0 0.0
    %2675 = vmatpush1.msra.mxu0 %v2651
    %2676 = vmatprep.subr.mxu0 0.0
    %2677 = vmatpush1.msra.mxu0 %v2650
    %2678 = vmatprep.subr.mxu0 0.0
    %2679 = vmatpush1.msra.mxu0 %v2649
    %2680 = vmatprep.subr.mxu0 0.0
    %2681 = vmatpush1.msra.mxu0 %v2648
    %2682 = vmatprep.subr.mxu0 0.0
    %2683 = vmatpush1.msra.mxu0 %v2647
    %2684 = vmatprep.subr.mxu0 0.0
    %2685 = vmatpush1.msra.mxu0 %v2646
    %2686 = vmatprep.subr.mxu0 0.0
    %2687 = vmatpush1.msra.mxu0 %v2645
    %2688 = vmatprep.subr.mxu0 0.0
    %2689 = vmatpush1.msra.mxu0 %v2644
    %2690 = vmatprep.subr.mxu0 0.0
    %2691 = vmatpush1.msra.mxu0 %v2643
    %2692 = vmatprep.subr.mxu0 0.0
    %2693 = vmatpush1.msra.mxu0 %v2642
    %2694 = vmatprep.subr.mxu0 0.0
    %2695 = vmatpush1.msra.mxu0 %v2641
    %2696 = vmatprep.subr.mxu0 0.0
    %2697 = vmatpush2.msra.mxu0 0.0
    %2698 = vmatprep.subr.mxu0 0.0
    %2699 = vmatpush2.msra.mxu0 0.0
    %2700 = vmatprep.subr.mxu0 0.0
    %2701 = vmatpush2.msra.mxu0 0.0
    %2702 = vmatprep.subr.mxu0 0.0
    %2703 = vmatpush2.msra.mxu0 0.0
    %2704 = vmatprep.subr.mxu0 0.0
    %2705 = vmatpush2.msra.mxu0 0.0
    %2706 = vmatprep.subr.mxu0 0.0
    %2707 = vmatpush2.msra.mxu0 0.0
    %2708 = vmatprep.subr.mxu0 0.0
    %2709 = vmatpush2.msra.mxu0 0.0
    %2710 = vmatprep.subr.mxu0 0.0
    %2711 = vmatpush2.msra.mxu0 0.0
    %2712 = vmatprep.subr.mxu0 0.0
    %2713 = vmatpush2.msra.mxu0 0.0
    %2714 = vmatprep.subr.mxu0 0.0
    %2715 = vmatpush2.msra.mxu0 0.0
    %2716 = vmatprep.subr.mxu0 0.0
    %2717 = vmatpush2.msra.mxu0 0.0
    %2718 = vmatprep.subr.mxu0 0.0
    %2719 = vmatpush2.msra.mxu0 0.0
    %2720 = vmatprep.subr.mxu0 0.0
    %2721 = vmatpush2.msra.mxu0 0.0
    %2722 = vmatprep.subr.mxu0 0.0
    %2723 = vmatpush2.msra.mxu0 0.0
    %2724 = vmatprep.subr.mxu0 0.0
    %2725 = vmatpush2.msra.mxu0 0.0
    %2726 = vmatprep.subr.mxu0 0.0
    %2727 = vmatpush2.msra.mxu0 0.0
    %2728 = vmatprep.mubr.f32.mxu0 0.0
    %2729 = vmatmul.mubr.f32.gmra.mxu0 %v2625
    %v2730 = vpop.f32.mrf.mxu0
    %v2731 = vadd.f32 %v2662, %v2730
    %v2732 = vpop.f32.mrf.mxu0
    %2733 = vmatprep.mubr.f32.mxu0 0.0
    %2734 = vmatmul.mubr.f32.gmra.mxu0 %v2626
    %v2735 = vpop.f32.mrf.mxu0
    %v2736 = vadd.f32 %v2662, %v2735
    %v2737 = vpop.f32.mrf.mxu0
    %2738 = vmatprep.mubr.f32.mxu0 0.0
    %2739 = vmatmul.mubr.f32.gmra.mxu0 %v2627
    %v2740 = vpop.f32.mrf.mxu0
    %v2741 = vadd.f32 %v2662, %v2740
    %v2742 = vpop.f32.mrf.mxu0
    %2743 = vmatprep.mubr.f32.mxu0 0.0
    %2744 = vmatmul.mubr.f32.gmra.mxu0 %v2628
    %v2745 = vpop.f32.mrf.mxu0
    %v2746 = vadd.f32 %v2662, %v2745
    %v2747 = vpop.f32.mrf.mxu0
    %2748 = vmatprep.mubr.f32.mxu0 0.0
    %2749 = vmatmul.mubr.f32.gmra.mxu0 %v2629
    %v2750 = vpop.f32.mrf.mxu0
    %v2751 = vadd.f32 %v2662, %v2750
    %v2752 = vpop.f32.mrf.mxu0
    %2753 = vmatprep.mubr.f32.mxu0 0.0
    %2754 = vmatmul.mubr.f32.gmra.mxu0 %v2630
    %v2755 = vpop.f32.mrf.mxu0
    %v2756 = vadd.f32 %v2662, %v2755
    %v2757 = vpop.f32.mrf.mxu0
    %2758 = vmatprep.mubr.f32.mxu0 0.0
    %2759 = vmatmul.mubr.f32.gmra.mxu0 %v2631
    %v2760 = vpop.f32.mrf.mxu0
    %v2761 = vadd.f32 %v2662, %v2760
    %v2762 = vpop.f32.mrf.mxu0
    %2763 = vmatprep.mubr.f32.mxu0 0.0
    %2764 = vmatmul.mubr.f32.gmra.mxu0 %v2632
    %v2765 = vpop.f32.mrf.mxu0
    %v2766 = vadd.f32 %v2662, %v2765
    %v2767 = vpop.f32.mrf.mxu0
    %2768 = vmatprep.mubr.f32.mxu0 0.0
    %2769 = vmatmul.mubr.f32.gmra.mxu0 %v2633
    %v2770 = vpop.f32.mrf.mxu0
    %v2771 = vadd.f32 %v2662, %v2770
    %v2772 = vpop.f32.mrf.mxu0
    %2773 = vmatprep.mubr.f32.mxu0 0.0
    %2774 = vmatmul.mubr.f32.gmra.mxu0 %v2634
    %v2775 = vpop.f32.mrf.mxu0
    %v2776 = vadd.f32 %v2662, %v2775
    %v2777 = vpop.f32.mrf.mxu0
    %2778 = vmatprep.mubr.f32.mxu0 0.0
    %2779 = vmatmul.mubr.f32.gmra.mxu0 %v2635
    %v2780 = vpop.f32.mrf.mxu0
    %v2781 = vadd.f32 %v2662, %v2780
    %v2782 = vpop.f32.mrf.mxu0
    %2783 = vmatprep.mubr.f32.mxu0 0.0
    %2784 = vmatmul.mubr.f32.gmra.mxu0 %v2636
    %v2785 = vpop.f32.mrf.mxu0
    %v2786 = vadd.f32 %v2662, %v2785
    %v2787 = vpop.f32.mrf.mxu0
    %2788 = vmatprep.mubr.f32.mxu0 0.0
    %2789 = vmatmul.mubr.f32.gmra.mxu0 %v2637
    %v2790 = vpop.f32.mrf.mxu0
    %v2791 = vadd.f32 %v2662, %v2790
    %v2792 = vpop.f32.mrf.mxu0
    %2793 = vmatprep.mubr.f32.mxu0 0.0
    %2794 = vmatmul.mubr.f32.gmra.mxu0 %v2638
    %v2795 = vpop.f32.mrf.mxu0
    %v2796 = vadd.f32 %v2662, %v2795
    %v2797 = vpop.f32.mrf.mxu0
    %2798 = vmatprep.mubr.f32.mxu0 0.0
    %2799 = vmatmul.mubr.f32.gmra.mxu0 %v2639
    %v2800 = vpop.f32.mrf.mxu0
    %v2801 = vadd.f32 %v2662, %v2800
    %v2802 = vpop.f32.mrf.mxu0
    %2803 = vmatprep.mubr.f32.mxu0 0.0
    %2804 = vmatmul.mubr.f32.gmra.mxu0 %v2640
    %v2805 = vpop.f32.mrf.mxu0
    %v2806 = vadd.f32 %v2662, %v2805
    %v2807 = vpop.f32.mrf.mxu0
    %2808 = vdwg.mxu0
    %v2809 = vld [vmem:[%s15] sm:$0x1]
    %v2810 = vld [vmem:[%s16] sm:$0x1]
    %vm2811 = vcmask 523264
    %v2812 = vsel %vm2811, %v2731, 0.0
    %2813 = vadd.xlane.f32.xlu0 %v2812
    %v2814 = vpop.xlane.xlu0 %2813
    %v2815 = vsel %vm2811, %v2736, 0.0
    %2816 = vadd.xlane.f32.xlu0 %v2815
    %v2817 = vpop.xlane.xlu0 %2816
    %v2818 = vsel %vm2811, %v2741, 0.0
    %2819 = vadd.xlane.f32.xlu0 %v2818
    %v2820 = vpop.xlane.xlu0 %2819
    %v2821 = vsel %vm2811, %v2746, 0.0
    %2822 = vadd.xlane.f32.xlu0 %v2821
    %v2823 = vpop.xlane.xlu0 %2822
    %v2824 = vsel %vm2811, %v2751, 0.0
    %2825 = vadd.xlane.f32.xlu0 %v2824
    %v2826 = vpop.xlane.xlu0 %2825
    %v2827 = vsel %vm2811, %v2756, 0.0
    %2828 = vadd.xlane.f32.xlu0 %v2827
    %v2829 = vpop.xlane.xlu0 %2828
    %v2830 = vsel %vm2811, %v2761, 0.0
    %2831 = vadd.xlane.f32.xlu0 %v2830
    %v2832 = vpop.xlane.xlu0 %2831
    %v2833 = vsel %vm2811, %v2766, 0.0
    %2834 = vadd.xlane.f32.xlu0 %v2833
    %v2835 = vpop.xlane.xlu0 %2834
    %v2836 = vsel %vm2811, %v2771, 0.0
    %2837 = vadd.xlane.f32.xlu0 %v2836
    %v2838 = vpop.xlane.xlu0 %2837
    %v2839 = vsel %vm2811, %v2776, 0.0
    %2840 = vadd.xlane.f32.xlu0 %v2839
    %v2841 = vpop.xlane.xlu0 %2840
    %v2842 = vsel %vm2811, %v2781, 0.0
    %2843 = vadd.xlane.f32.xlu0 %v2842
    %v2844 = vpop.xlane.xlu0 %2843
    %v2845 = vsel %vm2811, %v2786, 0.0
    %2846 = vadd.xlane.f32.xlu0 %v2845
    %v2847 = vpop.xlane.xlu0 %2846
    %v2848 = vsel %vm2811, %v2791, 0.0
    %2849 = vadd.xlane.f32.xlu0 %v2848
    %v2850 = vpop.xlane.xlu0 %2849
    %v2851 = vsel %vm2811, %v2796, 0.0
    %2852 = vadd.xlane.f32.xlu0 %v2851
    %v2853 = vpop.xlane.xlu0 %2852
    %v2854 = vsel %vm2811, %v2801, 0.0
    %2855 = vadd.xlane.f32.xlu0 %v2854
    %v2856 = vpop.xlane.xlu0 %2855
    %v2857 = vsel %vm2811, %v2806, 0.0
    %2858 = vadd.xlane.f32.xlu0 %v2857
    %v2859 = vpop.xlane.xlu0 %2858
    %v2860 = vrcp.pop 64.0
    %v2861 = vmul.f32 %v2814, %v2860
    %v2862 = vmul.f32 %v2817, %v2860
    %v2863 = vmul.f32 %v2820, %v2860
    %v2864 = vmul.f32 %v2823, %v2860
    %v2865 = vmul.f32 %v2826, %v2860
    %v2866 = vmul.f32 %v2829, %v2860
    %v2867 = vmul.f32 %v2832, %v2860
    %v2868 = vmul.f32 %v2835, %v2860
    %v2869 = vmul.f32 %v2838, %v2860
    %v2870 = vmul.f32 %v2841, %v2860
    %v2871 = vmul.f32 %v2844, %v2860
    %v2872 = vmul.f32 %v2847, %v2860
    %v2873 = vmul.f32 %v2850, %v2860
    %v2874 = vmul.f32 %v2853, %v2860
    %v2875 = vmul.f32 %v2856, %v2860
    %v2876 = vmul.f32 %v2859, %v2860
    %v2877 = vmul.f32 %v2731, %v2731
    %v2878 = vmul.f32 %v2736, %v2736
    %v2879 = vmul.f32 %v2741, %v2741
    %v2880 = vmul.f32 %v2746, %v2746
    %v2881 = vmul.f32 %v2751, %v2751
    %v2882 = vmul.f32 %v2756, %v2756
    %v2883 = vmul.f32 %v2761, %v2761
    %v2884 = vmul.f32 %v2766, %v2766
    %v2885 = vmul.f32 %v2771, %v2771
    %v2886 = vmul.f32 %v2776, %v2776
    %v2887 = vmul.f32 %v2781, %v2781
    %v2888 = vmul.f32 %v2786, %v2786
    %v2889 = vmul.f32 %v2791, %v2791
    %v2890 = vmul.f32 %v2796, %v2796
    %v2891 = vmul.f32 %v2801, %v2801
    %v2892 = vmul.f32 %v2806, %v2806
    %v2893 = vsel %vm2811, %v2877, 0.0
    %2894 = vadd.xlane.f32.xlu0 %v2893
    %v2895 = vpop.xlane.xlu0 %2894
    %v2896 = vsel %vm2811, %v2878, 0.0
    %2897 = vadd.xlane.f32.xlu0 %v2896
    %v2898 = vpop.xlane.xlu0 %2897
    %v2899 = vsel %vm2811, %v2879, 0.0
    %2900 = vadd.xlane.f32.xlu0 %v2899
    %v2901 = vpop.xlane.xlu0 %2900
    %v2902 = vsel %vm2811, %v2880, 0.0
    %2903 = vadd.xlane.f32.xlu0 %v2902
    %v2904 = vpop.xlane.xlu0 %2903
    %v2905 = vsel %vm2811, %v2881, 0.0
    %2906 = vadd.xlane.f32.xlu0 %v2905
    %v2907 = vpop.xlane.xlu0 %2906
    %v2908 = vsel %vm2811, %v2882, 0.0
    %2909 = vadd.xlane.f32.xlu0 %v2908
    %v2910 = vpop.xlane.xlu0 %2909
    %v2911 = vsel %vm2811, %v2883, 0.0
    %2912 = vadd.xlane.f32.xlu0 %v2911
    %v2913 = vpop.xlane.xlu0 %2912
    %v2914 = vsel %vm2811, %v2884, 0.0
    %2915 = vadd.xlane.f32.xlu0 %v2914
    %v2916 = vpop.xlane.xlu0 %2915
    %v2917 = vsel %vm2811, %v2885, 0.0
    %2918 = vadd.xlane.f32.xlu0 %v2917
    %v2919 = vpop.xlane.xlu0 %2918
    %v2920 = vsel %vm2811, %v2886, 0.0
    %2921 = vadd.xlane.f32.xlu0 %v2920
    %v2922 = vpop.xlane.xlu0 %2921
    %v2923 = vsel %vm2811, %v2887, 0.0
    %2924 = vadd.xlane.f32.xlu0 %v2923
    %v2925 = vpop.xlane.xlu0 %2924
    %v2926 = vsel %vm2811, %v2888, 0.0
    %2927 = vadd.xlane.f32.xlu0 %v2926
    %v2928 = vpop.xlane.xlu0 %2927
    %v2929 = vsel %vm2811, %v2889, 0.0
    %2930 = vadd.xlane.f32.xlu0 %v2929
    %v2931 = vpop.xlane.xlu0 %2930
    %v2932 = vsel %vm2811, %v2890, 0.0
    %2933 = vadd.xlane.f32.xlu0 %v2932
    %v2934 = vpop.xlane.xlu0 %2933
    %v2935 = vsel %vm2811, %v2891, 0.0
    %2936 = vadd.xlane.f32.xlu0 %v2935
    %v2937 = vpop.xlane.xlu0 %2936
    %v2938 = vsel %vm2811, %v2892, 0.0
    %2939 = vadd.xlane.f32.xlu0 %v2938
    %v2940 = vpop.xlane.xlu0 %2939
    %v2941 = vmul.f32 %v2895, %v2860
    %v2942 = vmul.f32 %v2898, %v2860
    %v2943 = vmul.f32 %v2901, %v2860
    %v2944 = vmul.f32 %v2904, %v2860
    %v2945 = vmul.f32 %v2907, %v2860
    %v2946 = vmul.f32 %v2910, %v2860
    %v2947 = vmul.f32 %v2913, %v2860
    %v2948 = vmul.f32 %v2916, %v2860
    %v2949 = vmul.f32 %v2919, %v2860
    %v2950 = vmul.f32 %v2922, %v2860
    %v2951 = vmul.f32 %v2925, %v2860
    %v2952 = vmul.f32 %v2928, %v2860
    %v2953 = vmul.f32 %v2931, %v2860
    %v2954 = vmul.f32 %v2934, %v2860
    %v2955 = vmul.f32 %v2937, %v2860
    %v2956 = vmul.f32 %v2940, %v2860
    %v2957 = vmul.f32 %v2861, %v2861
    %v2958 = vmul.f32 %v2862, %v2862
    %v2959 = vmul.f32 %v2863, %v2863
    %v2960 = vmul.f32 %v2864, %v2864
    %v2961 = vmul.f32 %v2865, %v2865
    %v2962 = vmul.f32 %v2866, %v2866
    %v2963 = vmul.f32 %v2867, %v2867
    %v2964 = vmul.f32 %v2868, %v2868
    %v2965 = vmul.f32 %v2869, %v2869
    %v2966 = vmul.f32 %v2870, %v2870
    %v2967 = vmul.f32 %v2871, %v2871
    %v2968 = vmul.f32 %v2872, %v2872
    %v2969 = vmul.f32 %v2873, %v2873
    %v2970 = vmul.f32 %v2874, %v2874
    %v2971 = vmul.f32 %v2875, %v2875
    %v2972 = vmul.f32 %v2876, %v2876
    %v2973 = vsub.f32 %v2941, %v2957
    %v2974 = vsub.f32 %v2942, %v2958
    %v2975 = vsub.f32 %v2943, %v2959
    %v2976 = vsub.f32 %v2944, %v2960
    %v2977 = vsub.f32 %v2945, %v2961
    %v2978 = vsub.f32 %v2946, %v2962
    %v2979 = vsub.f32 %v2947, %v2963
    %v2980 = vsub.f32 %v2948, %v2964
    %v2981 = vsub.f32 %v2949, %v2965
    %v2982 = vsub.f32 %v2950, %v2966
    %v2983 = vsub.f32 %v2951, %v2967
    %v2984 = vsub.f32 %v2952, %v2968
    %v2985 = vsub.f32 %v2953, %v2969
    %v2986 = vsub.f32 %v2954, %v2970
    %v2987 = vsub.f32 %v2955, %v2971
    %v2988 = vsub.f32 %v2956, %v2972
    %v2989 = vsub.f32 %v2731, %v2861
    %v2990 = vsub.f32 %v2736, %v2862
    %v2991 = vsub.f32 %v2741, %v2863
    %v2992 = vsub.f32 %v2746, %v2864
    %v2993 = vsub.f32 %v2751, %v2865
    %v2994 = vsub.f32 %v2756, %v2866
    %v2995 = vsub.f32 %v2761, %v2867
    %v2996 = vsub.f32 %v2766, %v2868
    %v2997 = vsub.f32 %v2771, %v2869
    %v2998 = vsub.f32 %v2776, %v2870
    %v2999 = vsub.f32 %v2781, %v2871
    %v3000 = vsub.f32 %v2786, %v2872
    %v3001 = vsub.f32 %v2791, %v2873
    %v3002 = vsub.f32 %v2796, %v2874
    %v3003 = vsub.f32 %v2801, %v2875
    %v3004 = vsub.f32 %v2806, %v2876
    %v3005 = vadd.f32 %v2973, 1e-05
    %v3006 = vadd.f32 %v2974, 1e-05
    %v3007 = vadd.f32 %v2975, 1e-05
    %v3008 = vadd.f32 %v2976, 1e-05
    %v3009 = vadd.f32 %v2977, 1e-05
    %v3010 = vadd.f32 %v2978, 1e-05
    %v3011 = vadd.f32 %v2979, 1e-05
    %v3012 = vadd.f32 %v2980, 1e-05
    %v3013 = vadd.f32 %v2981, 1e-05
    %v3014 = vadd.f32 %v2982, 1e-05
    %v3015 = vadd.f32 %v2983, 1e-05
    %v3016 = vadd.f32 %v2984, 1e-05
    %v3017 = vadd.f32 %v2985, 1e-05
    %v3018 = vadd.f32 %v2986, 1e-05
    %v3019 = vadd.f32 %v2987, 1e-05
    %v3020 = vadd.f32 %v2988, 1e-05
    %v3021 = vrsqrt.pop %v3005
    %v3022 = vrsqrt.pop %v3006
    %v3023 = vrsqrt.pop %v3007
    %v3024 = vrsqrt.pop %v3008
    %v3025 = vrsqrt.pop %v3009
    %v3026 = vrsqrt.pop %v3010
    %v3027 = vrsqrt.pop %v3011
    %v3028 = vrsqrt.pop %v3012
    %v3029 = vrsqrt.pop %v3013
    %v3030 = vrsqrt.pop %v3014
    %v3031 = vrsqrt.pop %v3015
    %v3032 = vrsqrt.pop %v3016
    %v3033 = vrsqrt.pop %v3017
    %v3034 = vrsqrt.pop %v3018
    %v3035 = vrsqrt.pop %v3019
    %v3036 = vrsqrt.pop %v3020
    %v3037 = vmul.f32 %v2989, %v3021
    %v3038 = vmul.f32 %v2990, %v3022
    %v3039 = vmul.f32 %v2991, %v3023
    %v3040 = vmul.f32 %v2992, %v3024
    %v3041 = vmul.f32 %v2993, %v3025
    %v3042 = vmul.f32 %v2994, %v3026
    %v3043 = vmul.f32 %v2995, %v3027
    %v3044 = vmul.f32 %v2996, %v3028
    %v3045 = vmul.f32 %v2997, %v3029
    %v3046 = vmul.f32 %v2998, %v3030
    %v3047 = vmul.f32 %v2999, %v3031
    %v3048 = vmul.f32 %v3000, %v3032
    %v3049 = vmul.f32 %v3001, %v3033
    %v3050 = vmul.f32 %v3002, %v3034
    %v3051 = vmul.f32 %v3003, %v3035
    %v3052 = vmul.f32 %v3004, %v3036
    %v3054 = vlaneseq
    %v3055 = vshrl.u32 %v3054, 7
    %v3056 = vsub.s32 0, %v3055
    %v3057 = vrot.slane %v2809, %v3056
    %v3059 = vmul.f32 %v3037, %v3057
    %v3060 = vmul.f32 %v3038, %v3057
    %v3061 = vmul.f32 %v3039, %v3057
    %v3062 = vmul.f32 %v3040, %v3057
    %v3063 = vmul.f32 %v3041, %v3057
    %v3064 = vmul.f32 %v3042, %v3057
    %v3065 = vmul.f32 %v3043, %v3057
    %v3066 = vmul.f32 %v3044, %v3057
    %v3067 = vmul.f32 %v3045, %v3057
    %v3068 = vmul.f32 %v3046, %v3057
    %v3069 = vmul.f32 %v3047, %v3057
    %v3070 = vmul.f32 %v3048, %v3057
    %v3071 = vmul.f32 %v3049, %v3057
    %v3072 = vmul.f32 %v3050, %v3057
    %v3073 = vmul.f32 %v3051, %v3057
    %v3074 = vmul.f32 %v3052, %v3057
    %v3076 = vlaneseq
    %v3077 = vshrl.u32 %v3076, 7
    %v3078 = vsub.s32 0, %v3077
    %v3079 = vrot.slane %v2810, %v3078
    %v3081 = vadd.f32 %v3059, %v3079
    %v3082 = vadd.f32 %v3060, %v3079
    %v3083 = vadd.f32 %v3061, %v3079
    %v3084 = vadd.f32 %v3062, %v3079
    %v3085 = vadd.f32 %v3063, %v3079
    %v3086 = vadd.f32 %v3064, %v3079
    %v3087 = vadd.f32 %v3065, %v3079
    %v3088 = vadd.f32 %v3066, %v3079
    %v3089 = vadd.f32 %v3067, %v3079
    %v3090 = vadd.f32 %v3068, %v3079
    %v3091 = vadd.f32 %v3069, %v3079
    %v3092 = vadd.f32 %v3070, %v3079
    %v3093 = vadd.f32 %v3071, %v3079
    %v3094 = vadd.f32 %v3072, %v3079
    %v3095 = vadd.f32 %v3073, %v3079
    %v3096 = vadd.f32 %v3074, %v3079
    %v3097 = vmul.f32 %v3081, 0.01
    %v3098 = vmul.f32 %v3082, 0.01
    %v3099 = vmul.f32 %v3083, 0.01
    %v3100 = vmul.f32 %v3084, 0.01
    %v3101 = vmul.f32 %v3085, 0.01
    %v3102 = vmul.f32 %v3086, 0.01
    %v3103 = vmul.f32 %v3087, 0.01
    %v3104 = vmul.f32 %v3088, 0.01
    %v3105 = vmul.f32 %v3089, 0.01
    %v3106 = vmul.f32 %v3090, 0.01
    %v3107 = vmul.f32 %v3091, 0.01
    %v3108 = vmul.f32 %v3092, 0.01
    %v3109 = vmul.f32 %v3093, 0.01
    %v3110 = vmul.f32 %v3094, 0.01
    %v3111 = vmul.f32 %v3095, 0.01
    %v3112 = vmul.f32 %v3096, 0.01
    %v3113 = vmax.f32 %v3081, %v3097
    %v3114 = vmax.f32 %v3082, %v3098
    %v3115 = vmax.f32 %v3083, %v3099
    %v3116 = vmax.f32 %v3084, %v3100
    %v3117 = vmax.f32 %v3085, %v3101
    %v3118 = vmax.f32 %v3086, %v3102
    %v3119 = vmax.f32 %v3087, %v3103
    %v3120 = vmax.f32 %v3088, %v3104
    %v3121 = vmax.f32 %v3089, %v3105
    %v3122 = vmax.f32 %v3090, %v3106
    %v3123 = vmax.f32 %v3091, %v3107
    %v3124 = vmax.f32 %v3092, %v3108
    %v3125 = vmax.f32 %v3093, %v3109
    %v3126 = vmax.f32 %v3094, %v3110
    %v3127 = vmax.f32 %v3095, %v3111
    %v3128 = vmax.f32 %v3096, %v3112
    %v3129 = vld [vmem:[%s17] sm:$0x1]
    %v3130 = vld [vmem:[#allocation2] sm:$0x1]
    %3132 = vset.pattern.permute.xlu0 0
    %3133 = vperm.xlu0 %3132, %v3130
    %v3134 = vpop.permute.xlu0 %3133
    %v3136 = vlaneseq
    %v3137 = vshrl.u32 %v3136, 7
    %v3138 = vsub.s32 0, %v3137
    %v3139 = vrot.slane %v3134, %v3138
    %v3141 = vsel %vm2811, %v3129, 0
    %v3144 = vsel %vm2811, %v3113, 0
    %v3147 = vsel %vm2811, %v3114, 0
    %v3150 = vsel %vm2811, %v3115, 0
    %v3153 = vsel %vm2811, %v3116, 0
    %v3156 = vsel %vm2811, %v3117, 0
    %v3159 = vsel %vm2811, %v3118, 0
    %v3162 = vsel %vm2811, %v3119, 0
    %v3165 = vsel %vm2811, %v3120, 0
    %v3168 = vsel %vm2811, %v3121, 0
    %v3171 = vsel %vm2811, %v3122, 0
    %v3174 = vsel %vm2811, %v3123, 0
    %v3177 = vsel %vm2811, %v3124, 0
    %v3180 = vsel %vm2811, %v3125, 0
    %v3183 = vsel %vm2811, %v3126, 0
    %v3186 = vsel %vm2811, %v3127, 0
    %v3189 = vsel %vm2811, %v3128, 0
    %3191 = vmatprep.subr.mxu0 0.0
    %3192 = vmatpush1.xpose.msra.mxu0 %v3189
    %3193 = vmatprep.subr.mxu0 0.0
    %3194 = vmatpush1.xpose.msra.mxu0 %v3186
    %3195 = vmatprep.subr.mxu0 0.0
    %3196 = vmatpush1.xpose.msra.mxu0 %v3183
    %3197 = vmatprep.subr.mxu0 0.0
    %3198 = vmatpush1.xpose.msra.mxu0 %v3180
    %3199 = vmatprep.subr.mxu0 0.0
    %3200 = vmatpush1.xpose.msra.mxu0 %v3177
    %3201 = vmatprep.subr.mxu0 0.0
    %3202 = vmatpush1.xpose.msra.mxu0 %v3174
    %3203 = vmatprep.subr.mxu0 0.0
    %3204 = vmatpush1.xpose.msra.mxu0 %v3171
    %3205 = vmatprep.subr.mxu0 0.0
    %3206 = vmatpush1.xpose.msra.mxu0 %v3168
    %3207 = vmatprep.subr.mxu0 0.0
    %3208 = vmatpush1.xpose.msra.mxu0 %v3165
    %3209 = vmatprep.subr.mxu0 0.0
    %3210 = vmatpush1.xpose.msra.mxu0 %v3162
    %3211 = vmatprep.subr.mxu0 0.0
    %3212 = vmatpush1.xpose.msra.mxu0 %v3159
    %3213 = vmatprep.subr.mxu0 0.0
    %3214 = vmatpush1.xpose.msra.mxu0 %v3156
    %3215 = vmatprep.subr.mxu0 0.0
    %3216 = vmatpush1.xpose.msra.mxu0 %v3153
    %3217 = vmatprep.subr.mxu0 0.0
    %3218 = vmatpush1.xpose.msra.mxu0 %v3150
    %3219 = vmatprep.subr.mxu0 0.0
    %3220 = vmatpush1.xpose.msra.mxu0 %v3147
    %3221 = vmatprep.subr.mxu0 0.0
    %3222 = vmatpush1.xpose.msra.mxu0 %v3144
    %3223 = vmatprep.subr.mxu0 0.0
    %3224 = vmatpush2.xpose.msra.mxu0 0.0
    %3225 = vmatprep.subr.mxu0 0.0
    %3226 = vmatpush2.xpose.msra.mxu0 0.0
    %3227 = vmatprep.subr.mxu0 0.0
    %3228 = vmatpush2.xpose.msra.mxu0 0.0
    %3229 = vmatprep.subr.mxu0 0.0
    %3230 = vmatpush2.xpose.msra.mxu0 0.0
    %3231 = vmatprep.subr.mxu0 0.0
    %3232 = vmatpush2.xpose.msra.mxu0 0.0
    %3233 = vmatprep.subr.mxu0 0.0
    %3234 = vmatpush2.xpose.msra.mxu0 0.0
    %3235 = vmatprep.subr.mxu0 0.0
    %3236 = vmatpush2.xpose.msra.mxu0 0.0
    %3237 = vmatprep.subr.mxu0 0.0
    %3238 = vmatpush2.xpose.msra.mxu0 0.0
    %3239 = vmatprep.subr.mxu0 0.0
    %3240 = vmatpush2.xpose.msra.mxu0 0.0
    %3241 = vmatprep.subr.mxu0 0.0
    %3242 = vmatpush2.xpose.msra.mxu0 0.0
    %3243 = vmatprep.subr.mxu0 0.0
    %3244 = vmatpush2.xpose.msra.mxu0 0.0
    %3245 = vmatprep.subr.mxu0 0.0
    %3246 = vmatpush2.xpose.msra.mxu0 0.0
    %3247 = vmatprep.subr.mxu0 0.0
    %3248 = vmatpush2.xpose.msra.mxu0 0.0
    %3249 = vmatprep.subr.mxu0 0.0
    %3250 = vmatpush2.xpose.msra.mxu0 0.0
    %3251 = vmatprep.subr.mxu0 0.0
    %3252 = vmatpush2.xpose.msra.mxu0 0.0
    %3253 = vmatprep.subr.mxu0 0.0
    %3254 = vmatpush2.xpose.msra.mxu0 0.0
    %3255 = vmatprep.mubr.f32.mxu0 0.0
    %3256 = vmatmul.mubr.f32.gmra.mxu0 %v3141
    %v3257 = vpop.f32.mrf.mxu0
    %v3258 = vadd.f32 %v3139, %v3257
    %v3259 = vpop.f32.mrf.mxu0
    %3260 = vdwg.mxu0
    %3261 = vst [vmem:[#allocation8] sm:$0x1] %v3258
    // Predicated region
    $region86: #{tpu_custom_call.1} parent=1 // pred_check
      _
    $region87: #{tpu_custom_call.1} parent=1 // pred_check_branch
      %3263 = sbr.rel (0) target = $region89
    $region88: #{tpu_custom_call.1} parent=1 // pred_region
      %s3265 = ssub.s32 16, 16
      %3266 = vsyncadd [#allocation5], %s3265
      %s3268 = sshll.u32 [#allocation8], 4
      %s3269 = int_to_ptr.vmem [resolvable:$true] %s3268
      %3271 = dma.vmem_to_hbm [thread:$0]  %s3269, 16, %s19, [#allocation5]
    $region89: #{tpu_custom_call.1} parent=1 // pred_fallthru
      _
    // Predicated region
    $region90: #{tpu_custom_call.1} parent=1 // pred_check
      _
    $region91: #{tpu_custom_call.1} parent=1 // pred_check_branch
      %3273 = sbr.rel (0) target = $region93
    $region92: #{tpu_custom_call.1} parent=1 // pred_region
      %3274 = dma.done [#allocation5], 16
    $region93: #{tpu_custom_call.1} parent=1 // pred_fallthru
      _
    %3275 = vsyncpa [#allocation4], 1
    %3276 = vsyncpa [#allocation7], 1
    %3277 = vsyncpa [#allocation5], 1

</llo_original>
